<compile_context>
chip_gen: v7x
topology: tpu7x:2x2x1
jax: 0.10.0
libtpu: 0.0.40
codegen_flags: <defaults>
</compile_context>

<pallas_src>
import functools
import numpy as np
import jax
import jax.numpy as jnp
from jax import lax
from jax.experimental import pallas as pl
from jax.experimental.pallas import tpu as pltpu


# ---------------------------------------------------------------------------
# Bilinear (align_corners=True) 1-D interpolation matrix, identical to
# nn.Upsample(scale_factor=2, mode='bilinear', align_corners=True) per axis.
# ---------------------------------------------------------------------------
def _interp_matrix(n_in, n_out):
    if n_in == 1:
        return np.ones((n_out, 1), np.float32)
    src = np.arange(n_out, dtype=np.float64) * (n_in - 1) / (n_out - 1)
    i0 = np.minimum(np.floor(src).astype(np.int64), n_in - 2)
    frac = src - i0
    m = np.zeros((n_out, n_in), np.float64)
    m[np.arange(n_out), i0] = 1.0 - frac
    m[np.arange(n_out), i0 + 1] = frac
    return m.astype(np.float32)


# ---------------------------------------------------------------------------
# Fused Pallas kernel: flat-layout upsample matmul + (im2col conv3x3 -> BN ->
# ReLU) x 2.  Single grid step; batch folded into the lane axis.
# ---------------------------------------------------------------------------
def _up_doubleconv_kernel(x_ref, u_ref, w1_ref, b1_ref, w2_ref, b2_ref,
                          o_ref, xpad_ref, h1pad_ref,
                          *, N, H2, W2, Cin, Cmid, Cout, PAD, STRIDE):
    H2W2 = H2 * W2
    L = N * H2W2                               # total output pixels on lanes

    # -- zero the padded activation buffers once (interiors rewritten below) --
    xpad_ref[...] = jnp.zeros_like(xpad_ref)
    h1pad_ref[...] = jnp.zeros_like(h1pad_ref)

    # -- bilinear x2 upsample: one matmul per image against kron(Wh^T, Ww^T) --
    # (Cin, H*W) @ (H*W, H2*W2) -> (Cin, H2*W2), already pixel-minor flat.
    for n in range(N):
        up_n = jnp.dot(x_ref[n], u_ref[...],
                       preferred_element_type=jnp.float32)
        base = n * STRIDE + PAD                # 128-aligned interior start
        xpad_ref[:, base: base + H2W2] = up_n.astype(jnp.bfloat16)

    # -- column-boundary masks for the 3x3 taps (same per image) -------------
    col = lax.broadcasted_iota(jnp.int32, (1, L), 1) % W2
    not_first_col = col >= 1                   # source in-bounds when dw = -1
    not_last_col = col <= W2 - 2               # source in-bounds when dw = +1

    def conv3x3_bn_relu(src_ref, w, b):
        # Register-level im2col: 9 static lane-shifted reads of the zero-halo
        # flat buffer (per image), concatenated into (9*cin, L), then ONE bf16
        # MXU matmul with f32 accumulation.  No VMEM round-trip.
        taps = []
        for kh in range(3):
            for kw in range(3):
                delta = (kh - 1) * W2 + (kw - 1)
                segs = [src_ref[:, n * STRIDE + PAD + delta:
                                n * STRIDE + PAD + delta + H2W2]
                        for n in range(N)]
                win = segs[0] if N == 1 else jnp.concatenate(segs, axis=1)
                if kw == 0:
                    win = jnp.where(not_first_col, win, jnp.zeros_like(win))
                elif kw == 2:
                    win = jnp.where(not_last_col, win, jnp.zeros_like(win))
                taps.append(win)
        stack = jnp.concatenate(taps, axis=0)                     # (9*cin, L)
        acc = jnp.dot(w, stack, preferred_element_type=jnp.float32)  # (cout, L)
        return jnp.maximum(acc + b, 0.0)

    # conv1 -> BN -> ReLU
    h1 = conv3x3_bn_relu(xpad_ref, w1_ref[...], b1_ref[...])      # (Cmid, L)
    for n in range(N):
        base = n * STRIDE + PAD
        h1pad_ref[:, base: base + H2W2] = (
            h1[:, n * H2W2:(n + 1) * H2W2].astype(jnp.bfloat16))

    # conv2 -> BN -> ReLU, lane-dense per-image stores
    out = conv3x3_bn_relu(h1pad_ref, w2_ref[...], b2_ref[...])    # (Cout, L)
    for n in range(N):
        o_ref[n] = out[:, n * H2W2:(n + 1) * H2W2]


def up_forward(x_nchw, U, w1, b1, w2, b2):
    N, Cin, H, W = x_nchw.shape
    H2, W2 = 2 * H, 2 * W
    H2W2 = H2 * W2
    PAD = -(-(W2 + 1) // 128) * 128            # halo >= W2+1, lane-aligned
    STRIDE = H2W2 + 2 * PAD
    Cmid = w1.shape[0]
    Cout = w2.shape[0]

    x_flat = x_nchw.reshape(N, Cin, H * W).astype(jnp.bfloat16)

    kernel = functools.partial(_up_doubleconv_kernel, N=N, H2=H2, W2=W2,
                               Cin=Cin, Cmid=Cmid, Cout=Cout,
                               PAD=PAD, STRIDE=STRIDE)

    out_flat = pl.pallas_call(
        kernel,
        out_shape=jax.ShapeDtypeStruct((N, Cout, H2W2), jnp.float32),
        grid_spec=pltpu.PrefetchScalarGridSpec(
            num_scalar_prefetch=0,
            grid=(1,),
            in_specs=[
                pl.BlockSpec((N, Cin, H * W), lambda i: (0, 0, 0)),   # x (bf16)
                pl.BlockSpec((H * W, H2W2), lambda i: (0, 0)),        # kron(Wh^T,Ww^T)
                pl.BlockSpec((Cmid, 9 * Cin), lambda i: (0, 0)),      # conv1 W (bf16)
                pl.BlockSpec((Cmid, 1), lambda i: (0, 0)),            # shift1
                pl.BlockSpec((Cout, 9 * Cmid), lambda i: (0, 0)),     # conv2 W (bf16)
                pl.BlockSpec((Cout, 1), lambda i: (0, 0)),            # shift2
            ],
            out_specs=pl.BlockSpec((N, Cout, H2W2), lambda i: (0, 0, 0)),
            scratch_shapes=[
                pltpu.VMEM((Cin, N * STRIDE), jnp.bfloat16),   # padded up(x)
                pltpu.VMEM((Cmid, N * STRIDE), jnp.bfloat16),  # padded hidden
            ],
        ),
        compiler_params=pltpu.CompilerParams(
            dimension_semantics=("arbitrary",)),
    )(x_flat, U, w1, b1, w2, b2)

    return out_flat.reshape(N, Cout, H2, W2)      # already NCHW


# ---------------------------------------------------------------------------
# Deterministic parameter construction (shapes from Up.__init__, bilinear=True)
# ---------------------------------------------------------------------------
def make_raw_params(key, Cin, Cmid, Cout):
    ks = jax.random.split(key, 12)
    W1 = 0.2 * jax.random.normal(ks[0], (Cmid, Cin, 3, 3), jnp.float32)
    bias1 = 0.1 * jax.random.normal(ks[1], (Cmid,), jnp.float32)
    g1 = 1.0 + 0.1 * jax.random.normal(ks[2], (Cmid,), jnp.float32)
    be1 = 0.1 * jax.random.normal(ks[3], (Cmid,), jnp.float32)
    m1 = 0.1 * jax.random.normal(ks[4], (Cmid,), jnp.float32)
    v1 = 0.5 + jnp.abs(jax.random.normal(ks[5], (Cmid,), jnp.float32))
    W2 = 0.2 * jax.random.normal(ks[6], (Cout, Cmid, 3, 3), jnp.float32)
    bias2 = 0.1 * jax.random.normal(ks[7], (Cout,), jnp.float32)
    g2 = 1.0 + 0.1 * jax.random.normal(ks[8], (Cout,), jnp.float32)
    be2 = 0.1 * jax.random.normal(ks[9], (Cout,), jnp.float32)
    m2 = 0.1 * jax.random.normal(ks[10], (Cout,), jnp.float32)
    v2 = 0.5 + jnp.abs(jax.random.normal(ks[11], (Cout,), jnp.float32))
    return (W1, bias1, g1, be1, m1, v1, W2, bias2, g2, be2, m2, v2)


def fold_params(raw, eps=1e-5):
    (W1, bias1, g1, be1, m1, v1, W2, bias2, g2, be2, m2, v2) = raw
    Cmid, Cin = W1.shape[0], W1.shape[1]
    Cout = W2.shape[0]
    s1 = g1 / jnp.sqrt(v1 + eps)
    b1 = be1 + (bias1 - m1) * s1
    s2 = g2 / jnp.sqrt(v2 + eps)
    b2 = be2 + (bias2 - m2) * s2
    # im2col layout: row-block t = (kh,kw) tap, within block rows = in-channel.
    # BN scale folded into the weights (per output row).
    w1m = (jnp.transpose(W1, (0, 2, 3, 1)).reshape(Cmid, 9 * Cin) * s1[:, None])
    w2m = (jnp.transpose(W2, (0, 2, 3, 1)).reshape(Cout, 9 * Cmid) * s2[:, None])
    return (w1m.astype(jnp.bfloat16), b1.reshape(Cmid, 1),
            w2m.astype(jnp.bfloat16), b2.reshape(Cout, 1))


# ---------------------------------------------------------------------------
# Pure-JAX reference (same eval-mode semantics) for a sanity check
# ---------------------------------------------------------------------------
def reference(x_nchw, Wh, Ww, raw, eps=1e-5):
    (W1, bias1, g1, be1, m1, v1, W2, bias2, g2, be2, m2, v2) = raw
    x_nhwc = jnp.transpose(x_nchw, (0, 2, 3, 1))
    t = jnp.einsum('oh,nhwc->nowc', Wh, x_nhwc)
    x_up = jnp.einsum('pw,nowc->nopc', Ww, t)

    def conv_bn_relu(xn, Wt, bias, g, be, m, v):
        w_hwio = jnp.transpose(Wt, (2, 3, 1, 0))
        y = lax.conv_general_dilated(xn, w_hwio, (1, 1), 'SAME',
                                     dimension_numbers=('NHWC', 'HWIO', 'NHWC'))
        y = (y + bias - m) / jnp.sqrt(v + eps) * g + be
        return jnp.maximum(y, 0.0)

    h = conv_bn_relu(x_up, W1, bias1, g1, be1, m1, v1)
    h = conv_bn_relu(h, W2, bias2, g2, be2, m2, v2)
    return jnp.transpose(h, (0, 3, 1, 2))


if __name__ == "__main__":
    N, Cin, H, W = 2, 4, 16, 16          # x: NCHW, matches Up(in_channels=4, ...)
    Cout = 2
    Cmid = Cin // 2                      # bilinear=True -> mid_channels = in // 2
    eps = 1e-5

    key = jax.random.PRNGKey(0)
    kx, kp = jax.random.split(key)
    x = jax.random.normal(kx, (N, Cin, H, W), jnp.float32)

    raw = make_raw_params(kp, Cin, Cmid, Cout)
    w1m, b1, w2m, b2 = fold_params(raw, eps)

    Wh = _interp_matrix(H, 2 * H)                       # (H2, H)  np.float32
    Ww = _interp_matrix(W, 2 * W)                       # (W2, W)  np.float32
    # Combined separable upsample operator, pixel-minor flat on both sides:
    # U[h*W+w, h2*W2+w2] = Wh[h2,h] * Ww[w2,w]
    U = jnp.asarray(np.kron(Wh.T, Ww.T)).astype(jnp.bfloat16)   # (H*W, H2*W2)

    out = up_forward(x, U, w1m, b1, w2m, b2)
    out = jax.block_until_ready(out)

    assert out.shape == (N, Cout, 2 * H, 2 * W)
    ref = jax.block_until_ready(
        reference(x, jnp.asarray(Wh), jnp.asarray(Ww), raw, eps))
    np.testing.assert_allclose(np.asarray(out), np.asarray(ref),
                               rtol=5e-2, atol=5e-2)
    print("KERNEL_OK")
</pallas_src>

<mosaic_0001>
module attributes {stable_mosaic.version = 11 : i64} {
  func.func @_up_doubleconv_kernel(%arg0: i32, %arg1: memref<2x4x256xbf16, #tpu.memory_space<vmem>>, %arg2: memref<256x1024xbf16, #tpu.memory_space<vmem>>, %arg3: memref<2x36xbf16, #tpu.memory_space<vmem>>, %arg4: memref<2x1xf32, #tpu.memory_space<vmem>>, %arg5: memref<2x18xbf16, #tpu.memory_space<vmem>>, %arg6: memref<2x1xf32, #tpu.memory_space<vmem>>, %arg7: memref<2x2x1024xf32, #tpu.memory_space<vmem>>, %arg8: memref<4x2560xbf16, #tpu.memory_space<vmem>>, %arg9: memref<2x2560xbf16, #tpu.memory_space<vmem>>) attributes {dimension_semantics = [#tpu.dimension_semantics<arbitrary>], iteration_bounds = array<i64: 1>, scalar_prefetch = 0 : i64, scratch_operands = 2 : i64, tpu.core_type = #tpu.core_type<tc>, window_params = [{pipeline_mode = #tpu.pipeline_mode<synchronous>, transform_indices = @transform_0, window_bounds = array<i64: 2, 4, 256>}, {pipeline_mode = #tpu.pipeline_mode<synchronous>, transform_indices = @transform_1, window_bounds = array<i64: 256, 1024>}, {pipeline_mode = #tpu.pipeline_mode<synchronous>, transform_indices = @transform_2, window_bounds = array<i64: 2, 36>}, {pipeline_mode = #tpu.pipeline_mode<synchronous>, transform_indices = @transform_3, window_bounds = array<i64: 2, 1>}, {pipeline_mode = #tpu.pipeline_mode<synchronous>, transform_indices = @transform_4, window_bounds = array<i64: 2, 18>}, {pipeline_mode = #tpu.pipeline_mode<synchronous>, transform_indices = @transform_5, window_bounds = array<i64: 2, 1>}, {pipeline_mode = #tpu.pipeline_mode<synchronous>, transform_indices = @transform_6, window_bounds = array<i64: 2, 2, 1024>}]} {
    %cst = arith.constant 0.000000e+00 : bf16
    %0 = vector.broadcast %cst : bf16 to vector<4x2560xbf16>
    %c0 = arith.constant 0 : index
    %c0_0 = arith.constant 0 : index
    %1 = vector.load %arg8[%c0, %c0_0] : memref<4x2560xbf16, #tpu.memory_space<vmem>>, vector<4x2560xbf16>
    tpu.vector_store %arg8[%c0, %c0_0], %0 {strides = array<i32>} : memref<4x2560xbf16, #tpu.memory_space<vmem>>, vector<4x2560xbf16>,
    %cst_1 = arith.constant 0.000000e+00 : bf16
    %2 = vector.broadcast %cst_1 : bf16 to vector<2x2560xbf16>
    %c0_2 = arith.constant 0 : index
    %c0_3 = arith.constant 0 : index
    %3 = vector.load %arg9[%c0_2, %c0_3] : memref<2x2560xbf16, #tpu.memory_space<vmem>>, vector<2x2560xbf16>
    tpu.vector_store %arg9[%c0_2, %c0_3], %2 {strides = array<i32>} : memref<2x2560xbf16, #tpu.memory_space<vmem>>, vector<2x2560xbf16>,
    %c0_4 = arith.constant 0 : index
    %c0_5 = arith.constant 0 : index
    %c0_6 = arith.constant 0 : index
    %4 = vector.load %arg1[%c0_4, %c0_5, %c0_6] : memref<2x4x256xbf16, #tpu.memory_space<vmem>>, vector<1x4x256xbf16>
    %5 = vector.shape_cast %4 : vector<1x4x256xbf16> to vector<4x256xbf16>
    %c0_7 = arith.constant 0 : index
    %c0_8 = arith.constant 0 : index
    %6 = vector.load %arg2[%c0_7, %c0_8] : memref<256x1024xbf16, #tpu.memory_space<vmem>>, vector<256x1024xbf16>
    %cst_9 = arith.constant dense<0.000000e+00> : vector<4x1024xf32>
    %7 = tpu.matmul %5, %6, %cst_9 {dimension_numbers = #tpu.dot_dimension_numbers<[1], [0], [0], [1], [0, 0, 1, 1], [], []>} : vector<4x256xbf16>, vector<256x1024xbf16>, vector<4x1024xf32> -> vector<4x1024xf32>
    %8 = arith.truncf %7 : vector<4x1024xf32> to vector<4x1024xbf16>
    %c0_10 = arith.constant 0 : index
    %c128 = arith.constant 128 : index
    %9 = vector.load %arg8[%c0_10, %c128] : memref<4x2560xbf16, #tpu.memory_space<vmem>>, vector<4x1024xbf16>
    tpu.vector_store %arg8[%c0_10, %c128], %8 {strides = array<i32>} : memref<4x2560xbf16, #tpu.memory_space<vmem>>, vector<4x1024xbf16>,
    %c1 = arith.constant 1 : index
    %c0_11 = arith.constant 0 : index
    %c0_12 = arith.constant 0 : index
    %10 = vector.load %arg1[%c1, %c0_11, %c0_12] : memref<2x4x256xbf16, #tpu.memory_space<vmem>>, vector<1x4x256xbf16>
    %11 = vector.shape_cast %10 : vector<1x4x256xbf16> to vector<4x256xbf16>
    %c0_13 = arith.constant 0 : index
    %c0_14 = arith.constant 0 : index
    %12 = vector.load %arg2[%c0_13, %c0_14] : memref<256x1024xbf16, #tpu.memory_space<vmem>>, vector<256x1024xbf16>
    %cst_15 = arith.constant dense<0.000000e+00> : vector<4x1024xf32>
    %13 = tpu.matmul %11, %12, %cst_15 {dimension_numbers = #tpu.dot_dimension_numbers<[1], [0], [0], [1], [0, 0, 1, 1], [], []>} : vector<4x256xbf16>, vector<256x1024xbf16>, vector<4x1024xf32> -> vector<4x1024xf32>
    %14 = arith.truncf %13 : vector<4x1024xf32> to vector<4x1024xbf16>
    %c0_16 = arith.constant 0 : index
    %c1408 = arith.constant 1408 : index
    %15 = vector.load %arg8[%c0_16, %c1408] : memref<4x2560xbf16, #tpu.memory_space<vmem>>, vector<4x1024xbf16>
    tpu.vector_store %arg8[%c0_16, %c1408], %14 {strides = array<i32>} : memref<4x2560xbf16, #tpu.memory_space<vmem>>, vector<4x1024xbf16>,
    %16 = tpu.iota {dimensions = array<i32: 1>} : vector<1x2048xi32>
    %c32_i32 = arith.constant 32 : i32
    %c0_i32 = arith.constant 0 : i32
    %17 = arith.cmpi eq, %c32_i32, %c0_i32 : i32
    %c1_i32 = arith.constant 1 : i32
    %18 = arith.select %17, %c1_i32, %c32_i32 : i32
    %19 = vector.broadcast %18 : i32 to vector<1x2048xi32>
    %20 = arith.remsi %16, %19 : vector<1x2048xi32>
    %c0_i32_17 = arith.constant 0 : i32
    %21 = vector.broadcast %c0_i32_17 : i32 to vector<1x2048xi32>
    %22 = arith.cmpi ne, %20, %21 : vector<1x2048xi32>
    %c0_i32_18 = arith.constant 0 : i32
    %23 = vector.broadcast %c0_i32_18 : i32 to vector<1x2048xi32>
    %24 = arith.cmpi slt, %20, %23 : vector<1x2048xi32>
    %c0_i32_19 = arith.constant 0 : i32
    %25 = arith.cmpi slt, %18, %c0_i32_19 : i32
    %26 = vector.broadcast %25 : i1 to vector<1x2048xi1>
    %27 = vector.broadcast %26 : vector<1x2048xi1> to vector<1x2048xi1>
    %28 = arith.xori %24, %27 : vector<1x2048xi1>
    %29 = arith.andi %28, %22 : vector<1x2048xi1>
    %30 = vector.broadcast %18 : i32 to vector<1x2048xi32>
    %31 = arith.addi %20, %30 : vector<1x2048xi32>
    %32 = arith.select %29, %31, %20 : vector<1x2048xi1>, vector<1x2048xi32>
    %c1_i32_20 = arith.constant 1 : i32
    %33 = vector.broadcast %c1_i32_20 : i32 to vector<1x2048xi32>
    %34 = arith.cmpi sge, %32, %33 : vector<1x2048xi32>
    %c30_i32 = arith.constant 30 : i32
    %35 = vector.broadcast %c30_i32 : i32 to vector<1x2048xi32>
    %36 = arith.cmpi sle, %32, %35 : vector<1x2048xi32>
    %c0_21 = arith.constant 0 : index
    %c0_22 = arith.constant 0 : index
    %37 = vector.load %arg3[%c0_21, %c0_22] : memref<2x36xbf16, #tpu.memory_space<vmem>>, vector<2x36xbf16>
    %c0_23 = arith.constant 0 : index
    %c0_24 = arith.constant 0 : index
    %38 = vector.load %arg4[%c0_23, %c0_24] : memref<2x1xf32, #tpu.memory_space<vmem>>, vector<2x1xf32>
    %c0_25 = arith.constant 0 : index
    %c95 = arith.constant 95 : index
    %39 = vector.load %arg8[%c0_25, %c95] : memref<4x2560xbf16, #tpu.memory_space<vmem>>, vector<4x1024xbf16>
    %c0_26 = arith.constant 0 : index
    %c1375 = arith.constant 1375 : index
    %40 = vector.load %arg8[%c0_26, %c1375] : memref<4x2560xbf16, #tpu.memory_space<vmem>>, vector<4x1024xbf16>
    %41 = tpu.concatenate %39, %40 in 1 : vector<4x1024xbf16>, vector<4x1024xbf16> -> vector<4x2048xbf16>
    %cst_27 = arith.constant 0.000000e+00 : bf16
    %42 = vector.broadcast %cst_27 : bf16 to vector<4x2048xbf16>
    %43 = vector.shape_cast %34 : vector<1x2048xi1> to vector<1x2048xi1>
    %44 = vector.broadcast %43 : vector<1x2048xi1> to vector<4x2048xi1>
    %45 = arith.select %44, %41, %42 : vector<4x2048xi1>, vector<4x2048xbf16>
    %c0_28 = arith.constant 0 : index
    %c96 = arith.constant 96 : index
    %46 = vector.load %arg8[%c0_28, %c96] : memref<4x2560xbf16, #tpu.memory_space<vmem>>, vector<4x1024xbf16>
    %c0_29 = arith.constant 0 : index
    %c1376 = arith.constant 1376 : index
    %47 = vector.load %arg8[%c0_29, %c1376] : memref<4x2560xbf16, #tpu.memory_space<vmem>>, vector<4x1024xbf16>
    %48 = tpu.concatenate %46, %47 in 1 : vector<4x1024xbf16>, vector<4x1024xbf16> -> vector<4x2048xbf16>
    %c0_30 = arith.constant 0 : index
    %c97 = arith.constant 97 : index
    %49 = vector.load %arg8[%c0_30, %c97] : memref<4x2560xbf16, #tpu.memory_space<vmem>>, vector<4x1024xbf16>
    %c0_31 = arith.constant 0 : index
    %c1377 = arith.constant 1377 : index
    %50 = vector.load %arg8[%c0_31, %c1377] : memref<4x2560xbf16, #tpu.memory_space<vmem>>, vector<4x1024xbf16>
    %51 = tpu.concatenate %49, %50 in 1 : vector<4x1024xbf16>, vector<4x1024xbf16> -> vector<4x2048xbf16>
    %cst_32 = arith.constant 0.000000e+00 : bf16
    %52 = vector.broadcast %cst_32 : bf16 to vector<4x2048xbf16>
    %53 = vector.shape_cast %36 : vector<1x2048xi1> to vector<1x2048xi1>
    %54 = vector.broadcast %53 : vector<1x2048xi1> to vector<4x2048xi1>
    %55 = arith.select %54, %51, %52 : vector<4x2048xi1>, vector<4x2048xbf16>
    %c0_33 = arith.constant 0 : index
    %c127 = arith.constant 127 : index
    %56 = vector.load %arg8[%c0_33, %c127] : memref<4x2560xbf16, #tpu.memory_space<vmem>>, vector<4x1024xbf16>
    %c0_34 = arith.constant 0 : index
    %c1407 = arith.constant 1407 : index
    %57 = vector.load %arg8[%c0_34, %c1407] : memref<4x2560xbf16, #tpu.memory_space<vmem>>, vector<4x1024xbf16>
    %58 = tpu.concatenate %56, %57 in 1 : vector<4x1024xbf16>, vector<4x1024xbf16> -> vector<4x2048xbf16>
    %cst_35 = arith.constant 0.000000e+00 : bf16
    %59 = vector.broadcast %cst_35 : bf16 to vector<4x2048xbf16>
    %60 = vector.shape_cast %34 : vector<1x2048xi1> to vector<1x2048xi1>
    %61 = vector.broadcast %60 : vector<1x2048xi1> to vector<4x2048xi1>
    %62 = arith.select %61, %58, %59 : vector<4x2048xi1>, vector<4x2048xbf16>
    %c0_36 = arith.constant 0 : index
    %c128_37 = arith.constant 128 : index
    %63 = vector.load %arg8[%c0_36, %c128_37] : memref<4x2560xbf16, #tpu.memory_space<vmem>>, vector<4x1024xbf16>
    %c0_38 = arith.constant 0 : index
    %c1408_39 = arith.constant 1408 : index
    %64 = vector.load %arg8[%c0_38, %c1408_39] : memref<4x2560xbf16, #tpu.memory_space<vmem>>, vector<4x1024xbf16>
    %65 = tpu.concatenate %63, %64 in 1 : vector<4x1024xbf16>, vector<4x1024xbf16> -> vector<4x2048xbf16>
    %c0_40 = arith.constant 0 : index
    %c129 = arith.constant 129 : index
    %66 = vector.load %arg8[%c0_40, %c129] : memref<4x2560xbf16, #tpu.memory_space<vmem>>, vector<4x1024xbf16>
    %c0_41 = arith.constant 0 : index
    %c1409 = arith.constant 1409 : index
    %67 = vector.load %arg8[%c0_41, %c1409] : memref<4x2560xbf16, #tpu.memory_space<vmem>>, vector<4x1024xbf16>
    %68 = tpu.concatenate %66, %67 in 1 : vector<4x1024xbf16>, vector<4x1024xbf16> -> vector<4x2048xbf16>
    %cst_42 = arith.constant 0.000000e+00 : bf16
    %69 = vector.broadcast %cst_42 : bf16 to vector<4x2048xbf16>
    %70 = vector.shape_cast %36 : vector<1x2048xi1> to vector<1x2048xi1>
    %71 = vector.broadcast %70 : vector<1x2048xi1> to vector<4x2048xi1>
    %72 = arith.select %71, %68, %69 : vector<4x2048xi1>, vector<4x2048xbf16>
    %c0_43 = arith.constant 0 : index
    %c159 = arith.constant 159 : index
    %73 = vector.load %arg8[%c0_43, %c159] : memref<4x2560xbf16, #tpu.memory_space<vmem>>, vector<4x1024xbf16>
    %c0_44 = arith.constant 0 : index
    %c1439 = arith.constant 1439 : index
    %74 = vector.load %arg8[%c0_44, %c1439] : memref<4x2560xbf16, #tpu.memory_space<vmem>>, vector<4x1024xbf16>
    %75 = tpu.concatenate %73, %74 in 1 : vector<4x1024xbf16>, vector<4x1024xbf16> -> vector<4x2048xbf16>
    %cst_45 = arith.constant 0.000000e+00 : bf16
    %76 = vector.broadcast %cst_45 : bf16 to vector<4x2048xbf16>
    %77 = vector.shape_cast %34 : vector<1x2048xi1> to vector<1x2048xi1>
    %78 = vector.broadcast %77 : vector<1x2048xi1> to vector<4x2048xi1>
    %79 = arith.select %78, %75, %76 : vector<4x2048xi1>, vector<4x2048xbf16>
    %c0_46 = arith.constant 0 : index
    %c160 = arith.constant 160 : index
    %80 = vector.load %arg8[%c0_46, %c160] : memref<4x2560xbf16, #tpu.memory_space<vmem>>, vector<4x1024xbf16>
    %c0_47 = arith.constant 0 : index
    %c1440 = arith.constant 1440 : index
    %81 = vector.load %arg8[%c0_47, %c1440] : memref<4x2560xbf16, #tpu.memory_space<vmem>>, vector<4x1024xbf16>
    %82 = tpu.concatenate %80, %81 in 1 : vector<4x1024xbf16>, vector<4x1024xbf16> -> vector<4x2048xbf16>
    %c0_48 = arith.constant 0 : index
    %c161 = arith.constant 161 : index
    %83 = vector.load %arg8[%c0_48, %c161] : memref<4x2560xbf16, #tpu.memory_space<vmem>>, vector<4x1024xbf16>
    %c0_49 = arith.constant 0 : index
    %c1441 = arith.constant 1441 : index
    %84 = vector.load %arg8[%c0_49, %c1441] : memref<4x2560xbf16, #tpu.memory_space<vmem>>, vector<4x1024xbf16>
    %85 = tpu.concatenate %83, %84 in 1 : vector<4x1024xbf16>, vector<4x1024xbf16> -> vector<4x2048xbf16>
    %cst_50 = arith.constant 0.000000e+00 : bf16
    %86 = vector.broadcast %cst_50 : bf16 to vector<4x2048xbf16>
    %87 = vector.shape_cast %36 : vector<1x2048xi1> to vector<1x2048xi1>
    %88 = vector.broadcast %87 : vector<1x2048xi1> to vector<4x2048xi1>
    %89 = arith.select %88, %85, %86 : vector<4x2048xi1>, vector<4x2048xbf16>
    %90 = tpu.concatenate %45, %48, %55, %62, %65, %72, %79, %82, %89 in 0 : vector<4x2048xbf16>, vector<4x2048xbf16>, vector<4x2048xbf16>, vector<4x2048xbf16>, vector<4x2048xbf16>, vector<4x2048xbf16>, vector<4x2048xbf16>, vector<4x2048xbf16>, vector<4x2048xbf16> -> vector<36x2048xbf16>
    %cst_51 = arith.constant dense<0.000000e+00> : vector<2x2048xf32>
    %91 = tpu.matmul %37, %90, %cst_51 {dimension_numbers = #tpu.dot_dimension_numbers<[1], [0], [0], [1], [0, 0, 1, 1], [], []>} : vector<2x36xbf16>, vector<36x2048xbf16>, vector<2x2048xf32> -> vector<2x2048xf32>
    %92 = vector.broadcast %38 : vector<2x1xf32> to vector<2x2048xf32>
    %93 = arith.addf %91, %92 : vector<2x2048xf32>
    %cst_52 = arith.constant 0.000000e+00 : f32
    %94 = vector.broadcast %cst_52 : f32 to vector<2x2048xf32>
    %95 = arith.maximumf %93, %94 : vector<2x2048xf32>
    %96 = vector.extract_strided_slice %95 {offsets = [0, 0], sizes = [2, 1024], strides = [1, 1]} : vector<2x2048xf32> to vector<2x1024xf32>
    %97 = arith.truncf %96 : vector<2x1024xf32> to vector<2x1024xbf16>
    %c0_53 = arith.constant 0 : index
    %c128_54 = arith.constant 128 : index
    %98 = vector.load %arg9[%c0_53, %c128_54] : memref<2x2560xbf16, #tpu.memory_space<vmem>>, vector<2x1024xbf16>
    tpu.vector_store %arg9[%c0_53, %c128_54], %97 {strides = array<i32>} : memref<2x2560xbf16, #tpu.memory_space<vmem>>, vector<2x1024xbf16>,
    %99 = vector.extract_strided_slice %95 {offsets = [0, 1024], sizes = [2, 1024], strides = [1, 1]} : vector<2x2048xf32> to vector<2x1024xf32>
    %100 = arith.truncf %99 : vector<2x1024xf32> to vector<2x1024xbf16>
    %c0_55 = arith.constant 0 : index
    %c1408_56 = arith.constant 1408 : index
    %101 = vector.load %arg9[%c0_55, %c1408_56] : memref<2x2560xbf16, #tpu.memory_space<vmem>>, vector<2x1024xbf16>
    tpu.vector_store %arg9[%c0_55, %c1408_56], %100 {strides = array<i32>} : memref<2x2560xbf16, #tpu.memory_space<vmem>>, vector<2x1024xbf16>,
    %c0_57 = arith.constant 0 : index
    %c0_58 = arith.constant 0 : index
    %102 = vector.load %arg5[%c0_57, %c0_58] : memref<2x18xbf16, #tpu.memory_space<vmem>>, vector<2x18xbf16>
    %c0_59 = arith.constant 0 : index
    %c0_60 = arith.constant 0 : index
    %103 = vector.load %arg6[%c0_59, %c0_60] : memref<2x1xf32, #tpu.memory_space<vmem>>, vector<2x1xf32>
    %c0_61 = arith.constant 0 : index
    %c95_62 = arith.constant 95 : index
    %104 = vector.load %arg9[%c0_61, %c95_62] : memref<2x2560xbf16, #tpu.memory_space<vmem>>, vector<2x1024xbf16>
    %c0_63 = arith.constant 0 : index
    %c1375_64 = arith.constant 1375 : index
    %105 = vector.load %arg9[%c0_63, %c1375_64] : memref<2x2560xbf16, #tpu.memory_space<vmem>>, vector<2x1024xbf16>
    %106 = tpu.concatenate %104, %105 in 1 : vector<2x1024xbf16>, vector<2x1024xbf16> -> vector<2x2048xbf16>
    %cst_65 = arith.constant 0.000000e+00 : bf16
    %107 = vector.broadcast %cst_65 : bf16 to vector<2x2048xbf16>
    %108 = vector.shape_cast %34 : vector<1x2048xi1> to vector<1x2048xi1>
    %109 = vector.broadcast %108 : vector<1x2048xi1> to vector<2x2048xi1>
    %110 = arith.select %109, %106, %107 : vector<2x2048xi1>, vector<2x2048xbf16>
    %c0_66 = arith.constant 0 : index
    %c96_67 = arith.constant 96 : index
    %111 = vector.load %arg9[%c0_66, %c96_67] : memref<2x2560xbf16, #tpu.memory_space<vmem>>, vector<2x1024xbf16>
    %c0_68 = arith.constant 0 : index
    %c1376_69 = arith.constant 1376 : index
    %112 = vector.load %arg9[%c0_68, %c1376_69] : memref<2x2560xbf16, #tpu.memory_space<vmem>>, vector<2x1024xbf16>
    %113 = tpu.concatenate %111, %112 in 1 : vector<2x1024xbf16>, vector<2x1024xbf16> -> vector<2x2048xbf16>
    %c0_70 = arith.constant 0 : index
    %c97_71 = arith.constant 97 : index
    %114 = vector.load %arg9[%c0_70, %c97_71] : memref<2x2560xbf16, #tpu.memory_space<vmem>>, vector<2x1024xbf16>
    %c0_72 = arith.constant 0 : index
    %c1377_73 = arith.constant 1377 : index
    %115 = vector.load %arg9[%c0_72, %c1377_73] : memref<2x2560xbf16, #tpu.memory_space<vmem>>, vector<2x1024xbf16>
    %116 = tpu.concatenate %114, %115 in 1 : vector<2x1024xbf16>, vector<2x1024xbf16> -> vector<2x2048xbf16>
    %cst_74 = arith.constant 0.000000e+00 : bf16
    %117 = vector.broadcast %cst_74 : bf16 to vector<2x2048xbf16>
    %118 = vector.shape_cast %36 : vector<1x2048xi1> to vector<1x2048xi1>
    %119 = vector.broadcast %118 : vector<1x2048xi1> to vector<2x2048xi1>
    %120 = arith.select %119, %116, %117 : vector<2x2048xi1>, vector<2x2048xbf16>
    %c0_75 = arith.constant 0 : index
    %c127_76 = arith.constant 127 : index
    %121 = vector.load %arg9[%c0_75, %c127_76] : memref<2x2560xbf16, #tpu.memory_space<vmem>>, vector<2x1024xbf16>
    %c0_77 = arith.constant 0 : index
    %c1407_78 = arith.constant 1407 : index
    %122 = vector.load %arg9[%c0_77, %c1407_78] : memref<2x2560xbf16, #tpu.memory_space<vmem>>, vector<2x1024xbf16>
    %123 = tpu.concatenate %121, %122 in 1 : vector<2x1024xbf16>, vector<2x1024xbf16> -> vector<2x2048xbf16>
    %cst_79 = arith.constant 0.000000e+00 : bf16
    %124 = vector.broadcast %cst_79 : bf16 to vector<2x2048xbf16>
    %125 = vector.shape_cast %34 : vector<1x2048xi1> to vector<1x2048xi1>
    %126 = vector.broadcast %125 : vector<1x2048xi1> to vector<2x2048xi1>
    %127 = arith.select %126, %123, %124 : vector<2x2048xi1>, vector<2x2048xbf16>
    %c0_80 = arith.constant 0 : index
    %c128_81 = arith.constant 128 : index
    %128 = vector.load %arg9[%c0_80, %c128_81] : memref<2x2560xbf16, #tpu.memory_space<vmem>>, vector<2x1024xbf16>
    %c0_82 = arith.constant 0 : index
    %c1408_83 = arith.constant 1408 : index
    %129 = vector.load %arg9[%c0_82, %c1408_83] : memref<2x2560xbf16, #tpu.memory_space<vmem>>, vector<2x1024xbf16>
    %130 = tpu.concatenate %128, %129 in 1 : vector<2x1024xbf16>, vector<2x1024xbf16> -> vector<2x2048xbf16>
    %c0_84 = arith.constant 0 : index
    %c129_85 = arith.constant 129 : index
    %131 = vector.load %arg9[%c0_84, %c129_85] : memref<2x2560xbf16, #tpu.memory_space<vmem>>, vector<2x1024xbf16>
    %c0_86 = arith.constant 0 : index
    %c1409_87 = arith.constant 1409 : index
    %132 = vector.load %arg9[%c0_86, %c1409_87] : memref<2x2560xbf16, #tpu.memory_space<vmem>>, vector<2x1024xbf16>
    %133 = tpu.concatenate %131, %132 in 1 : vector<2x1024xbf16>, vector<2x1024xbf16> -> vector<2x2048xbf16>
    %cst_88 = arith.constant 0.000000e+00 : bf16
    %134 = vector.broadcast %cst_88 : bf16 to vector<2x2048xbf16>
    %135 = vector.shape_cast %36 : vector<1x2048xi1> to vector<1x2048xi1>
    %136 = vector.broadcast %135 : vector<1x2048xi1> to vector<2x2048xi1>
    %137 = arith.select %136, %133, %134 : vector<2x2048xi1>, vector<2x2048xbf16>
    %c0_89 = arith.constant 0 : index
    %c159_90 = arith.constant 159 : index
    %138 = vector.load %arg9[%c0_89, %c159_90] : memref<2x2560xbf16, #tpu.memory_space<vmem>>, vector<2x1024xbf16>
    %c0_91 = arith.constant 0 : index
    %c1439_92 = arith.constant 1439 : index
    %139 = vector.load %arg9[%c0_91, %c1439_92] : memref<2x2560xbf16, #tpu.memory_space<vmem>>, vector<2x1024xbf16>
    %140 = tpu.concatenate %138, %139 in 1 : vector<2x1024xbf16>, vector<2x1024xbf16> -> vector<2x2048xbf16>
    %cst_93 = arith.constant 0.000000e+00 : bf16
    %141 = vector.broadcast %cst_93 : bf16 to vector<2x2048xbf16>
    %142 = vector.shape_cast %34 : vector<1x2048xi1> to vector<1x2048xi1>
    %143 = vector.broadcast %142 : vector<1x2048xi1> to vector<2x2048xi1>
    %144 = arith.select %143, %140, %141 : vector<2x2048xi1>, vector<2x2048xbf16>
    %c0_94 = arith.constant 0 : index
    %c160_95 = arith.constant 160 : index
    %145 = vector.load %arg9[%c0_94, %c160_95] : memref<2x2560xbf16, #tpu.memory_space<vmem>>, vector<2x1024xbf16>
    %c0_96 = arith.constant 0 : index
    %c1440_97 = arith.constant 1440 : index
    %146 = vector.load %arg9[%c0_96, %c1440_97] : memref<2x2560xbf16, #tpu.memory_space<vmem>>, vector<2x1024xbf16>
    %147 = tpu.concatenate %145, %146 in 1 : vector<2x1024xbf16>, vector<2x1024xbf16> -> vector<2x2048xbf16>
    %c0_98 = arith.constant 0 : index
    %c161_99 = arith.constant 161 : index
    %148 = vector.load %arg9[%c0_98, %c161_99] : memref<2x2560xbf16, #tpu.memory_space<vmem>>, vector<2x1024xbf16>
    %c0_100 = arith.constant 0 : index
    %c1441_101 = arith.constant 1441 : index
    %149 = vector.load %arg9[%c0_100, %c1441_101] : memref<2x2560xbf16, #tpu.memory_space<vmem>>, vector<2x1024xbf16>
    %150 = tpu.concatenate %148, %149 in 1 : vector<2x1024xbf16>, vector<2x1024xbf16> -> vector<2x2048xbf16>
    %cst_102 = arith.constant 0.000000e+00 : bf16
    %151 = vector.broadcast %cst_102 : bf16 to vector<2x2048xbf16>
    %152 = vector.shape_cast %36 : vector<1x2048xi1> to vector<1x2048xi1>
    %153 = vector.broadcast %152 : vector<1x2048xi1> to vector<2x2048xi1>
    %154 = arith.select %153, %150, %151 : vector<2x2048xi1>, vector<2x2048xbf16>
    %155 = tpu.concatenate %110, %113, %120, %127, %130, %137, %144, %147, %154 in 0 : vector<2x2048xbf16>, vector<2x2048xbf16>, vector<2x2048xbf16>, vector<2x2048xbf16>, vector<2x2048xbf16>, vector<2x2048xbf16>, vector<2x2048xbf16>, vector<2x2048xbf16>, vector<2x2048xbf16> -> vector<18x2048xbf16>
    %cst_103 = arith.constant dense<0.000000e+00> : vector<2x2048xf32>
    %156 = tpu.matmul %102, %155, %cst_103 {dimension_numbers = #tpu.dot_dimension_numbers<[1], [0], [0], [1], [0, 0, 1, 1], [], []>} : vector<2x18xbf16>, vector<18x2048xbf16>, vector<2x2048xf32> -> vector<2x2048xf32>
    %157 = vector.broadcast %103 : vector<2x1xf32> to vector<2x2048xf32>
    %158 = arith.addf %156, %157 : vector<2x2048xf32>
    %cst_104 = arith.constant 0.000000e+00 : f32
    %159 = vector.broadcast %cst_104 : f32 to vector<2x2048xf32>
    %160 = arith.maximumf %158, %159 : vector<2x2048xf32>
    %161 = vector.extract_strided_slice %160 {offsets = [0, 0], sizes = [2, 1024], strides = [1, 1]} : vector<2x2048xf32> to vector<2x1024xf32>
    %c0_105 = arith.constant 0 : index
    %c0_106 = arith.constant 0 : index
    %c0_107 = arith.constant 0 : index
    %162 = vector.load %arg7[%c0_105, %c0_106, %c0_107] : memref<2x2x1024xf32, #tpu.memory_space<vmem>>, vector<1x2x1024xf32>
    %163 = vector.shape_cast %162 : vector<1x2x1024xf32> to vector<2x1024xf32>
    %164 = vector.shape_cast %161 : vector<2x1024xf32> to vector<1x2x1024xf32>
    tpu.vector_store %arg7[%c0_105, %c0_106, %c0_107], %164 {strides = array<i32>} : memref<2x2x1024xf32, #tpu.memory_space<vmem>>, vector<1x2x1024xf32>,
    %165 = vector.extract_strided_slice %160 {offsets = [0, 1024], sizes = [2, 1024], strides = [1, 1]} : vector<2x2048xf32> to vector<2x1024xf32>
    %c1_108 = arith.constant 1 : index
    %c0_109 = arith.constant 0 : index
    %c0_110 = arith.constant 0 : index
    %166 = vector.load %arg7[%c1_108, %c0_109, %c0_110] : memref<2x2x1024xf32, #tpu.memory_space<vmem>>, vector<1x2x1024xf32>
    %167 = vector.shape_cast %166 : vector<1x2x1024xf32> to vector<2x1024xf32>
    %168 = vector.shape_cast %165 : vector<2x1024xf32> to vector<1x2x1024xf32>
    tpu.vector_store %arg7[%c1_108, %c0_109, %c0_110], %168 {strides = array<i32>} : memref<2x2x1024xf32, #tpu.memory_space<vmem>>, vector<1x2x1024xf32>,
    return
  }
  func.func @transform_0(%arg0: i32) -> (i32, i32, i32) {
    %c0_i32 = arith.constant 0 : i32
    %c0_i32_0 = arith.constant 0 : i32
    %c0_i32_1 = arith.constant 0 : i32
    %c0_i32_2 = arith.constant 0 : i32
    return %c0_i32, %c0_i32_0, %c0_i32_1 : i32, i32, i32
  }
  func.func @transform_1(%arg0: i32) -> (i32, i32) {
    %c0_i32 = arith.constant 0 : i32
    %c0_i32_0 = arith.constant 0 : i32
    %c0_i32_1 = arith.constant 0 : i32
    return %c0_i32, %c0_i32_0 : i32, i32
  }
  func.func @transform_2(%arg0: i32) -> (i32, i32) {
    %c0_i32 = arith.constant 0 : i32
    %c0_i32_0 = arith.constant 0 : i32
    %c0_i32_1 = arith.constant 0 : i32
    return %c0_i32, %c0_i32_0 : i32, i32
  }
  func.func @transform_3(%arg0: i32) -> (i32, i32) {
    %c0_i32 = arith.constant 0 : i32
    %c0_i32_0 = arith.constant 0 : i32
    %c0_i32_1 = arith.constant 0 : i32
    return %c0_i32, %c0_i32_0 : i32, i32
  }
  func.func @transform_4(%arg0: i32) -> (i32, i32) {
    %c0_i32 = arith.constant 0 : i32
    %c0_i32_0 = arith.constant 0 : i32
    %c0_i32_1 = arith.constant 0 : i32
    return %c0_i32, %c0_i32_0 : i32, i32
  }
  func.func @transform_5(%arg0: i32) -> (i32, i32) {
    %c0_i32 = arith.constant 0 : i32
    %c0_i32_0 = arith.constant 0 : i32
    %c0_i32_1 = arith.constant 0 : i32
    return %c0_i32, %c0_i32_0 : i32, i32
  }
  func.func @transform_6(%arg0: i32) -> (i32, i32, i32) {
    %c0_i32 = arith.constant 0 : i32
    %c0_i32_0 = arith.constant 0 : i32
    %c0_i32_1 = arith.constant 0 : i32
    %c0_i32_2 = arith.constant 0 : i32
    return %c0_i32, %c0_i32_0, %c0_i32_1 : i32, i32, i32
  }
}

</mosaic_0001>

<llo_original>
// kernel: tpu_custom_call.1
$region0: #{tpu_custom_call.1}
  #allocation0 [shape = 'u32[]', space=smem, size = 0x4, offset = 0x4, fixed_abs, tag = 'smem constant byte address 0x4 - core index']
  #allocation1 [shape = 'u32[144,128]{1,0:T(1,128)}', space=vmem, size = 0x12000, scoped, tag = 'internal scratch']
  #allocation2 [shape = 'bf16[4,2560]{1,0:T(4,128)(2,1)}', space=vmem, size = 0x5000, scoped, tag = 'scratch operand']
  #allocation3 [shape = 'bf16[2,2560]{1,0:T(2,128)(2,1)}', space=vmem, size = 0x2800, scoped, tag = 'scratch operand']
  %s0 = inlined_call_operand.hbm [shape: bf16[2,4,256], index: 0, kind: input, shape index: {}]
  %s1 = inlined_call_operand.hbm [shape: bf16[256,1024], index: 1, kind: input, shape index: {}]
  %s2 = inlined_call_operand.vmem [shape: bf16[2,36], index: 2, kind: input, shape index: {}]
  %s3 = inlined_call_operand.vmem [shape: f32[2,1], index: 3, kind: input, shape index: {}]
  %s4 = inlined_call_operand.vmem [shape: bf16[2,18], index: 4, kind: input, shape index: {}]
  %s5 = inlined_call_operand.vmem [shape: f32[2,1], index: 5, kind: input, shape index: {}]
  %s6 = inlined_call_operand.hbm [shape: f32[2,2,1024], index: 6, kind: output, shape index: {}]
  %s7 = sld [smem:[#allocation0]]
  $region42: #{tpu_custom_call.1} parent=0
    _
  %s9 = ssub.s32 1, %s7
  %s10 = scalar_select 0, %s9, %s7
  $region1: #{tpu_custom_call.1} parent=0
    #allocation4 [shape = 'u8[4096]{0}', space=vmem, size = 0x1000, scoped, tag = 'input window, operand 0, single buffered']
    #allocation5 [shape = 's32[1]{0}', space=sflag, size = 0x4, scoped, tag = 'scoped memory for tpu_custom_call.1']
    #allocation6 [shape = 's32[1]{0}', space=sflag, size = 0x4, scoped, tag = 'scoped memory for tpu_custom_call.1']
    #allocation7 [shape = 'u8[524288]{0}', space=vmem, size = 0x80000, scoped, tag = 'input window, operand 1, single buffered']
    #allocation8 [shape = 's32[1]{0}', space=sflag, size = 0x4, scoped, tag = 'scoped memory for tpu_custom_call.1']
    #allocation9 [shape = 'u8[16384]{0}', space=vmem, size = 0x4000, scoped, tag = 'output window, operand 0, single buffered']
    %11 = vsyncpa [#allocation5], 0
    %12 = vsyncpa [#allocation8], 0
    %13 = vsyncpa [#allocation6], 0
    // Predicated region
    $region2: #{tpu_custom_call.1} parent=1 // pred_check
      _
    $region3: #{tpu_custom_call.1} parent=1 // pred_check_branch
      %15 = sbr.rel (0) target = $region5
    $region4: #{tpu_custom_call.1} parent=1 // pred_region
      %s17 = ssub.s32 128, 128
      %18 = vsyncadd [#allocation5], %s17
      %s19 = sshll.u32 [#allocation4], 4
      %s20 = int_to_ptr.vmem [resolvable:$true] %s19
      %25 = dma.hbm_to_vmem [thread:$0]  %s0, 128, %s20, [#allocation5], 64, 64, 4
    $region5: #{tpu_custom_call.1} parent=1 // pred_fallthru
      _
    // Predicated region
    $region6: #{tpu_custom_call.1} parent=1 // pred_check
      _
    $region7: #{tpu_custom_call.1} parent=1 // pred_check_branch
      %27 = sbr.rel (0) target = $region9
    $region8: #{tpu_custom_call.1} parent=1 // pred_region
      %s29 = ssub.s32 16384, 16384
      %30 = vsyncadd [#allocation8], %s29
      %s31 = sshll.u32 [#allocation7], 4
      %s32 = int_to_ptr.vmem [resolvable:$true] %s31
      %37 = dma.hbm_to_vmem [thread:$0]  %s1, 16384, %s32, [#allocation8], 512, 512, 32
    $region9: #{tpu_custom_call.1} parent=1 // pred_fallthru
      _
    // Predicated region
    $region10: #{tpu_custom_call.1} parent=1 // pred_check
      _
    $region11: #{tpu_custom_call.1} parent=1 // pred_check_branch
      %39 = sbr.rel (0) target = $region13
    $region12: #{tpu_custom_call.1} parent=1 // pred_region
      _
    $region13: #{tpu_custom_call.1} parent=1 // pred_fallthru
      _
    // Predicated region
    $region14: #{tpu_custom_call.1} parent=1 // pred_check
      _
    $region15: #{tpu_custom_call.1} parent=1 // pred_check_branch
      %41 = sbr.rel (0) target = $region17
    $region16: #{tpu_custom_call.1} parent=1 // pred_region
      _
    $region17: #{tpu_custom_call.1} parent=1 // pred_fallthru
      _
    // Predicated region
    $region18: #{tpu_custom_call.1} parent=1 // pred_check
      _
    $region19: #{tpu_custom_call.1} parent=1 // pred_check_branch
      %43 = sbr.rel (0) target = $region21
    $region20: #{tpu_custom_call.1} parent=1 // pred_region
      _
    $region21: #{tpu_custom_call.1} parent=1 // pred_fallthru
      _
    // Predicated region
    $region22: #{tpu_custom_call.1} parent=1 // pred_check
      _
    $region23: #{tpu_custom_call.1} parent=1 // pred_check_branch
      %45 = sbr.rel (0) target = $region25
    $region24: #{tpu_custom_call.1} parent=1 // pred_region
      _
    $region25: #{tpu_custom_call.1} parent=1 // pred_fallthru
      _
    // Predicated region
    $region26: #{tpu_custom_call.1} parent=1 // pred_check
      _
    $region27: #{tpu_custom_call.1} parent=1 // pred_check_branch
      %47 = sbr.rel (0) target = $region29
    $region28: #{tpu_custom_call.1} parent=1 // pred_region
      %48 = dma.done [#allocation5], 128
    $region29: #{tpu_custom_call.1} parent=1 // pred_fallthru
      _
    // Predicated region
    $region30: #{tpu_custom_call.1} parent=1 // pred_check
      _
    $region31: #{tpu_custom_call.1} parent=1 // pred_check_branch
      %50 = sbr.rel (0) target = $region33
    $region32: #{tpu_custom_call.1} parent=1 // pred_region
      %51 = dma.done [#allocation8], 16384
    $region33: #{tpu_custom_call.1} parent=1 // pred_fallthru
      _
    %55 = vst [vmem:[#allocation2] sm:$0xff] 0
    %56 = vst [vmem:[#allocation2 + $0x8] sm:$0xff] 0
    %57 = vst [vmem:[#allocation2 + $0x10] sm:$0xff] 0
    %58 = vst [vmem:[#allocation2 + $0x18] sm:$0xff] 0
    %59 = vst [vmem:[#allocation2 + $0x20] sm:$0xff] 0
    %60 = vst [vmem:[#allocation3] sm:$0xff] 0
    %61 = vst [vmem:[#allocation3 + $0x8] sm:$0xff] 0
    %62 = vst [vmem:[#allocation3 + $0x10] sm:$0xf] 0
    %v63 = vld [vmem:[#allocation4] sm:$0xf]
    %v64 = vld [vmem:[#allocation7] sm:$0xff]
    %v65 = vld [vmem:[#allocation7 + $0x8] sm:$0xff]
    %v66 = vld [vmem:[#allocation7 + $0x10] sm:$0xff]
    %v67 = vld [vmem:[#allocation7 + $0x18] sm:$0xff]
    %v68 = vld [vmem:[#allocation7 + $0x20] sm:$0xff]
    %v69 = vld [vmem:[#allocation7 + $0x28] sm:$0xff]
    %v70 = vld [vmem:[#allocation7 + $0x30] sm:$0xff]
    %v71 = vld [vmem:[#allocation7 + $0x38] sm:$0xff]
    %v72 = vld [vmem:[#allocation7 + $0x40] sm:$0xff]
    %v73 = vld [vmem:[#allocation7 + $0x48] sm:$0xff]
    %v74 = vld [vmem:[#allocation7 + $0x50] sm:$0xff]
    %v75 = vld [vmem:[#allocation7 + $0x58] sm:$0xff]
    %v76 = vld [vmem:[#allocation7 + $0x60] sm:$0xff]
    %v77 = vld [vmem:[#allocation7 + $0x68] sm:$0xff]
    %v78 = vld [vmem:[#allocation7 + $0x70] sm:$0xff]
    %v79 = vld [vmem:[#allocation7 + $0x78] sm:$0xff]
    %v80 = vld [vmem:[#allocation7 + $0x80] sm:$0xff]
    %v81 = vld [vmem:[#allocation7 + $0x88] sm:$0xff]
    %v82 = vld [vmem:[#allocation7 + $0x90] sm:$0xff]
    %v83 = vld [vmem:[#allocation7 + $0x98] sm:$0xff]
    %v84 = vld [vmem:[#allocation7 + $0xa0] sm:$0xff]
    %v85 = vld [vmem:[#allocation7 + $0xa8] sm:$0xff]
    %v86 = vld [vmem:[#allocation7 + $0xb0] sm:$0xff]
    %v87 = vld [vmem:[#allocation7 + $0xb8] sm:$0xff]
    %v88 = vld [vmem:[#allocation7 + $0xc0] sm:$0xff]
    %v89 = vld [vmem:[#allocation7 + $0xc8] sm:$0xff]
    %v90 = vld [vmem:[#allocation7 + $0xd0] sm:$0xff]
    %v91 = vld [vmem:[#allocation7 + $0xd8] sm:$0xff]
    %v92 = vld [vmem:[#allocation7 + $0xe0] sm:$0xff]
    %v93 = vld [vmem:[#allocation7 + $0xe8] sm:$0xff]
    %v94 = vld [vmem:[#allocation7 + $0xf0] sm:$0xff]
    %v95 = vld [vmem:[#allocation7 + $0xf8] sm:$0xff]
    %v96 = vld [vmem:[#allocation7 + $0x100] sm:$0xff]
    %v97 = vld [vmem:[#allocation7 + $0x108] sm:$0xff]
    %v98 = vld [vmem:[#allocation7 + $0x110] sm:$0xff]
    %v99 = vld [vmem:[#allocation7 + $0x118] sm:$0xff]
    %v100 = vld [vmem:[#allocation7 + $0x120] sm:$0xff]
    %v101 = vld [vmem:[#allocation7 + $0x128] sm:$0xff]
    %v102 = vld [vmem:[#allocation7 + $0x130] sm:$0xff]
    %v103 = vld [vmem:[#allocation7 + $0x138] sm:$0xff]
    %v104 = vld [vmem:[#allocation7 + $0x140] sm:$0xff]
    %v105 = vld [vmem:[#allocation7 + $0x148] sm:$0xff]
    %v106 = vld [vmem:[#allocation7 + $0x150] sm:$0xff]
    %v107 = vld [vmem:[#allocation7 + $0x158] sm:$0xff]
    %v108 = vld [vmem:[#allocation7 + $0x160] sm:$0xff]
    %v109 = vld [vmem:[#allocation7 + $0x168] sm:$0xff]
    %v110 = vld [vmem:[#allocation7 + $0x170] sm:$0xff]
    %v111 = vld [vmem:[#allocation7 + $0x178] sm:$0xff]
    %v112 = vld [vmem:[#allocation7 + $0x180] sm:$0xff]
    %v113 = vld [vmem:[#allocation7 + $0x188] sm:$0xff]
    %v114 = vld [vmem:[#allocation7 + $0x190] sm:$0xff]
    %v115 = vld [vmem:[#allocation7 + $0x198] sm:$0xff]
    %v116 = vld [vmem:[#allocation7 + $0x1a0] sm:$0xff]
    %v117 = vld [vmem:[#allocation7 + $0x1a8] sm:$0xff]
    %v118 = vld [vmem:[#allocation7 + $0x1b0] sm:$0xff]
    %v119 = vld [vmem:[#allocation7 + $0x1b8] sm:$0xff]
    %v120 = vld [vmem:[#allocation7 + $0x1c0] sm:$0xff]
    %v121 = vld [vmem:[#allocation7 + $0x1c8] sm:$0xff]
    %v122 = vld [vmem:[#allocation7 + $0x1d0] sm:$0xff]
    %v123 = vld [vmem:[#allocation7 + $0x1d8] sm:$0xff]
    %v124 = vld [vmem:[#allocation7 + $0x1e0] sm:$0xff]
    %v125 = vld [vmem:[#allocation7 + $0x1e8] sm:$0xff]
    %v126 = vld [vmem:[#allocation7 + $0x1f0] sm:$0xff]
    %v127 = vld [vmem:[#allocation7 + $0x1f8] sm:$0xff]
    %v128 = vld [vmem:[#allocation7 + $0x200] sm:$0xff]
    %v129 = vld [vmem:[#allocation7 + $0x208] sm:$0xff]
    %v130 = vld [vmem:[#allocation7 + $0x210] sm:$0xff]
    %v131 = vld [vmem:[#allocation7 + $0x218] sm:$0xff]
    %v132 = vld [vmem:[#allocation7 + $0x220] sm:$0xff]
    %v133 = vld [vmem:[#allocation7 + $0x228] sm:$0xff]
    %v134 = vld [vmem:[#allocation7 + $0x230] sm:$0xff]
    %v135 = vld [vmem:[#allocation7 + $0x238] sm:$0xff]
    %v136 = vld [vmem:[#allocation7 + $0x240] sm:$0xff]
    %v137 = vld [vmem:[#allocation7 + $0x248] sm:$0xff]
    %v138 = vld [vmem:[#allocation7 + $0x250] sm:$0xff]
    %v139 = vld [vmem:[#allocation7 + $0x258] sm:$0xff]
    %v140 = vld [vmem:[#allocation7 + $0x260] sm:$0xff]
    %v141 = vld [vmem:[#allocation7 + $0x268] sm:$0xff]
    %v142 = vld [vmem:[#allocation7 + $0x270] sm:$0xff]
    %v143 = vld [vmem:[#allocation7 + $0x278] sm:$0xff]
    %v144 = vld [vmem:[#allocation7 + $0x280] sm:$0xff]
    %v145 = vld [vmem:[#allocation7 + $0x288] sm:$0xff]
    %v146 = vld [vmem:[#allocation7 + $0x290] sm:$0xff]
    %v147 = vld [vmem:[#allocation7 + $0x298] sm:$0xff]
    %v148 = vld [vmem:[#allocation7 + $0x2a0] sm:$0xff]
    %v149 = vld [vmem:[#allocation7 + $0x2a8] sm:$0xff]
    %v150 = vld [vmem:[#allocation7 + $0x2b0] sm:$0xff]
    %v151 = vld [vmem:[#allocation7 + $0x2b8] sm:$0xff]
    %v152 = vld [vmem:[#allocation7 + $0x2c0] sm:$0xff]
    %v153 = vld [vmem:[#allocation7 + $0x2c8] sm:$0xff]
    %v154 = vld [vmem:[#allocation7 + $0x2d0] sm:$0xff]
    %v155 = vld [vmem:[#allocation7 + $0x2d8] sm:$0xff]
    %v156 = vld [vmem:[#allocation7 + $0x2e0] sm:$0xff]
    %v157 = vld [vmem:[#allocation7 + $0x2e8] sm:$0xff]
    %v158 = vld [vmem:[#allocation7 + $0x2f0] sm:$0xff]
    %v159 = vld [vmem:[#allocation7 + $0x2f8] sm:$0xff]
    %v160 = vld [vmem:[#allocation7 + $0x300] sm:$0xff]
    %v161 = vld [vmem:[#allocation7 + $0x308] sm:$0xff]
    %v162 = vld [vmem:[#allocation7 + $0x310] sm:$0xff]
    %v163 = vld [vmem:[#allocation7 + $0x318] sm:$0xff]
    %v164 = vld [vmem:[#allocation7 + $0x320] sm:$0xff]
    %v165 = vld [vmem:[#allocation7 + $0x328] sm:$0xff]
    %v166 = vld [vmem:[#allocation7 + $0x330] sm:$0xff]
    %v167 = vld [vmem:[#allocation7 + $0x338] sm:$0xff]
    %v168 = vld [vmem:[#allocation7 + $0x340] sm:$0xff]
    %v169 = vld [vmem:[#allocation7 + $0x348] sm:$0xff]
    %v170 = vld [vmem:[#allocation7 + $0x350] sm:$0xff]
    %v171 = vld [vmem:[#allocation7 + $0x358] sm:$0xff]
    %v172 = vld [vmem:[#allocation7 + $0x360] sm:$0xff]
    %v173 = vld [vmem:[#allocation7 + $0x368] sm:$0xff]
    %v174 = vld [vmem:[#allocation7 + $0x370] sm:$0xff]
    %v175 = vld [vmem:[#allocation7 + $0x378] sm:$0xff]
    %v176 = vld [vmem:[#allocation7 + $0x380] sm:$0xff]
    %v177 = vld [vmem:[#allocation7 + $0x388] sm:$0xff]
    %v178 = vld [vmem:[#allocation7 + $0x390] sm:$0xff]
    %v179 = vld [vmem:[#allocation7 + $0x398] sm:$0xff]
    %v180 = vld [vmem:[#allocation7 + $0x3a0] sm:$0xff]
    %v181 = vld [vmem:[#allocation7 + $0x3a8] sm:$0xff]
    %v182 = vld [vmem:[#allocation7 + $0x3b0] sm:$0xff]
    %v183 = vld [vmem:[#allocation7 + $0x3b8] sm:$0xff]
    %v184 = vld [vmem:[#allocation7 + $0x3c0] sm:$0xff]
    %v185 = vld [vmem:[#allocation7 + $0x3c8] sm:$0xff]
    %v186 = vld [vmem:[#allocation7 + $0x3d0] sm:$0xff]
    %v187 = vld [vmem:[#allocation7 + $0x3d8] sm:$0xff]
    %v188 = vld [vmem:[#allocation7 + $0x3e0] sm:$0xff]
    %v189 = vld [vmem:[#allocation7 + $0x3e8] sm:$0xff]
    %v190 = vld [vmem:[#allocation7 + $0x3f0] sm:$0xff]
    %v191 = vld [vmem:[#allocation7 + $0x3f8] sm:$0xff]
    %v194 = vunpack.c.l.s4 1983009808
    %v195 = vunpack.c.0.s8 %v194
    %v196 = vlaneseq
    %v197 = vshrl.u32 %v196, 7
    %v198 = vsub.s32 %v195, %v197
    %v199 = vrot.slane %v63, %v198
    %v200 = vcombine.high %v199, %v199
    %v331 = vunpack.c.l.b16 %v64
    %v332 = vunpack.c.h.b16 %v64
    %v333 = vunpack.c.l.b16 %v65
    %v334 = vunpack.c.h.b16 %v65
    %v335 = vunpack.c.l.b16 %v66
    %v336 = vunpack.c.h.b16 %v66
    %v337 = vunpack.c.l.b16 %v67
    %v338 = vunpack.c.h.b16 %v67
    %v339 = vunpack.c.l.b16 %v68
    %v340 = vunpack.c.h.b16 %v68
    %v341 = vunpack.c.l.b16 %v69
    %v342 = vunpack.c.h.b16 %v69
    %v343 = vunpack.c.l.b16 %v70
    %v344 = vunpack.c.h.b16 %v70
    %v345 = vunpack.c.l.b16 %v71
    %v346 = vunpack.c.h.b16 %v71
    %v347 = vunpack.c.l.b16 %v72
    %v348 = vunpack.c.h.b16 %v72
    %v349 = vunpack.c.l.b16 %v73
    %v350 = vunpack.c.h.b16 %v73
    %v351 = vunpack.c.l.b16 %v74
    %v352 = vunpack.c.h.b16 %v74
    %v353 = vunpack.c.l.b16 %v75
    %v354 = vunpack.c.h.b16 %v75
    %v355 = vunpack.c.l.b16 %v76
    %v356 = vunpack.c.h.b16 %v76
    %v357 = vunpack.c.l.b16 %v77
    %v358 = vunpack.c.h.b16 %v77
    %v359 = vunpack.c.l.b16 %v78
    %v360 = vunpack.c.h.b16 %v78
    %v361 = vunpack.c.l.b16 %v79
    %v362 = vunpack.c.h.b16 %v79
    %v363 = vunpack.c.l.b16 %v80
    %v364 = vunpack.c.h.b16 %v80
    %v365 = vunpack.c.l.b16 %v81
    %v366 = vunpack.c.h.b16 %v81
    %v367 = vunpack.c.l.b16 %v82
    %v368 = vunpack.c.h.b16 %v82
    %v369 = vunpack.c.l.b16 %v83
    %v370 = vunpack.c.h.b16 %v83
    %v371 = vunpack.c.l.b16 %v84
    %v372 = vunpack.c.h.b16 %v84
    %v373 = vunpack.c.l.b16 %v85
    %v374 = vunpack.c.h.b16 %v85
    %v375 = vunpack.c.l.b16 %v86
    %v376 = vunpack.c.h.b16 %v86
    %v377 = vunpack.c.l.b16 %v87
    %v378 = vunpack.c.h.b16 %v87
    %v379 = vunpack.c.l.b16 %v88
    %v380 = vunpack.c.h.b16 %v88
    %v381 = vunpack.c.l.b16 %v89
    %v382 = vunpack.c.h.b16 %v89
    %v383 = vunpack.c.l.b16 %v90
    %v384 = vunpack.c.h.b16 %v90
    %v385 = vunpack.c.l.b16 %v91
    %v386 = vunpack.c.h.b16 %v91
    %v387 = vunpack.c.l.b16 %v92
    %v388 = vunpack.c.h.b16 %v92
    %v389 = vunpack.c.l.b16 %v93
    %v390 = vunpack.c.h.b16 %v93
    %v391 = vunpack.c.l.b16 %v94
    %v392 = vunpack.c.h.b16 %v94
    %v393 = vunpack.c.l.b16 %v95
    %v394 = vunpack.c.h.b16 %v95
    %v395 = vunpack.c.l.b16 %v96
    %v396 = vunpack.c.h.b16 %v96
    %v397 = vunpack.c.l.b16 %v97
    %v398 = vunpack.c.h.b16 %v97
    %v399 = vunpack.c.l.b16 %v98
    %v400 = vunpack.c.h.b16 %v98
    %v401 = vunpack.c.l.b16 %v99
    %v402 = vunpack.c.h.b16 %v99
    %v403 = vunpack.c.l.b16 %v100
    %v404 = vunpack.c.h.b16 %v100
    %v405 = vunpack.c.l.b16 %v101
    %v406 = vunpack.c.h.b16 %v101
    %v407 = vunpack.c.l.b16 %v102
    %v408 = vunpack.c.h.b16 %v102
    %v409 = vunpack.c.l.b16 %v103
    %v410 = vunpack.c.h.b16 %v103
    %v411 = vunpack.c.l.b16 %v104
    %v412 = vunpack.c.h.b16 %v104
    %v413 = vunpack.c.l.b16 %v105
    %v414 = vunpack.c.h.b16 %v105
    %v415 = vunpack.c.l.b16 %v106
    %v416 = vunpack.c.h.b16 %v106
    %v417 = vunpack.c.l.b16 %v107
    %v418 = vunpack.c.h.b16 %v107
    %v419 = vunpack.c.l.b16 %v108
    %v420 = vunpack.c.h.b16 %v108
    %v421 = vunpack.c.l.b16 %v109
    %v422 = vunpack.c.h.b16 %v109
    %v423 = vunpack.c.l.b16 %v110
    %v424 = vunpack.c.h.b16 %v110
    %v425 = vunpack.c.l.b16 %v111
    %v426 = vunpack.c.h.b16 %v111
    %v427 = vunpack.c.l.b16 %v112
    %v428 = vunpack.c.h.b16 %v112
    %v429 = vunpack.c.l.b16 %v113
    %v430 = vunpack.c.h.b16 %v113
    %v431 = vunpack.c.l.b16 %v114
    %v432 = vunpack.c.h.b16 %v114
    %v433 = vunpack.c.l.b16 %v115
    %v434 = vunpack.c.h.b16 %v115
    %v435 = vunpack.c.l.b16 %v116
    %v436 = vunpack.c.h.b16 %v116
    %v437 = vunpack.c.l.b16 %v117
    %v438 = vunpack.c.h.b16 %v117
    %v439 = vunpack.c.l.b16 %v118
    %v440 = vunpack.c.h.b16 %v118
    %v441 = vunpack.c.l.b16 %v119
    %v442 = vunpack.c.h.b16 %v119
    %v443 = vunpack.c.l.b16 %v120
    %v444 = vunpack.c.h.b16 %v120
    %v445 = vunpack.c.l.b16 %v121
    %v446 = vunpack.c.h.b16 %v121
    %v447 = vunpack.c.l.b16 %v122
    %v448 = vunpack.c.h.b16 %v122
    %v449 = vunpack.c.l.b16 %v123
    %v450 = vunpack.c.h.b16 %v123
    %v451 = vunpack.c.l.b16 %v124
    %v452 = vunpack.c.h.b16 %v124
    %v453 = vunpack.c.l.b16 %v125
    %v454 = vunpack.c.h.b16 %v125
    %v455 = vunpack.c.l.b16 %v126
    %v456 = vunpack.c.h.b16 %v126
    %v457 = vunpack.c.l.b16 %v127
    %v458 = vunpack.c.h.b16 %v127
    %v459 = vunpack.c.l.b16 %v128
    %v460 = vunpack.c.h.b16 %v128
    %v461 = vunpack.c.l.b16 %v129
    %v462 = vunpack.c.h.b16 %v129
    %v463 = vunpack.c.l.b16 %v130
    %v464 = vunpack.c.h.b16 %v130
    %v465 = vunpack.c.l.b16 %v131
    %v466 = vunpack.c.h.b16 %v131
    %v467 = vunpack.c.l.b16 %v132
    %v468 = vunpack.c.h.b16 %v132
    %v469 = vunpack.c.l.b16 %v133
    %v470 = vunpack.c.h.b16 %v133
    %v471 = vunpack.c.l.b16 %v134
    %v472 = vunpack.c.h.b16 %v134
    %v473 = vunpack.c.l.b16 %v135
    %v474 = vunpack.c.h.b16 %v135
    %v475 = vunpack.c.l.b16 %v136
    %v476 = vunpack.c.h.b16 %v136
    %v477 = vunpack.c.l.b16 %v137
    %v478 = vunpack.c.h.b16 %v137
    %v479 = vunpack.c.l.b16 %v138
    %v480 = vunpack.c.h.b16 %v138
    %v481 = vunpack.c.l.b16 %v139
    %v482 = vunpack.c.h.b16 %v139
    %v483 = vunpack.c.l.b16 %v140
    %v484 = vunpack.c.h.b16 %v140
    %v485 = vunpack.c.l.b16 %v141
    %v486 = vunpack.c.h.b16 %v141
    %v487 = vunpack.c.l.b16 %v142
    %v488 = vunpack.c.h.b16 %v142
    %v489 = vunpack.c.l.b16 %v143
    %v490 = vunpack.c.h.b16 %v143
    %v491 = vunpack.c.l.b16 %v144
    %v492 = vunpack.c.h.b16 %v144
    %v493 = vunpack.c.l.b16 %v145
    %v494 = vunpack.c.h.b16 %v145
    %v495 = vunpack.c.l.b16 %v146
    %v496 = vunpack.c.h.b16 %v146
    %v497 = vunpack.c.l.b16 %v147
    %v498 = vunpack.c.h.b16 %v147
    %v499 = vunpack.c.l.b16 %v148
    %v500 = vunpack.c.h.b16 %v148
    %v501 = vunpack.c.l.b16 %v149
    %v502 = vunpack.c.h.b16 %v149
    %v503 = vunpack.c.l.b16 %v150
    %v504 = vunpack.c.h.b16 %v150
    %v505 = vunpack.c.l.b16 %v151
    %v506 = vunpack.c.h.b16 %v151
    %v507 = vunpack.c.l.b16 %v152
    %v508 = vunpack.c.h.b16 %v152
    %v509 = vunpack.c.l.b16 %v153
    %v510 = vunpack.c.h.b16 %v153
    %v511 = vunpack.c.l.b16 %v154
    %v512 = vunpack.c.h.b16 %v154
    %v513 = vunpack.c.l.b16 %v155
    %v514 = vunpack.c.h.b16 %v155
    %v515 = vunpack.c.l.b16 %v156
    %v516 = vunpack.c.h.b16 %v156
    %v517 = vunpack.c.l.b16 %v157
    %v518 = vunpack.c.h.b16 %v157
    %v519 = vunpack.c.l.b16 %v158
    %v520 = vunpack.c.h.b16 %v158
    %v521 = vunpack.c.l.b16 %v159
    %v522 = vunpack.c.h.b16 %v159
    %v523 = vunpack.c.l.b16 %v160
    %v524 = vunpack.c.h.b16 %v160
    %v525 = vunpack.c.l.b16 %v161
    %v526 = vunpack.c.h.b16 %v161
    %v527 = vunpack.c.l.b16 %v162
    %v528 = vunpack.c.h.b16 %v162
    %v529 = vunpack.c.l.b16 %v163
    %v530 = vunpack.c.h.b16 %v163
    %v531 = vunpack.c.l.b16 %v164
    %v532 = vunpack.c.h.b16 %v164
    %v533 = vunpack.c.l.b16 %v165
    %v534 = vunpack.c.h.b16 %v165
    %v535 = vunpack.c.l.b16 %v166
    %v536 = vunpack.c.h.b16 %v166
    %v537 = vunpack.c.l.b16 %v167
    %v538 = vunpack.c.h.b16 %v167
    %v539 = vunpack.c.l.b16 %v168
    %v540 = vunpack.c.h.b16 %v168
    %v541 = vunpack.c.l.b16 %v169
    %v542 = vunpack.c.h.b16 %v169
    %v543 = vunpack.c.l.b16 %v170
    %v544 = vunpack.c.h.b16 %v170
    %v545 = vunpack.c.l.b16 %v171
    %v546 = vunpack.c.h.b16 %v171
    %v547 = vunpack.c.l.b16 %v172
    %v548 = vunpack.c.h.b16 %v172
    %v549 = vunpack.c.l.b16 %v173
    %v550 = vunpack.c.h.b16 %v173
    %v551 = vunpack.c.l.b16 %v174
    %v552 = vunpack.c.h.b16 %v174
    %v553 = vunpack.c.l.b16 %v175
    %v554 = vunpack.c.h.b16 %v175
    %v555 = vunpack.c.l.b16 %v176
    %v556 = vunpack.c.h.b16 %v176
    %v557 = vunpack.c.l.b16 %v177
    %v558 = vunpack.c.h.b16 %v177
    %v559 = vunpack.c.l.b16 %v178
    %v560 = vunpack.c.h.b16 %v178
    %v561 = vunpack.c.l.b16 %v179
    %v562 = vunpack.c.h.b16 %v179
    %v563 = vunpack.c.l.b16 %v180
    %v564 = vunpack.c.h.b16 %v180
    %v565 = vunpack.c.l.b16 %v181
    %v566 = vunpack.c.h.b16 %v181
    %v567 = vunpack.c.l.b16 %v182
    %v568 = vunpack.c.h.b16 %v182
    %v569 = vunpack.c.l.b16 %v183
    %v570 = vunpack.c.h.b16 %v183
    %v571 = vunpack.c.l.b16 %v184
    %v572 = vunpack.c.h.b16 %v184
    %v573 = vunpack.c.l.b16 %v185
    %v574 = vunpack.c.h.b16 %v185
    %v575 = vunpack.c.l.b16 %v186
    %v576 = vunpack.c.h.b16 %v186
    %v577 = vunpack.c.l.b16 %v187
    %v578 = vunpack.c.h.b16 %v187
    %v579 = vunpack.c.l.b16 %v188
    %v580 = vunpack.c.h.b16 %v188
    %v581 = vunpack.c.l.b16 %v189
    %v582 = vunpack.c.h.b16 %v189
    %v583 = vunpack.c.l.b16 %v190
    %v584 = vunpack.c.h.b16 %v190
    %v585 = vunpack.c.l.b16 %v191
    %v586 = vunpack.c.h.b16 %v191
    %v587 = vpack.c.b16 %v339, %v331
    %v588 = vpack.c.b16 %v340, %v332
    %v589 = vpack.c.b16 %v341, %v333
    %v590 = vpack.c.b16 %v342, %v334
    %v591 = vpack.c.b16 %v343, %v335
    %v592 = vpack.c.b16 %v344, %v336
    %v593 = vpack.c.b16 %v345, %v337
    %v594 = vpack.c.b16 %v346, %v338
    %v595 = vpack.c.b16 %v355, %v347
    %v596 = vpack.c.b16 %v356, %v348
    %v597 = vpack.c.b16 %v357, %v349
    %v598 = vpack.c.b16 %v358, %v350
    %v599 = vpack.c.b16 %v359, %v351
    %v600 = vpack.c.b16 %v360, %v352
    %v601 = vpack.c.b16 %v361, %v353
    %v602 = vpack.c.b16 %v362, %v354
    %v603 = vpack.c.b16 %v371, %v363
    %v604 = vpack.c.b16 %v372, %v364
    %v605 = vpack.c.b16 %v373, %v365
    %v606 = vpack.c.b16 %v374, %v366
    %v607 = vpack.c.b16 %v375, %v367
    %v608 = vpack.c.b16 %v376, %v368
    %v609 = vpack.c.b16 %v377, %v369
    %v610 = vpack.c.b16 %v378, %v370
    %v611 = vpack.c.b16 %v387, %v379
    %v612 = vpack.c.b16 %v388, %v380
    %v613 = vpack.c.b16 %v389, %v381
    %v614 = vpack.c.b16 %v390, %v382
    %v615 = vpack.c.b16 %v391, %v383
    %v616 = vpack.c.b16 %v392, %v384
    %v617 = vpack.c.b16 %v393, %v385
    %v618 = vpack.c.b16 %v394, %v386
    %v619 = vpack.c.b16 %v403, %v395
    %v620 = vpack.c.b16 %v404, %v396
    %v621 = vpack.c.b16 %v405, %v397
    %v622 = vpack.c.b16 %v406, %v398
    %v623 = vpack.c.b16 %v407, %v399
    %v624 = vpack.c.b16 %v408, %v400
    %v625 = vpack.c.b16 %v409, %v401
    %v626 = vpack.c.b16 %v410, %v402
    %v627 = vpack.c.b16 %v419, %v411
    %v628 = vpack.c.b16 %v420, %v412
    %v629 = vpack.c.b16 %v421, %v413
    %v630 = vpack.c.b16 %v422, %v414
    %v631 = vpack.c.b16 %v423, %v415
    %v632 = vpack.c.b16 %v424, %v416
    %v633 = vpack.c.b16 %v425, %v417
    %v634 = vpack.c.b16 %v426, %v418
    %v635 = vpack.c.b16 %v435, %v427
    %v636 = vpack.c.b16 %v436, %v428
    %v637 = vpack.c.b16 %v437, %v429
    %v638 = vpack.c.b16 %v438, %v430
    %v639 = vpack.c.b16 %v439, %v431
    %v640 = vpack.c.b16 %v440, %v432
    %v641 = vpack.c.b16 %v441, %v433
    %v642 = vpack.c.b16 %v442, %v434
    %v643 = vpack.c.b16 %v451, %v443
    %v644 = vpack.c.b16 %v452, %v444
    %v645 = vpack.c.b16 %v453, %v445
    %v646 = vpack.c.b16 %v454, %v446
    %v647 = vpack.c.b16 %v455, %v447
    %v648 = vpack.c.b16 %v456, %v448
    %v649 = vpack.c.b16 %v457, %v449
    %v650 = vpack.c.b16 %v458, %v450
    %v651 = vpack.c.b16 %v467, %v459
    %v652 = vpack.c.b16 %v468, %v460
    %v653 = vpack.c.b16 %v469, %v461
    %v654 = vpack.c.b16 %v470, %v462
    %v655 = vpack.c.b16 %v471, %v463
    %v656 = vpack.c.b16 %v472, %v464
    %v657 = vpack.c.b16 %v473, %v465
    %v658 = vpack.c.b16 %v474, %v466
    %v659 = vpack.c.b16 %v483, %v475
    %v660 = vpack.c.b16 %v484, %v476
    %v661 = vpack.c.b16 %v485, %v477
    %v662 = vpack.c.b16 %v486, %v478
    %v663 = vpack.c.b16 %v487, %v479
    %v664 = vpack.c.b16 %v488, %v480
    %v665 = vpack.c.b16 %v489, %v481
    %v666 = vpack.c.b16 %v490, %v482
    %v667 = vpack.c.b16 %v499, %v491
    %v668 = vpack.c.b16 %v500, %v492
    %v669 = vpack.c.b16 %v501, %v493
    %v670 = vpack.c.b16 %v502, %v494
    %v671 = vpack.c.b16 %v503, %v495
    %v672 = vpack.c.b16 %v504, %v496
    %v673 = vpack.c.b16 %v505, %v497
    %v674 = vpack.c.b16 %v506, %v498
    %v675 = vpack.c.b16 %v515, %v507
    %v676 = vpack.c.b16 %v516, %v508
    %v677 = vpack.c.b16 %v517, %v509
    %v678 = vpack.c.b16 %v518, %v510
    %v679 = vpack.c.b16 %v519, %v511
    %v680 = vpack.c.b16 %v520, %v512
    %v681 = vpack.c.b16 %v521, %v513
    %v682 = vpack.c.b16 %v522, %v514
    %v683 = vpack.c.b16 %v531, %v523
    %v684 = vpack.c.b16 %v532, %v524
    %v685 = vpack.c.b16 %v533, %v525
    %v686 = vpack.c.b16 %v534, %v526
    %v687 = vpack.c.b16 %v535, %v527
    %v688 = vpack.c.b16 %v536, %v528
    %v689 = vpack.c.b16 %v537, %v529
    %v690 = vpack.c.b16 %v538, %v530
    %v691 = vpack.c.b16 %v547, %v539
    %v692 = vpack.c.b16 %v548, %v540
    %v693 = vpack.c.b16 %v549, %v541
    %v694 = vpack.c.b16 %v550, %v542
    %v695 = vpack.c.b16 %v551, %v543
    %v696 = vpack.c.b16 %v552, %v544
    %v697 = vpack.c.b16 %v553, %v545
    %v698 = vpack.c.b16 %v554, %v546
    %v699 = vpack.c.b16 %v563, %v555
    %v700 = vpack.c.b16 %v564, %v556
    %v701 = vpack.c.b16 %v565, %v557
    %v702 = vpack.c.b16 %v566, %v558
    %v703 = vpack.c.b16 %v567, %v559
    %v704 = vpack.c.b16 %v568, %v560
    %v705 = vpack.c.b16 %v569, %v561
    %v706 = vpack.c.b16 %v570, %v562
    %v707 = vpack.c.b16 %v579, %v571
    %v708 = vpack.c.b16 %v580, %v572
    %v709 = vpack.c.b16 %v581, %v573
    %v710 = vpack.c.b16 %v582, %v574
    %v711 = vpack.c.b16 %v583, %v575
    %v712 = vpack.c.b16 %v584, %v576
    %v713 = vpack.c.b16 %v585, %v577
    %v714 = vpack.c.b16 %v586, %v578
    %843 = vmatprep.subr.bf16.mxu0 %v588
    %844 = vmatpush1.bf16.msra.mxu0 %v587
    %845 = vmatprep.subr.bf16.mxu0 %v596
    %846 = vmatpush1.bf16.msra.mxu0 %v595
    %847 = vmatprep.subr.bf16.mxu0 %v604
    %848 = vmatpush1.bf16.msra.mxu0 %v603
    %849 = vmatprep.subr.bf16.mxu0 %v612
    %850 = vmatpush1.bf16.msra.mxu0 %v611
    %851 = vmatprep.subr.bf16.mxu0 %v620
    %852 = vmatpush1.bf16.msra.mxu0 %v619
    %853 = vmatprep.subr.bf16.mxu0 %v628
    %854 = vmatpush1.bf16.msra.mxu0 %v627
    %855 = vmatprep.subr.bf16.mxu0 %v636
    %856 = vmatpush1.bf16.msra.mxu0 %v635
    %857 = vmatprep.subr.bf16.mxu0 %v644
    %858 = vmatpush1.bf16.msra.mxu0 %v643
    %859 = vmatprep.subr.bf16.mxu0 %v652
    %860 = vmatpush1.bf16.msra.mxu0 %v651
    %861 = vmatprep.subr.bf16.mxu0 %v660
    %862 = vmatpush1.bf16.msra.mxu0 %v659
    %863 = vmatprep.subr.bf16.mxu0 %v668
    %864 = vmatpush1.bf16.msra.mxu0 %v667
    %865 = vmatprep.subr.bf16.mxu0 %v676
    %866 = vmatpush1.bf16.msra.mxu0 %v675
    %867 = vmatprep.subr.bf16.mxu0 %v684
    %868 = vmatpush1.bf16.msra.mxu0 %v683
    %869 = vmatprep.subr.bf16.mxu0 %v692
    %870 = vmatpush1.bf16.msra.mxu0 %v691
    %871 = vmatprep.subr.bf16.mxu0 %v700
    %872 = vmatpush1.bf16.msra.mxu0 %v699
    %873 = vmatprep.subr.bf16.mxu0 %v708
    %874 = vmatpush1.bf16.msra.mxu0 %v707
    %875 = vmatprep.mubr.bf16.mxu0 %v200
    %876 = vmatmul.mubr.bf16.gmra.mrb[0].mxu0 %v199
    %v877 = vpop.f32.mrb[0].mxu0
    %v878 = vadd.f32 0.0, %v877
    %v879 = vpop.f32.mrb[0].mxu0
    %v880 = vadd.f32 0.0, %v879
    %v881 = vpop.f32.mrb[0].mxu0
    %v882 = vpop.f32.mrb[0].mxu0
    %883 = vdwg.mxu0
    %884 = vmatprep.subr.bf16.mxu0 %v590
    %885 = vmatpush1.bf16.msra.mxu0 %v589
    %886 = vmatprep.subr.bf16.mxu0 %v598
    %887 = vmatpush1.bf16.msra.mxu0 %v597
    %888 = vmatprep.subr.bf16.mxu0 %v606
    %889 = vmatpush1.bf16.msra.mxu0 %v605
    %890 = vmatprep.subr.bf16.mxu0 %v614
    %891 = vmatpush1.bf16.msra.mxu0 %v613
    %892 = vmatprep.subr.bf16.mxu0 %v622
    %893 = vmatpush1.bf16.msra.mxu0 %v621
    %894 = vmatprep.subr.bf16.mxu0 %v630
    %895 = vmatpush1.bf16.msra.mxu0 %v629
    %896 = vmatprep.subr.bf16.mxu0 %v638
    %897 = vmatpush1.bf16.msra.mxu0 %v637
    %898 = vmatprep.subr.bf16.mxu0 %v646
    %899 = vmatpush1.bf16.msra.mxu0 %v645
    %900 = vmatprep.subr.bf16.mxu0 %v654
    %901 = vmatpush1.bf16.msra.mxu0 %v653
    %902 = vmatprep.subr.bf16.mxu0 %v662
    %903 = vmatpush1.bf16.msra.mxu0 %v661
    %904 = vmatprep.subr.bf16.mxu0 %v670
    %905 = vmatpush1.bf16.msra.mxu0 %v669
    %906 = vmatprep.subr.bf16.mxu0 %v678
    %907 = vmatpush1.bf16.msra.mxu0 %v677
    %908 = vmatprep.subr.bf16.mxu0 %v686
    %909 = vmatpush1.bf16.msra.mxu0 %v685
    %910 = vmatprep.subr.bf16.mxu0 %v694
    %911 = vmatpush1.bf16.msra.mxu0 %v693
    %912 = vmatprep.subr.bf16.mxu0 %v702
    %913 = vmatpush1.bf16.msra.mxu0 %v701
    %914 = vmatprep.subr.bf16.mxu0 %v710
    %915 = vmatpush1.bf16.msra.mxu0 %v709
    %916 = vmatprep.mubr.bf16.mxu0 %v200
    %917 = vmatmul.mubr.bf16.gmra.mrb[0].mxu0 %v199
    %v918 = vpop.f32.mrb[0].mxu0
    %v919 = vadd.f32 0.0, %v918
    %v920 = vpop.f32.mrb[0].mxu0
    %v921 = vadd.f32 0.0, %v920
    %v922 = vpop.f32.mrb[0].mxu0
    %v923 = vpop.f32.mrb[0].mxu0
    %924 = vdwg.mxu0
    %925 = vmatprep.subr.bf16.mxu0 %v592
    %926 = vmatpush1.bf16.msra.mxu0 %v591
    %927 = vmatprep.subr.bf16.mxu0 %v600
    %928 = vmatpush1.bf16.msra.mxu0 %v599
    %929 = vmatprep.subr.bf16.mxu0 %v608
    %930 = vmatpush1.bf16.msra.mxu0 %v607
    %931 = vmatprep.subr.bf16.mxu0 %v616
    %932 = vmatpush1.bf16.msra.mxu0 %v615
    %933 = vmatprep.subr.bf16.mxu0 %v624
    %934 = vmatpush1.bf16.msra.mxu0 %v623
    %935 = vmatprep.subr.bf16.mxu0 %v632
    %936 = vmatpush1.bf16.msra.mxu0 %v631
    %937 = vmatprep.subr.bf16.mxu0 %v640
    %938 = vmatpush1.bf16.msra.mxu0 %v639
    %939 = vmatprep.subr.bf16.mxu0 %v648
    %940 = vmatpush1.bf16.msra.mxu0 %v647
    %941 = vmatprep.subr.bf16.mxu0 %v656
    %942 = vmatpush1.bf16.msra.mxu0 %v655
    %943 = vmatprep.subr.bf16.mxu0 %v664
    %944 = vmatpush1.bf16.msra.mxu0 %v663
    %945 = vmatprep.subr.bf16.mxu0 %v672
    %946 = vmatpush1.bf16.msra.mxu0 %v671
    %947 = vmatprep.subr.bf16.mxu0 %v680
    %948 = vmatpush1.bf16.msra.mxu0 %v679
    %949 = vmatprep.subr.bf16.mxu0 %v688
    %950 = vmatpush1.bf16.msra.mxu0 %v687
    %951 = vmatprep.subr.bf16.mxu0 %v696
    %952 = vmatpush1.bf16.msra.mxu0 %v695
    %953 = vmatprep.subr.bf16.mxu0 %v704
    %954 = vmatpush1.bf16.msra.mxu0 %v703
    %955 = vmatprep.subr.bf16.mxu0 %v712
    %956 = vmatpush1.bf16.msra.mxu0 %v711
    %957 = vmatprep.mubr.bf16.mxu0 %v200
    %958 = vmatmul.mubr.bf16.gmra.mrb[0].mxu0 %v199
    %v959 = vpop.f32.mrb[0].mxu0
    %v960 = vadd.f32 0.0, %v959
    %v961 = vpop.f32.mrb[0].mxu0
    %v962 = vadd.f32 0.0, %v961
    %v963 = vpop.f32.mrb[0].mxu0
    %v964 = vpop.f32.mrb[0].mxu0
    %965 = vdwg.mxu0
    %966 = vmatprep.subr.bf16.mxu0 %v594
    %967 = vmatpush1.bf16.msra.mxu0 %v593
    %968 = vmatprep.subr.bf16.mxu0 %v602
    %969 = vmatpush1.bf16.msra.mxu0 %v601
    %970 = vmatprep.subr.bf16.mxu0 %v610
    %971 = vmatpush1.bf16.msra.mxu0 %v609
    %972 = vmatprep.subr.bf16.mxu0 %v618
    %973 = vmatpush1.bf16.msra.mxu0 %v617
    %974 = vmatprep.subr.bf16.mxu0 %v626
    %975 = vmatpush1.bf16.msra.mxu0 %v625
    %976 = vmatprep.subr.bf16.mxu0 %v634
    %977 = vmatpush1.bf16.msra.mxu0 %v633
    %978 = vmatprep.subr.bf16.mxu0 %v642
    %979 = vmatpush1.bf16.msra.mxu0 %v641
    %980 = vmatprep.subr.bf16.mxu0 %v650
    %981 = vmatpush1.bf16.msra.mxu0 %v649
    %982 = vmatprep.subr.bf16.mxu0 %v658
    %983 = vmatpush1.bf16.msra.mxu0 %v657
    %984 = vmatprep.subr.bf16.mxu0 %v666
    %985 = vmatpush1.bf16.msra.mxu0 %v665
    %986 = vmatprep.subr.bf16.mxu0 %v674
    %987 = vmatpush1.bf16.msra.mxu0 %v673
    %988 = vmatprep.subr.bf16.mxu0 %v682
    %989 = vmatpush1.bf16.msra.mxu0 %v681
    %990 = vmatprep.subr.bf16.mxu0 %v690
    %991 = vmatpush1.bf16.msra.mxu0 %v689
    %992 = vmatprep.subr.bf16.mxu0 %v698
    %993 = vmatpush1.bf16.msra.mxu0 %v697
    %994 = vmatprep.subr.bf16.mxu0 %v706
    %995 = vmatpush1.bf16.msra.mxu0 %v705
    %996 = vmatprep.subr.bf16.mxu0 %v714
    %997 = vmatpush1.bf16.msra.mxu0 %v713
    %998 = vmatprep.mubr.bf16.mxu0 %v200
    %999 = vmatmul.mubr.bf16.gmra.mrb[0].mxu0 %v199
    %v1000 = vpop.f32.mrb[0].mxu0
    %v1001 = vadd.f32 0.0, %v1000
    %v1002 = vpop.f32.mrb[0].mxu0
    %v1003 = vadd.f32 0.0, %v1002
    %v1004 = vpop.f32.mrb[0].mxu0
    %v1005 = vpop.f32.mrb[0].mxu0
    %1006 = vdwg.mxu0
    %v1007 = vpack.c.bf16 %v878, %v878
    %v1008 = vpack.c.bf16 %v880, %v880
    %v1009 = vpack.c.bf16 %v919, %v919
    %v1010 = vpack.c.bf16 %v921, %v921
    %v1011 = vpack.c.bf16 %v960, %v960
    %v1012 = vpack.c.bf16 %v962, %v962
    %v1013 = vpack.c.bf16 %v1001, %v1001
    %v1014 = vpack.c.bf16 %v1003, %v1003
    %v1023 = vcombine.low %v1007, %v1008
    %v1024 = vcombine.low %v1009, %v1010
    %v1026 = vunpack.c.l.s4 1983009808
    %v1027 = vunpack.c.0.s8 %v1026
    %v1028 = vlaneseq
    %v1029 = vshrl.u32 %v1028, 7
    %v1030 = vsub.s32 %v1027, %v1029
    %v1031 = vrot.slane %v1023, %v1030
    %v1033 = vunpack.c.l.s4 1983009808
    %v1034 = vunpack.c.0.s8 %v1033
    %v1035 = vlaneseq
    %v1036 = vshrl.u32 %v1035, 7
    %v1037 = vsub.s32 %v1034, %v1036
    %v1038 = vrot.slane %v1024, %v1037
    %v1039 = vcombine.low %v1031, %v1038
    %v1040 = vcombine.low %v1011, %v1012
    %v1041 = vcombine.low %v1013, %v1014
    %v1043 = vunpack.c.l.s4 1983009808
    %v1044 = vunpack.c.0.s8 %v1043
    %v1045 = vlaneseq
    %v1046 = vshrl.u32 %v1045, 7
    %v1047 = vsub.s32 %v1044, %v1046
    %v1048 = vrot.slane %v1040, %v1047
    %v1050 = vunpack.c.l.s4 1983009808
    %v1051 = vunpack.c.0.s8 %v1050
    %v1052 = vlaneseq
    %v1053 = vshrl.u32 %v1052, 7
    %v1054 = vsub.s32 %v1051, %v1053
    %v1055 = vrot.slane %v1041, %v1054
    %v1056 = vcombine.low %v1048, %v1055
    %1059 = vst [vmem:[#allocation2 + $0x2] sm:$0xff] %v1039
    %1060 = vst [vmem:[#allocation2 + $0xa] sm:$0xff] %v1056
    %s1061 = scalar_lea.vmem [#allocation4], 4
    %v1062 = vld [vmem:[%s1061] sm:$0xf]
    %v1063 = vld [vmem:[#allocation7] sm:$0xff]
    %v1064 = vld [vmem:[#allocation7 + $0x8] sm:$0xff]
    %v1065 = vld [vmem:[#allocation7 + $0x10] sm:$0xff]
    %v1066 = vld [vmem:[#allocation7 + $0x18] sm:$0xff]
    %v1067 = vld [vmem:[#allocation7 + $0x20] sm:$0xff]
    %v1068 = vld [vmem:[#allocation7 + $0x28] sm:$0xff]
    %v1069 = vld [vmem:[#allocation7 + $0x30] sm:$0xff]
    %v1070 = vld [vmem:[#allocation7 + $0x38] sm:$0xff]
    %v1071 = vld [vmem:[#allocation7 + $0x40] sm:$0xff]
    %v1072 = vld [vmem:[#allocation7 + $0x48] sm:$0xff]
    %v1073 = vld [vmem:[#allocation7 + $0x50] sm:$0xff]
    %v1074 = vld [vmem:[#allocation7 + $0x58] sm:$0xff]
    %v1075 = vld [vmem:[#allocation7 + $0x60] sm:$0xff]
    %v1076 = vld [vmem:[#allocation7 + $0x68] sm:$0xff]
    %v1077 = vld [vmem:[#allocation7 + $0x70] sm:$0xff]
    %v1078 = vld [vmem:[#allocation7 + $0x78] sm:$0xff]
    %v1079 = vld [vmem:[#allocation7 + $0x80] sm:$0xff]
    %v1080 = vld [vmem:[#allocation7 + $0x88] sm:$0xff]
    %v1081 = vld [vmem:[#allocation7 + $0x90] sm:$0xff]
    %v1082 = vld [vmem:[#allocation7 + $0x98] sm:$0xff]
    %v1083 = vld [vmem:[#allocation7 + $0xa0] sm:$0xff]
    %v1084 = vld [vmem:[#allocation7 + $0xa8] sm:$0xff]
    %v1085 = vld [vmem:[#allocation7 + $0xb0] sm:$0xff]
    %v1086 = vld [vmem:[#allocation7 + $0xb8] sm:$0xff]
    %v1087 = vld [vmem:[#allocation7 + $0xc0] sm:$0xff]
    %v1088 = vld [vmem:[#allocation7 + $0xc8] sm:$0xff]
    %v1089 = vld [vmem:[#allocation7 + $0xd0] sm:$0xff]
    %v1090 = vld [vmem:[#allocation7 + $0xd8] sm:$0xff]
    %v1091 = vld [vmem:[#allocation7 + $0xe0] sm:$0xff]
    %v1092 = vld [vmem:[#allocation7 + $0xe8] sm:$0xff]
    %v1093 = vld [vmem:[#allocation7 + $0xf0] sm:$0xff]
    %v1094 = vld [vmem:[#allocation7 + $0xf8] sm:$0xff]
    %v1095 = vld [vmem:[#allocation7 + $0x100] sm:$0xff]
    %v1096 = vld [vmem:[#allocation7 + $0x108] sm:$0xff]
    %v1097 = vld [vmem:[#allocation7 + $0x110] sm:$0xff]
    %v1098 = vld [vmem:[#allocation7 + $0x118] sm:$0xff]
    %v1099 = vld [vmem:[#allocation7 + $0x120] sm:$0xff]
    %v1100 = vld [vmem:[#allocation7 + $0x128] sm:$0xff]
    %v1101 = vld [vmem:[#allocation7 + $0x130] sm:$0xff]
    %v1102 = vld [vmem:[#allocation7 + $0x138] sm:$0xff]
    %v1103 = vld [vmem:[#allocation7 + $0x140] sm:$0xff]
    %v1104 = vld [vmem:[#allocation7 + $0x148] sm:$0xff]
    %v1105 = vld [vmem:[#allocation7 + $0x150] sm:$0xff]
    %v1106 = vld [vmem:[#allocation7 + $0x158] sm:$0xff]
    %v1107 = vld [vmem:[#allocation7 + $0x160] sm:$0xff]
    %v1108 = vld [vmem:[#allocation7 + $0x168] sm:$0xff]
    %v1109 = vld [vmem:[#allocation7 + $0x170] sm:$0xff]
    %v1110 = vld [vmem:[#allocation7 + $0x178] sm:$0xff]
    %v1111 = vld [vmem:[#allocation7 + $0x180] sm:$0xff]
    %v1112 = vld [vmem:[#allocation7 + $0x188] sm:$0xff]
    %v1113 = vld [vmem:[#allocation7 + $0x190] sm:$0xff]
    %v1114 = vld [vmem:[#allocation7 + $0x198] sm:$0xff]
    %v1115 = vld [vmem:[#allocation7 + $0x1a0] sm:$0xff]
    %v1116 = vld [vmem:[#allocation7 + $0x1a8] sm:$0xff]
    %v1117 = vld [vmem:[#allocation7 + $0x1b0] sm:$0xff]
    %v1118 = vld [vmem:[#allocation7 + $0x1b8] sm:$0xff]
    %v1119 = vld [vmem:[#allocation7 + $0x1c0] sm:$0xff]
    %v1120 = vld [vmem:[#allocation7 + $0x1c8] sm:$0xff]
    %v1121 = vld [vmem:[#allocation7 + $0x1d0] sm:$0xff]
    %v1122 = vld [vmem:[#allocation7 + $0x1d8] sm:$0xff]
    %v1123 = vld [vmem:[#allocation7 + $0x1e0] sm:$0xff]
    %v1124 = vld [vmem:[#allocation7 + $0x1e8] sm:$0xff]
    %v1125 = vld [vmem:[#allocation7 + $0x1f0] sm:$0xff]
    %v1126 = vld [vmem:[#allocation7 + $0x1f8] sm:$0xff]
    %v1127 = vld [vmem:[#allocation7 + $0x200] sm:$0xff]
    %v1128 = vld [vmem:[#allocation7 + $0x208] sm:$0xff]
    %v1129 = vld [vmem:[#allocation7 + $0x210] sm:$0xff]
    %v1130 = vld [vmem:[#allocation7 + $0x218] sm:$0xff]
    %v1131 = vld [vmem:[#allocation7 + $0x220] sm:$0xff]
    %v1132 = vld [vmem:[#allocation7 + $0x228] sm:$0xff]
    %v1133 = vld [vmem:[#allocation7 + $0x230] sm:$0xff]
    %v1134 = vld [vmem:[#allocation7 + $0x238] sm:$0xff]
    %v1135 = vld [vmem:[#allocation7 + $0x240] sm:$0xff]
    %v1136 = vld [vmem:[#allocation7 + $0x248] sm:$0xff]
    %v1137 = vld [vmem:[#allocation7 + $0x250] sm:$0xff]
    %v1138 = vld [vmem:[#allocation7 + $0x258] sm:$0xff]
    %v1139 = vld [vmem:[#allocation7 + $0x260] sm:$0xff]
    %v1140 = vld [vmem:[#allocation7 + $0x268] sm:$0xff]
    %v1141 = vld [vmem:[#allocation7 + $0x270] sm:$0xff]
    %v1142 = vld [vmem:[#allocation7 + $0x278] sm:$0xff]
    %v1143 = vld [vmem:[#allocation7 + $0x280] sm:$0xff]
    %v1144 = vld [vmem:[#allocation7 + $0x288] sm:$0xff]
    %v1145 = vld [vmem:[#allocation7 + $0x290] sm:$0xff]
    %v1146 = vld [vmem:[#allocation7 + $0x298] sm:$0xff]
    %v1147 = vld [vmem:[#allocation7 + $0x2a0] sm:$0xff]
    %v1148 = vld [vmem:[#allocation7 + $0x2a8] sm:$0xff]
    %v1149 = vld [vmem:[#allocation7 + $0x2b0] sm:$0xff]
    %v1150 = vld [vmem:[#allocation7 + $0x2b8] sm:$0xff]
    %v1151 = vld [vmem:[#allocation7 + $0x2c0] sm:$0xff]
    %v1152 = vld [vmem:[#allocation7 + $0x2c8] sm:$0xff]
    %v1153 = vld [vmem:[#allocation7 + $0x2d0] sm:$0xff]
    %v1154 = vld [vmem:[#allocation7 + $0x2d8] sm:$0xff]
    %v1155 = vld [vmem:[#allocation7 + $0x2e0] sm:$0xff]
    %v1156 = vld [vmem:[#allocation7 + $0x2e8] sm:$0xff]
    %v1157 = vld [vmem:[#allocation7 + $0x2f0] sm:$0xff]
    %v1158 = vld [vmem:[#allocation7 + $0x2f8] sm:$0xff]
    %v1159 = vld [vmem:[#allocation7 + $0x300] sm:$0xff]
    %v1160 = vld [vmem:[#allocation7 + $0x308] sm:$0xff]
    %v1161 = vld [vmem:[#allocation7 + $0x310] sm:$0xff]
    %v1162 = vld [vmem:[#allocation7 + $0x318] sm:$0xff]
    %v1163 = vld [vmem:[#allocation7 + $0x320] sm:$0xff]
    %v1164 = vld [vmem:[#allocation7 + $0x328] sm:$0xff]
    %v1165 = vld [vmem:[#allocation7 + $0x330] sm:$0xff]
    %v1166 = vld [vmem:[#allocation7 + $0x338] sm:$0xff]
    %v1167 = vld [vmem:[#allocation7 + $0x340] sm:$0xff]
    %v1168 = vld [vmem:[#allocation7 + $0x348] sm:$0xff]
    %v1169 = vld [vmem:[#allocation7 + $0x350] sm:$0xff]
    %v1170 = vld [vmem:[#allocation7 + $0x358] sm:$0xff]
    %v1171 = vld [vmem:[#allocation7 + $0x360] sm:$0xff]
    %v1172 = vld [vmem:[#allocation7 + $0x368] sm:$0xff]
    %v1173 = vld [vmem:[#allocation7 + $0x370] sm:$0xff]
    %v1174 = vld [vmem:[#allocation7 + $0x378] sm:$0xff]
    %v1175 = vld [vmem:[#allocation7 + $0x380] sm:$0xff]
    %v1176 = vld [vmem:[#allocation7 + $0x388] sm:$0xff]
    %v1177 = vld [vmem:[#allocation7 + $0x390] sm:$0xff]
    %v1178 = vld [vmem:[#allocation7 + $0x398] sm:$0xff]
    %v1179 = vld [vmem:[#allocation7 + $0x3a0] sm:$0xff]
    %v1180 = vld [vmem:[#allocation7 + $0x3a8] sm:$0xff]
    %v1181 = vld [vmem:[#allocation7 + $0x3b0] sm:$0xff]
    %v1182 = vld [vmem:[#allocation7 + $0x3b8] sm:$0xff]
    %v1183 = vld [vmem:[#allocation7 + $0x3c0] sm:$0xff]
    %v1184 = vld [vmem:[#allocation7 + $0x3c8] sm:$0xff]
    %v1185 = vld [vmem:[#allocation7 + $0x3d0] sm:$0xff]
    %v1186 = vld [vmem:[#allocation7 + $0x3d8] sm:$0xff]
    %v1187 = vld [vmem:[#allocation7 + $0x3e0] sm:$0xff]
    %v1188 = vld [vmem:[#allocation7 + $0x3e8] sm:$0xff]
    %v1189 = vld [vmem:[#allocation7 + $0x3f0] sm:$0xff]
    %v1190 = vld [vmem:[#allocation7 + $0x3f8] sm:$0xff]
    %v1193 = vunpack.c.l.s4 1983009808
    %v1194 = vunpack.c.0.s8 %v1193
    %v1195 = vlaneseq
    %v1196 = vshrl.u32 %v1195, 7
    %v1197 = vsub.s32 %v1194, %v1196
    %v1198 = vrot.slane %v1062, %v1197
    %v1199 = vcombine.high %v1198, %v1198
    %v1330 = vunpack.c.l.b16 %v1063
    %v1331 = vunpack.c.h.b16 %v1063
    %v1332 = vunpack.c.l.b16 %v1064
    %v1333 = vunpack.c.h.b16 %v1064
    %v1334 = vunpack.c.l.b16 %v1065
    %v1335 = vunpack.c.h.b16 %v1065
    %v1336 = vunpack.c.l.b16 %v1066
    %v1337 = vunpack.c.h.b16 %v1066
    %v1338 = vunpack.c.l.b16 %v1067
    %v1339 = vunpack.c.h.b16 %v1067
    %v1340 = vunpack.c.l.b16 %v1068
    %v1341 = vunpack.c.h.b16 %v1068
    %v1342 = vunpack.c.l.b16 %v1069
    %v1343 = vunpack.c.h.b16 %v1069
    %v1344 = vunpack.c.l.b16 %v1070
    %v1345 = vunpack.c.h.b16 %v1070
    %v1346 = vunpack.c.l.b16 %v1071
    %v1347 = vunpack.c.h.b16 %v1071
    %v1348 = vunpack.c.l.b16 %v1072
    %v1349 = vunpack.c.h.b16 %v1072
    %v1350 = vunpack.c.l.b16 %v1073
    %v1351 = vunpack.c.h.b16 %v1073
    %v1352 = vunpack.c.l.b16 %v1074
    %v1353 = vunpack.c.h.b16 %v1074
    %v1354 = vunpack.c.l.b16 %v1075
    %v1355 = vunpack.c.h.b16 %v1075
    %v1356 = vunpack.c.l.b16 %v1076
    %v1357 = vunpack.c.h.b16 %v1076
    %v1358 = vunpack.c.l.b16 %v1077
    %v1359 = vunpack.c.h.b16 %v1077
    %v1360 = vunpack.c.l.b16 %v1078
    %v1361 = vunpack.c.h.b16 %v1078
    %v1362 = vunpack.c.l.b16 %v1079
    %v1363 = vunpack.c.h.b16 %v1079
    %v1364 = vunpack.c.l.b16 %v1080
    %v1365 = vunpack.c.h.b16 %v1080
    %v1366 = vunpack.c.l.b16 %v1081
    %v1367 = vunpack.c.h.b16 %v1081
    %v1368 = vunpack.c.l.b16 %v1082
    %v1369 = vunpack.c.h.b16 %v1082
    %v1370 = vunpack.c.l.b16 %v1083
    %v1371 = vunpack.c.h.b16 %v1083
    %v1372 = vunpack.c.l.b16 %v1084
    %v1373 = vunpack.c.h.b16 %v1084
    %v1374 = vunpack.c.l.b16 %v1085
    %v1375 = vunpack.c.h.b16 %v1085
    %v1376 = vunpack.c.l.b16 %v1086
    %v1377 = vunpack.c.h.b16 %v1086
    %v1378 = vunpack.c.l.b16 %v1087
    %v1379 = vunpack.c.h.b16 %v1087
    %v1380 = vunpack.c.l.b16 %v1088
    %v1381 = vunpack.c.h.b16 %v1088
    %v1382 = vunpack.c.l.b16 %v1089
    %v1383 = vunpack.c.h.b16 %v1089
    %v1384 = vunpack.c.l.b16 %v1090
    %v1385 = vunpack.c.h.b16 %v1090
    %v1386 = vunpack.c.l.b16 %v1091
    %v1387 = vunpack.c.h.b16 %v1091
    %v1388 = vunpack.c.l.b16 %v1092
    %v1389 = vunpack.c.h.b16 %v1092
    %v1390 = vunpack.c.l.b16 %v1093
    %v1391 = vunpack.c.h.b16 %v1093
    %v1392 = vunpack.c.l.b16 %v1094
    %v1393 = vunpack.c.h.b16 %v1094
    %v1394 = vunpack.c.l.b16 %v1095
    %v1395 = vunpack.c.h.b16 %v1095
    %v1396 = vunpack.c.l.b16 %v1096
    %v1397 = vunpack.c.h.b16 %v1096
    %v1398 = vunpack.c.l.b16 %v1097
    %v1399 = vunpack.c.h.b16 %v1097
    %v1400 = vunpack.c.l.b16 %v1098
    %v1401 = vunpack.c.h.b16 %v1098
    %v1402 = vunpack.c.l.b16 %v1099
    %v1403 = vunpack.c.h.b16 %v1099
    %v1404 = vunpack.c.l.b16 %v1100
    %v1405 = vunpack.c.h.b16 %v1100
    %v1406 = vunpack.c.l.b16 %v1101
    %v1407 = vunpack.c.h.b16 %v1101
    %v1408 = vunpack.c.l.b16 %v1102
    %v1409 = vunpack.c.h.b16 %v1102
    %v1410 = vunpack.c.l.b16 %v1103
    %v1411 = vunpack.c.h.b16 %v1103
    %v1412 = vunpack.c.l.b16 %v1104
    %v1413 = vunpack.c.h.b16 %v1104
    %v1414 = vunpack.c.l.b16 %v1105
    %v1415 = vunpack.c.h.b16 %v1105
    %v1416 = vunpack.c.l.b16 %v1106
    %v1417 = vunpack.c.h.b16 %v1106
    %v1418 = vunpack.c.l.b16 %v1107
    %v1419 = vunpack.c.h.b16 %v1107
    %v1420 = vunpack.c.l.b16 %v1108
    %v1421 = vunpack.c.h.b16 %v1108
    %v1422 = vunpack.c.l.b16 %v1109
    %v1423 = vunpack.c.h.b16 %v1109
    %v1424 = vunpack.c.l.b16 %v1110
    %v1425 = vunpack.c.h.b16 %v1110
    %v1426 = vunpack.c.l.b16 %v1111
    %v1427 = vunpack.c.h.b16 %v1111
    %v1428 = vunpack.c.l.b16 %v1112
    %v1429 = vunpack.c.h.b16 %v1112
    %v1430 = vunpack.c.l.b16 %v1113
    %v1431 = vunpack.c.h.b16 %v1113
    %v1432 = vunpack.c.l.b16 %v1114
    %v1433 = vunpack.c.h.b16 %v1114
    %v1434 = vunpack.c.l.b16 %v1115
    %v1435 = vunpack.c.h.b16 %v1115
    %v1436 = vunpack.c.l.b16 %v1116
    %v1437 = vunpack.c.h.b16 %v1116
    %v1438 = vunpack.c.l.b16 %v1117
    %v1439 = vunpack.c.h.b16 %v1117
    %v1440 = vunpack.c.l.b16 %v1118
    %v1441 = vunpack.c.h.b16 %v1118
    %v1442 = vunpack.c.l.b16 %v1119
    %v1443 = vunpack.c.h.b16 %v1119
    %v1444 = vunpack.c.l.b16 %v1120
    %v1445 = vunpack.c.h.b16 %v1120
    %v1446 = vunpack.c.l.b16 %v1121
    %v1447 = vunpack.c.h.b16 %v1121
    %v1448 = vunpack.c.l.b16 %v1122
    %v1449 = vunpack.c.h.b16 %v1122
    %v1450 = vunpack.c.l.b16 %v1123
    %v1451 = vunpack.c.h.b16 %v1123
    %v1452 = vunpack.c.l.b16 %v1124
    %v1453 = vunpack.c.h.b16 %v1124
    %v1454 = vunpack.c.l.b16 %v1125
    %v1455 = vunpack.c.h.b16 %v1125
    %v1456 = vunpack.c.l.b16 %v1126
    %v1457 = vunpack.c.h.b16 %v1126
    %v1458 = vunpack.c.l.b16 %v1127
    %v1459 = vunpack.c.h.b16 %v1127
    %v1460 = vunpack.c.l.b16 %v1128
    %v1461 = vunpack.c.h.b16 %v1128
    %v1462 = vunpack.c.l.b16 %v1129
    %v1463 = vunpack.c.h.b16 %v1129
    %v1464 = vunpack.c.l.b16 %v1130
    %v1465 = vunpack.c.h.b16 %v1130
    %v1466 = vunpack.c.l.b16 %v1131
    %v1467 = vunpack.c.h.b16 %v1131
    %v1468 = vunpack.c.l.b16 %v1132
    %v1469 = vunpack.c.h.b16 %v1132
    %v1470 = vunpack.c.l.b16 %v1133
    %v1471 = vunpack.c.h.b16 %v1133
    %v1472 = vunpack.c.l.b16 %v1134
    %v1473 = vunpack.c.h.b16 %v1134
    %v1474 = vunpack.c.l.b16 %v1135
    %v1475 = vunpack.c.h.b16 %v1135
    %v1476 = vunpack.c.l.b16 %v1136
    %v1477 = vunpack.c.h.b16 %v1136
    %v1478 = vunpack.c.l.b16 %v1137
    %v1479 = vunpack.c.h.b16 %v1137
    %v1480 = vunpack.c.l.b16 %v1138
    %v1481 = vunpack.c.h.b16 %v1138
    %v1482 = vunpack.c.l.b16 %v1139
    %v1483 = vunpack.c.h.b16 %v1139
    %v1484 = vunpack.c.l.b16 %v1140
    %v1485 = vunpack.c.h.b16 %v1140
    %v1486 = vunpack.c.l.b16 %v1141
    %v1487 = vunpack.c.h.b16 %v1141
    %v1488 = vunpack.c.l.b16 %v1142
    %v1489 = vunpack.c.h.b16 %v1142
    %v1490 = vunpack.c.l.b16 %v1143
    %v1491 = vunpack.c.h.b16 %v1143
    %v1492 = vunpack.c.l.b16 %v1144
    %v1493 = vunpack.c.h.b16 %v1144
    %v1494 = vunpack.c.l.b16 %v1145
    %v1495 = vunpack.c.h.b16 %v1145
    %v1496 = vunpack.c.l.b16 %v1146
    %v1497 = vunpack.c.h.b16 %v1146
    %v1498 = vunpack.c.l.b16 %v1147
    %v1499 = vunpack.c.h.b16 %v1147
    %v1500 = vunpack.c.l.b16 %v1148
    %v1501 = vunpack.c.h.b16 %v1148
    %v1502 = vunpack.c.l.b16 %v1149
    %v1503 = vunpack.c.h.b16 %v1149
    %v1504 = vunpack.c.l.b16 %v1150
    %v1505 = vunpack.c.h.b16 %v1150
    %v1506 = vunpack.c.l.b16 %v1151
    %v1507 = vunpack.c.h.b16 %v1151
    %v1508 = vunpack.c.l.b16 %v1152
    %v1509 = vunpack.c.h.b16 %v1152
    %v1510 = vunpack.c.l.b16 %v1153
    %v1511 = vunpack.c.h.b16 %v1153
    %v1512 = vunpack.c.l.b16 %v1154
    %v1513 = vunpack.c.h.b16 %v1154
    %v1514 = vunpack.c.l.b16 %v1155
    %v1515 = vunpack.c.h.b16 %v1155
    %v1516 = vunpack.c.l.b16 %v1156
    %v1517 = vunpack.c.h.b16 %v1156
    %v1518 = vunpack.c.l.b16 %v1157
    %v1519 = vunpack.c.h.b16 %v1157
    %v1520 = vunpack.c.l.b16 %v1158
    %v1521 = vunpack.c.h.b16 %v1158
    %v1522 = vunpack.c.l.b16 %v1159
    %v1523 = vunpack.c.h.b16 %v1159
    %v1524 = vunpack.c.l.b16 %v1160
    %v1525 = vunpack.c.h.b16 %v1160
    %v1526 = vunpack.c.l.b16 %v1161
    %v1527 = vunpack.c.h.b16 %v1161
    %v1528 = vunpack.c.l.b16 %v1162
    %v1529 = vunpack.c.h.b16 %v1162
    %v1530 = vunpack.c.l.b16 %v1163
    %v1531 = vunpack.c.h.b16 %v1163
    %v1532 = vunpack.c.l.b16 %v1164
    %v1533 = vunpack.c.h.b16 %v1164
    %v1534 = vunpack.c.l.b16 %v1165
    %v1535 = vunpack.c.h.b16 %v1165
    %v1536 = vunpack.c.l.b16 %v1166
    %v1537 = vunpack.c.h.b16 %v1166
    %v1538 = vunpack.c.l.b16 %v1167
    %v1539 = vunpack.c.h.b16 %v1167
    %v1540 = vunpack.c.l.b16 %v1168
    %v1541 = vunpack.c.h.b16 %v1168
    %v1542 = vunpack.c.l.b16 %v1169
    %v1543 = vunpack.c.h.b16 %v1169
    %v1544 = vunpack.c.l.b16 %v1170
    %v1545 = vunpack.c.h.b16 %v1170
    %v1546 = vunpack.c.l.b16 %v1171
    %v1547 = vunpack.c.h.b16 %v1171
    %v1548 = vunpack.c.l.b16 %v1172
    %v1549 = vunpack.c.h.b16 %v1172
    %v1550 = vunpack.c.l.b16 %v1173
    %v1551 = vunpack.c.h.b16 %v1173
    %v1552 = vunpack.c.l.b16 %v1174
    %v1553 = vunpack.c.h.b16 %v1174
    %v1554 = vunpack.c.l.b16 %v1175
    %v1555 = vunpack.c.h.b16 %v1175
    %v1556 = vunpack.c.l.b16 %v1176
    %v1557 = vunpack.c.h.b16 %v1176
    %v1558 = vunpack.c.l.b16 %v1177
    %v1559 = vunpack.c.h.b16 %v1177
    %v1560 = vunpack.c.l.b16 %v1178
    %v1561 = vunpack.c.h.b16 %v1178
    %v1562 = vunpack.c.l.b16 %v1179
    %v1563 = vunpack.c.h.b16 %v1179
    %v1564 = vunpack.c.l.b16 %v1180
    %v1565 = vunpack.c.h.b16 %v1180
    %v1566 = vunpack.c.l.b16 %v1181
    %v1567 = vunpack.c.h.b16 %v1181
    %v1568 = vunpack.c.l.b16 %v1182
    %v1569 = vunpack.c.h.b16 %v1182
    %v1570 = vunpack.c.l.b16 %v1183
    %v1571 = vunpack.c.h.b16 %v1183
    %v1572 = vunpack.c.l.b16 %v1184
    %v1573 = vunpack.c.h.b16 %v1184
    %v1574 = vunpack.c.l.b16 %v1185
    %v1575 = vunpack.c.h.b16 %v1185
    %v1576 = vunpack.c.l.b16 %v1186
    %v1577 = vunpack.c.h.b16 %v1186
    %v1578 = vunpack.c.l.b16 %v1187
    %v1579 = vunpack.c.h.b16 %v1187
    %v1580 = vunpack.c.l.b16 %v1188
    %v1581 = vunpack.c.h.b16 %v1188
    %v1582 = vunpack.c.l.b16 %v1189
    %v1583 = vunpack.c.h.b16 %v1189
    %v1584 = vunpack.c.l.b16 %v1190
    %v1585 = vunpack.c.h.b16 %v1190
    %v1586 = vpack.c.b16 %v1338, %v1330
    %v1587 = vpack.c.b16 %v1339, %v1331
    %v1588 = vpack.c.b16 %v1340, %v1332
    %v1589 = vpack.c.b16 %v1341, %v1333
    %v1590 = vpack.c.b16 %v1342, %v1334
    %v1591 = vpack.c.b16 %v1343, %v1335
    %v1592 = vpack.c.b16 %v1344, %v1336
    %v1593 = vpack.c.b16 %v1345, %v1337
    %v1594 = vpack.c.b16 %v1354, %v1346
    %v1595 = vpack.c.b16 %v1355, %v1347
    %v1596 = vpack.c.b16 %v1356, %v1348
    %v1597 = vpack.c.b16 %v1357, %v1349
    %v1598 = vpack.c.b16 %v1358, %v1350
    %v1599 = vpack.c.b16 %v1359, %v1351
    %v1600 = vpack.c.b16 %v1360, %v1352
    %v1601 = vpack.c.b16 %v1361, %v1353
    %v1602 = vpack.c.b16 %v1370, %v1362
    %v1603 = vpack.c.b16 %v1371, %v1363
    %v1604 = vpack.c.b16 %v1372, %v1364
    %v1605 = vpack.c.b16 %v1373, %v1365
    %v1606 = vpack.c.b16 %v1374, %v1366
    %v1607 = vpack.c.b16 %v1375, %v1367
    %v1608 = vpack.c.b16 %v1376, %v1368
    %v1609 = vpack.c.b16 %v1377, %v1369
    %v1610 = vpack.c.b16 %v1386, %v1378
    %v1611 = vpack.c.b16 %v1387, %v1379
    %v1612 = vpack.c.b16 %v1388, %v1380
    %v1613 = vpack.c.b16 %v1389, %v1381
    %v1614 = vpack.c.b16 %v1390, %v1382
    %v1615 = vpack.c.b16 %v1391, %v1383
    %v1616 = vpack.c.b16 %v1392, %v1384
    %v1617 = vpack.c.b16 %v1393, %v1385
    %v1618 = vpack.c.b16 %v1402, %v1394
    %v1619 = vpack.c.b16 %v1403, %v1395
    %v1620 = vpack.c.b16 %v1404, %v1396
    %v1621 = vpack.c.b16 %v1405, %v1397
    %v1622 = vpack.c.b16 %v1406, %v1398
    %v1623 = vpack.c.b16 %v1407, %v1399
    %v1624 = vpack.c.b16 %v1408, %v1400
    %v1625 = vpack.c.b16 %v1409, %v1401
    %v1626 = vpack.c.b16 %v1418, %v1410
    %v1627 = vpack.c.b16 %v1419, %v1411
    %v1628 = vpack.c.b16 %v1420, %v1412
    %v1629 = vpack.c.b16 %v1421, %v1413
    %v1630 = vpack.c.b16 %v1422, %v1414
    %v1631 = vpack.c.b16 %v1423, %v1415
    %v1632 = vpack.c.b16 %v1424, %v1416
    %v1633 = vpack.c.b16 %v1425, %v1417
    %v1634 = vpack.c.b16 %v1434, %v1426
    %v1635 = vpack.c.b16 %v1435, %v1427
    %v1636 = vpack.c.b16 %v1436, %v1428
    %v1637 = vpack.c.b16 %v1437, %v1429
    %v1638 = vpack.c.b16 %v1438, %v1430
    %v1639 = vpack.c.b16 %v1439, %v1431
    %v1640 = vpack.c.b16 %v1440, %v1432
    %v1641 = vpack.c.b16 %v1441, %v1433
    %v1642 = vpack.c.b16 %v1450, %v1442
    %v1643 = vpack.c.b16 %v1451, %v1443
    %v1644 = vpack.c.b16 %v1452, %v1444
    %v1645 = vpack.c.b16 %v1453, %v1445
    %v1646 = vpack.c.b16 %v1454, %v1446
    %v1647 = vpack.c.b16 %v1455, %v1447
    %v1648 = vpack.c.b16 %v1456, %v1448
    %v1649 = vpack.c.b16 %v1457, %v1449
    %v1650 = vpack.c.b16 %v1466, %v1458
    %v1651 = vpack.c.b16 %v1467, %v1459
    %v1652 = vpack.c.b16 %v1468, %v1460
    %v1653 = vpack.c.b16 %v1469, %v1461
    %v1654 = vpack.c.b16 %v1470, %v1462
    %v1655 = vpack.c.b16 %v1471, %v1463
    %v1656 = vpack.c.b16 %v1472, %v1464
    %v1657 = vpack.c.b16 %v1473, %v1465
    %v1658 = vpack.c.b16 %v1482, %v1474
    %v1659 = vpack.c.b16 %v1483, %v1475
    %v1660 = vpack.c.b16 %v1484, %v1476
    %v1661 = vpack.c.b16 %v1485, %v1477
    %v1662 = vpack.c.b16 %v1486, %v1478
    %v1663 = vpack.c.b16 %v1487, %v1479
    %v1664 = vpack.c.b16 %v1488, %v1480
    %v1665 = vpack.c.b16 %v1489, %v1481
    %v1666 = vpack.c.b16 %v1498, %v1490
    %v1667 = vpack.c.b16 %v1499, %v1491
    %v1668 = vpack.c.b16 %v1500, %v1492
    %v1669 = vpack.c.b16 %v1501, %v1493
    %v1670 = vpack.c.b16 %v1502, %v1494
    %v1671 = vpack.c.b16 %v1503, %v1495
    %v1672 = vpack.c.b16 %v1504, %v1496
    %v1673 = vpack.c.b16 %v1505, %v1497
    %v1674 = vpack.c.b16 %v1514, %v1506
    %v1675 = vpack.c.b16 %v1515, %v1507
    %v1676 = vpack.c.b16 %v1516, %v1508
    %v1677 = vpack.c.b16 %v1517, %v1509
    %v1678 = vpack.c.b16 %v1518, %v1510
    %v1679 = vpack.c.b16 %v1519, %v1511
    %v1680 = vpack.c.b16 %v1520, %v1512
    %v1681 = vpack.c.b16 %v1521, %v1513
    %v1682 = vpack.c.b16 %v1530, %v1522
    %v1683 = vpack.c.b16 %v1531, %v1523
    %v1684 = vpack.c.b16 %v1532, %v1524
    %v1685 = vpack.c.b16 %v1533, %v1525
    %v1686 = vpack.c.b16 %v1534, %v1526
    %v1687 = vpack.c.b16 %v1535, %v1527
    %v1688 = vpack.c.b16 %v1536, %v1528
    %v1689 = vpack.c.b16 %v1537, %v1529
    %v1690 = vpack.c.b16 %v1546, %v1538
    %v1691 = vpack.c.b16 %v1547, %v1539
    %v1692 = vpack.c.b16 %v1548, %v1540
    %v1693 = vpack.c.b16 %v1549, %v1541
    %v1694 = vpack.c.b16 %v1550, %v1542
    %v1695 = vpack.c.b16 %v1551, %v1543
    %v1696 = vpack.c.b16 %v1552, %v1544
    %v1697 = vpack.c.b16 %v1553, %v1545
    %v1698 = vpack.c.b16 %v1562, %v1554
    %v1699 = vpack.c.b16 %v1563, %v1555
    %v1700 = vpack.c.b16 %v1564, %v1556
    %v1701 = vpack.c.b16 %v1565, %v1557
    %v1702 = vpack.c.b16 %v1566, %v1558
    %v1703 = vpack.c.b16 %v1567, %v1559
    %v1704 = vpack.c.b16 %v1568, %v1560
    %v1705 = vpack.c.b16 %v1569, %v1561
    %v1706 = vpack.c.b16 %v1578, %v1570
    %v1707 = vpack.c.b16 %v1579, %v1571
    %v1708 = vpack.c.b16 %v1580, %v1572
    %v1709 = vpack.c.b16 %v1581, %v1573
    %v1710 = vpack.c.b16 %v1582, %v1574
    %v1711 = vpack.c.b16 %v1583, %v1575
    %v1712 = vpack.c.b16 %v1584, %v1576
    %v1713 = vpack.c.b16 %v1585, %v1577
    %1842 = vmatprep.subr.bf16.mxu0 %v1587
    %1843 = vmatpush1.bf16.msra.mxu0 %v1586
    %1844 = vmatprep.subr.bf16.mxu0 %v1595
    %1845 = vmatpush1.bf16.msra.mxu0 %v1594
    %1846 = vmatprep.subr.bf16.mxu0 %v1603
    %1847 = vmatpush1.bf16.msra.mxu0 %v1602
    %1848 = vmatprep.subr.bf16.mxu0 %v1611
    %1849 = vmatpush1.bf16.msra.mxu0 %v1610
    %1850 = vmatprep.subr.bf16.mxu0 %v1619
    %1851 = vmatpush1.bf16.msra.mxu0 %v1618
    %1852 = vmatprep.subr.bf16.mxu0 %v1627
    %1853 = vmatpush1.bf16.msra.mxu0 %v1626
    %1854 = vmatprep.subr.bf16.mxu0 %v1635
    %1855 = vmatpush1.bf16.msra.mxu0 %v1634
    %1856 = vmatprep.subr.bf16.mxu0 %v1643
    %1857 = vmatpush1.bf16.msra.mxu0 %v1642
    %1858 = vmatprep.subr.bf16.mxu0 %v1651
    %1859 = vmatpush1.bf16.msra.mxu0 %v1650
    %1860 = vmatprep.subr.bf16.mxu0 %v1659
    %1861 = vmatpush1.bf16.msra.mxu0 %v1658
    %1862 = vmatprep.subr.bf16.mxu0 %v1667
    %1863 = vmatpush1.bf16.msra.mxu0 %v1666
    %1864 = vmatprep.subr.bf16.mxu0 %v1675
    %1865 = vmatpush1.bf16.msra.mxu0 %v1674
    %1866 = vmatprep.subr.bf16.mxu0 %v1683
    %1867 = vmatpush1.bf16.msra.mxu0 %v1682
    %1868 = vmatprep.subr.bf16.mxu0 %v1691
    %1869 = vmatpush1.bf16.msra.mxu0 %v1690
    %1870 = vmatprep.subr.bf16.mxu0 %v1699
    %1871 = vmatpush1.bf16.msra.mxu0 %v1698
    %1872 = vmatprep.subr.bf16.mxu0 %v1707
    %1873 = vmatpush1.bf16.msra.mxu0 %v1706
    %1874 = vmatprep.mubr.bf16.mxu0 %v1199
    %1875 = vmatmul.mubr.bf16.gmra.mrb[0].mxu0 %v1198
    %v1876 = vpop.f32.mrb[0].mxu0
    %v1877 = vadd.f32 0.0, %v1876
    %v1878 = vpop.f32.mrb[0].mxu0
    %v1879 = vadd.f32 0.0, %v1878
    %v1880 = vpop.f32.mrb[0].mxu0
    %v1881 = vpop.f32.mrb[0].mxu0
    %1882 = vdwg.mxu0
    %1883 = vmatprep.subr.bf16.mxu0 %v1589
    %1884 = vmatpush1.bf16.msra.mxu0 %v1588
    %1885 = vmatprep.subr.bf16.mxu0 %v1597
    %1886 = vmatpush1.bf16.msra.mxu0 %v1596
    %1887 = vmatprep.subr.bf16.mxu0 %v1605
    %1888 = vmatpush1.bf16.msra.mxu0 %v1604
    %1889 = vmatprep.subr.bf16.mxu0 %v1613
    %1890 = vmatpush1.bf16.msra.mxu0 %v1612
    %1891 = vmatprep.subr.bf16.mxu0 %v1621
    %1892 = vmatpush1.bf16.msra.mxu0 %v1620
    %1893 = vmatprep.subr.bf16.mxu0 %v1629
    %1894 = vmatpush1.bf16.msra.mxu0 %v1628
    %1895 = vmatprep.subr.bf16.mxu0 %v1637
    %1896 = vmatpush1.bf16.msra.mxu0 %v1636
    %1897 = vmatprep.subr.bf16.mxu0 %v1645
    %1898 = vmatpush1.bf16.msra.mxu0 %v1644
    %1899 = vmatprep.subr.bf16.mxu0 %v1653
    %1900 = vmatpush1.bf16.msra.mxu0 %v1652
    %1901 = vmatprep.subr.bf16.mxu0 %v1661
    %1902 = vmatpush1.bf16.msra.mxu0 %v1660
    %1903 = vmatprep.subr.bf16.mxu0 %v1669
    %1904 = vmatpush1.bf16.msra.mxu0 %v1668
    %1905 = vmatprep.subr.bf16.mxu0 %v1677
    %1906 = vmatpush1.bf16.msra.mxu0 %v1676
    %1907 = vmatprep.subr.bf16.mxu0 %v1685
    %1908 = vmatpush1.bf16.msra.mxu0 %v1684
    %1909 = vmatprep.subr.bf16.mxu0 %v1693
    %1910 = vmatpush1.bf16.msra.mxu0 %v1692
    %1911 = vmatprep.subr.bf16.mxu0 %v1701
    %1912 = vmatpush1.bf16.msra.mxu0 %v1700
    %1913 = vmatprep.subr.bf16.mxu0 %v1709
    %1914 = vmatpush1.bf16.msra.mxu0 %v1708
    %1915 = vmatprep.mubr.bf16.mxu0 %v1199
    %1916 = vmatmul.mubr.bf16.gmra.mrb[0].mxu0 %v1198
    %v1917 = vpop.f32.mrb[0].mxu0
    %v1918 = vadd.f32 0.0, %v1917
    %v1919 = vpop.f32.mrb[0].mxu0
    %v1920 = vadd.f32 0.0, %v1919
    %v1921 = vpop.f32.mrb[0].mxu0
    %v1922 = vpop.f32.mrb[0].mxu0
    %1923 = vdwg.mxu0
    %1924 = vmatprep.subr.bf16.mxu0 %v1591
    %1925 = vmatpush1.bf16.msra.mxu0 %v1590
    %1926 = vmatprep.subr.bf16.mxu0 %v1599
    %1927 = vmatpush1.bf16.msra.mxu0 %v1598
    %1928 = vmatprep.subr.bf16.mxu0 %v1607
    %1929 = vmatpush1.bf16.msra.mxu0 %v1606
    %1930 = vmatprep.subr.bf16.mxu0 %v1615
    %1931 = vmatpush1.bf16.msra.mxu0 %v1614
    %1932 = vmatprep.subr.bf16.mxu0 %v1623
    %1933 = vmatpush1.bf16.msra.mxu0 %v1622
    %1934 = vmatprep.subr.bf16.mxu0 %v1631
    %1935 = vmatpush1.bf16.msra.mxu0 %v1630
    %1936 = vmatprep.subr.bf16.mxu0 %v1639
    %1937 = vmatpush1.bf16.msra.mxu0 %v1638
    %1938 = vmatprep.subr.bf16.mxu0 %v1647
    %1939 = vmatpush1.bf16.msra.mxu0 %v1646
    %1940 = vmatprep.subr.bf16.mxu0 %v1655
    %1941 = vmatpush1.bf16.msra.mxu0 %v1654
    %1942 = vmatprep.subr.bf16.mxu0 %v1663
    %1943 = vmatpush1.bf16.msra.mxu0 %v1662
    %1944 = vmatprep.subr.bf16.mxu0 %v1671
    %1945 = vmatpush1.bf16.msra.mxu0 %v1670
    %1946 = vmatprep.subr.bf16.mxu0 %v1679
    %1947 = vmatpush1.bf16.msra.mxu0 %v1678
    %1948 = vmatprep.subr.bf16.mxu0 %v1687
    %1949 = vmatpush1.bf16.msra.mxu0 %v1686
    %1950 = vmatprep.subr.bf16.mxu0 %v1695
    %1951 = vmatpush1.bf16.msra.mxu0 %v1694
    %1952 = vmatprep.subr.bf16.mxu0 %v1703
    %1953 = vmatpush1.bf16.msra.mxu0 %v1702
    %1954 = vmatprep.subr.bf16.mxu0 %v1711
    %1955 = vmatpush1.bf16.msra.mxu0 %v1710
    %1956 = vmatprep.mubr.bf16.mxu0 %v1199
    %1957 = vmatmul.mubr.bf16.gmra.mrb[0].mxu0 %v1198
    %v1958 = vpop.f32.mrb[0].mxu0
    %v1959 = vadd.f32 0.0, %v1958
    %v1960 = vpop.f32.mrb[0].mxu0
    %v1961 = vadd.f32 0.0, %v1960
    %v1962 = vpop.f32.mrb[0].mxu0
    %v1963 = vpop.f32.mrb[0].mxu0
    %1964 = vdwg.mxu0
    %1965 = vmatprep.subr.bf16.mxu0 %v1593
    %1966 = vmatpush1.bf16.msra.mxu0 %v1592
    %1967 = vmatprep.subr.bf16.mxu0 %v1601
    %1968 = vmatpush1.bf16.msra.mxu0 %v1600
    %1969 = vmatprep.subr.bf16.mxu0 %v1609
    %1970 = vmatpush1.bf16.msra.mxu0 %v1608
    %1971 = vmatprep.subr.bf16.mxu0 %v1617
    %1972 = vmatpush1.bf16.msra.mxu0 %v1616
    %1973 = vmatprep.subr.bf16.mxu0 %v1625
    %1974 = vmatpush1.bf16.msra.mxu0 %v1624
    %1975 = vmatprep.subr.bf16.mxu0 %v1633
    %1976 = vmatpush1.bf16.msra.mxu0 %v1632
    %1977 = vmatprep.subr.bf16.mxu0 %v1641
    %1978 = vmatpush1.bf16.msra.mxu0 %v1640
    %1979 = vmatprep.subr.bf16.mxu0 %v1649
    %1980 = vmatpush1.bf16.msra.mxu0 %v1648
    %1981 = vmatprep.subr.bf16.mxu0 %v1657
    %1982 = vmatpush1.bf16.msra.mxu0 %v1656
    %1983 = vmatprep.subr.bf16.mxu0 %v1665
    %1984 = vmatpush1.bf16.msra.mxu0 %v1664
    %1985 = vmatprep.subr.bf16.mxu0 %v1673
    %1986 = vmatpush1.bf16.msra.mxu0 %v1672
    %1987 = vmatprep.subr.bf16.mxu0 %v1681
    %1988 = vmatpush1.bf16.msra.mxu0 %v1680
    %1989 = vmatprep.subr.bf16.mxu0 %v1689
    %1990 = vmatpush1.bf16.msra.mxu0 %v1688
    %1991 = vmatprep.subr.bf16.mxu0 %v1697
    %1992 = vmatpush1.bf16.msra.mxu0 %v1696
    %1993 = vmatprep.subr.bf16.mxu0 %v1705
    %1994 = vmatpush1.bf16.msra.mxu0 %v1704
    %1995 = vmatprep.subr.bf16.mxu0 %v1713
    %1996 = vmatpush1.bf16.msra.mxu0 %v1712
    %1997 = vmatprep.mubr.bf16.mxu0 %v1199
    %1998 = vmatmul.mubr.bf16.gmra.mrb[0].mxu0 %v1198
    %v1999 = vpop.f32.mrb[0].mxu0
    %v2000 = vadd.f32 0.0, %v1999
    %v2001 = vpop.f32.mrb[0].mxu0
    %v2002 = vadd.f32 0.0, %v2001
    %v2003 = vpop.f32.mrb[0].mxu0
    %v2004 = vpop.f32.mrb[0].mxu0
    %2005 = vdwg.mxu0
    %v2006 = vpack.c.bf16 %v1877, %v1877
    %v2007 = vpack.c.bf16 %v1879, %v1879
    %v2008 = vpack.c.bf16 %v1918, %v1918
    %v2009 = vpack.c.bf16 %v1920, %v1920
    %v2010 = vpack.c.bf16 %v1959, %v1959
    %v2011 = vpack.c.bf16 %v1961, %v1961
    %v2012 = vpack.c.bf16 %v2000, %v2000
    %v2013 = vpack.c.bf16 %v2002, %v2002
    %v2022 = vcombine.low %v2006, %v2007
    %v2023 = vcombine.low %v2008, %v2009
    %v2025 = vunpack.c.l.s4 1983009808
    %v2026 = vunpack.c.0.s8 %v2025
    %v2027 = vlaneseq
    %v2028 = vshrl.u32 %v2027, 7
    %v2029 = vsub.s32 %v2026, %v2028
    %v2030 = vrot.slane %v2022, %v2029
    %v2032 = vunpack.c.l.s4 1983009808
    %v2033 = vunpack.c.0.s8 %v2032
    %v2034 = vlaneseq
    %v2035 = vshrl.u32 %v2034, 7
    %v2036 = vsub.s32 %v2033, %v2035
    %v2037 = vrot.slane %v2023, %v2036
    %v2038 = vcombine.low %v2030, %v2037
    %v2039 = vcombine.low %v2010, %v2011
    %v2040 = vcombine.low %v2012, %v2013
    %v2042 = vunpack.c.l.s4 1983009808
    %v2043 = vunpack.c.0.s8 %v2042
    %v2044 = vlaneseq
    %v2045 = vshrl.u32 %v2044, 7
    %v2046 = vsub.s32 %v2043, %v2045
    %v2047 = vrot.slane %v2039, %v2046
    %v2049 = vunpack.c.l.s4 1983009808
    %v2050 = vunpack.c.0.s8 %v2049
    %v2051 = vlaneseq
    %v2052 = vshrl.u32 %v2051, 7
    %v2053 = vsub.s32 %v2050, %v2052
    %v2054 = vrot.slane %v2040, %v2053
    %v2055 = vcombine.low %v2047, %v2054
    %2058 = vst [vmem:[#allocation2 + $0x16] sm:$0xff] %v2038
    %2059 = vst [vmem:[#allocation2 + $0x1e] sm:$0xff] %v2055
    %v2060 = vlaneseq
    %v2061 = vand.u32 %v2060, 127
    %v2062 = vadd.s32 %v2061, 128
    %v2063 = vadd.s32 %v2061, 256
    %v2064 = vadd.s32 %v2061, 384
    %v2065 = vadd.s32 %v2061, 512
    %v2066 = vadd.s32 %v2061, 640
    %v2067 = vadd.s32 %v2061, 768
    %v2068 = vadd.s32 %v2061, 896
    %v2069 = vadd.s32 %v2061, 1024
    %v2070 = vadd.s32 %v2061, 1152
    %v2071 = vadd.s32 %v2061, 1280
    %v2072 = vadd.s32 %v2061, 1408
    %v2073 = vadd.s32 %v2061, 1536
    %v2074 = vadd.s32 %v2061, 1664
    %v2075 = vadd.s32 %v2061, 1792
    %v2076 = vadd.s32 %v2061, 1920
    %vm2077 = vcmp.lt.s32.totalorder %v2061, 0
    %v2078 = vsub.s32 0, %v2061
    %v2079 = vsel %vm2077, %v2078, %v2061
    %v2080 = vshrl.u32 %v2079, 5
    %v2081 = vand.u32 %v2079, 31
    %v2082 = vsub.s32 0, %v2081
    %v2083 = vsel %vm2077, %v2082, %v2081
    %vm2084 = vcmp.lt.s32.totalorder %v2062, 0
    %v2085 = vsub.s32 0, %v2062
    %v2086 = vsel %vm2084, %v2085, %v2062
    %v2087 = vshrl.u32 %v2086, 5
    %v2088 = vand.u32 %v2086, 31
    %v2089 = vsub.s32 0, %v2088
    %v2090 = vsel %vm2084, %v2089, %v2088
    %vm2091 = vcmp.lt.s32.totalorder %v2063, 0
    %v2092 = vsub.s32 0, %v2063
    %v2093 = vsel %vm2091, %v2092, %v2063
    %v2094 = vshrl.u32 %v2093, 5
    %v2095 = vand.u32 %v2093, 31
    %v2096 = vsub.s32 0, %v2095
    %v2097 = vsel %vm2091, %v2096, %v2095
    %vm2098 = vcmp.lt.s32.totalorder %v2064, 0
    %v2099 = vsub.s32 0, %v2064
    %v2100 = vsel %vm2098, %v2099, %v2064
    %v2101 = vshrl.u32 %v2100, 5
    %v2102 = vand.u32 %v2100, 31
    %v2103 = vsub.s32 0, %v2102
    %v2104 = vsel %vm2098, %v2103, %v2102
    %vm2105 = vcmp.lt.s32.totalorder %v2065, 0
    %v2106 = vsub.s32 0, %v2065
    %v2107 = vsel %vm2105, %v2106, %v2065
    %v2108 = vshrl.u32 %v2107, 5
    %v2109 = vand.u32 %v2107, 31
    %v2110 = vsub.s32 0, %v2109
    %v2111 = vsel %vm2105, %v2110, %v2109
    %vm2112 = vcmp.lt.s32.totalorder %v2066, 0
    %v2113 = vsub.s32 0, %v2066
    %v2114 = vsel %vm2112, %v2113, %v2066
    %v2115 = vshrl.u32 %v2114, 5
    %v2116 = vand.u32 %v2114, 31
    %v2117 = vsub.s32 0, %v2116
    %v2118 = vsel %vm2112, %v2117, %v2116
    %vm2119 = vcmp.lt.s32.totalorder %v2067, 0
    %v2120 = vsub.s32 0, %v2067
    %v2121 = vsel %vm2119, %v2120, %v2067
    %v2122 = vshrl.u32 %v2121, 5
    %v2123 = vand.u32 %v2121, 31
    %v2124 = vsub.s32 0, %v2123
    %v2125 = vsel %vm2119, %v2124, %v2123
    %vm2126 = vcmp.lt.s32.totalorder %v2068, 0
    %v2127 = vsub.s32 0, %v2068
    %v2128 = vsel %vm2126, %v2127, %v2068
    %v2129 = vshrl.u32 %v2128, 5
    %v2130 = vand.u32 %v2128, 31
    %v2131 = vsub.s32 0, %v2130
    %v2132 = vsel %vm2126, %v2131, %v2130
    %vm2133 = vcmp.lt.s32.totalorder %v2069, 0
    %v2134 = vsub.s32 0, %v2069
    %v2135 = vsel %vm2133, %v2134, %v2069
    %v2136 = vshrl.u32 %v2135, 5
    %v2137 = vand.u32 %v2135, 31
    %v2138 = vsub.s32 0, %v2137
    %v2139 = vsel %vm2133, %v2138, %v2137
    %vm2140 = vcmp.lt.s32.totalorder %v2070, 0
    %v2141 = vsub.s32 0, %v2070
    %v2142 = vsel %vm2140, %v2141, %v2070
    %v2143 = vshrl.u32 %v2142, 5
    %v2144 = vand.u32 %v2142, 31
    %v2145 = vsub.s32 0, %v2144
    %v2146 = vsel %vm2140, %v2145, %v2144
    %vm2147 = vcmp.lt.s32.totalorder %v2071, 0
    %v2148 = vsub.s32 0, %v2071
    %v2149 = vsel %vm2147, %v2148, %v2071
    %v2150 = vshrl.u32 %v2149, 5
    %v2151 = vand.u32 %v2149, 31
    %v2152 = vsub.s32 0, %v2151
    %v2153 = vsel %vm2147, %v2152, %v2151
    %vm2154 = vcmp.lt.s32.totalorder %v2072, 0
    %v2155 = vsub.s32 0, %v2072
    %v2156 = vsel %vm2154, %v2155, %v2072
    %v2157 = vshrl.u32 %v2156, 5
    %v2158 = vand.u32 %v2156, 31
    %v2159 = vsub.s32 0, %v2158
    %v2160 = vsel %vm2154, %v2159, %v2158
    %vm2161 = vcmp.lt.s32.totalorder %v2073, 0
    %v2162 = vsub.s32 0, %v2073
    %v2163 = vsel %vm2161, %v2162, %v2073
    %v2164 = vshrl.u32 %v2163, 5
    %v2165 = vand.u32 %v2163, 31
    %v2166 = vsub.s32 0, %v2165
    %v2167 = vsel %vm2161, %v2166, %v2165
    %vm2168 = vcmp.lt.s32.totalorder %v2074, 0
    %v2169 = vsub.s32 0, %v2074
    %v2170 = vsel %vm2168, %v2169, %v2074
    %v2171 = vshrl.u32 %v2170, 5
    %v2172 = vand.u32 %v2170, 31
    %v2173 = vsub.s32 0, %v2172
    %v2174 = vsel %vm2168, %v2173, %v2172
    %vm2175 = vcmp.lt.s32.totalorder %v2075, 0
    %v2176 = vsub.s32 0, %v2075
    %v2177 = vsel %vm2175, %v2176, %v2075
    %v2178 = vshrl.u32 %v2177, 5
    %v2179 = vand.u32 %v2177, 31
    %v2180 = vsub.s32 0, %v2179
    %v2181 = vsel %vm2175, %v2180, %v2179
    %vm2182 = vcmp.lt.s32.totalorder %v2076, 0
    %v2183 = vsub.s32 0, %v2076
    %v2184 = vsel %vm2182, %v2183, %v2076
    %v2185 = vshrl.u32 %v2184, 5
    %v2186 = vand.u32 %v2184, 31
    %v2187 = vsub.s32 0, %v2186
    %v2188 = vsel %vm2182, %v2187, %v2186
    %vm2189 = vcmp.ne.s32.totalorder %v2083, 0
    %vm2190 = vcmp.ne.s32.totalorder %v2090, 0
    %vm2191 = vcmp.ne.s32.totalorder %v2097, 0
    %vm2192 = vcmp.ne.s32.totalorder %v2104, 0
    %vm2193 = vcmp.ne.s32.totalorder %v2111, 0
    %vm2194 = vcmp.ne.s32.totalorder %v2118, 0
    %vm2195 = vcmp.ne.s32.totalorder %v2125, 0
    %vm2196 = vcmp.ne.s32.totalorder %v2132, 0
    %vm2197 = vcmp.ne.s32.totalorder %v2139, 0
    %vm2198 = vcmp.ne.s32.totalorder %v2146, 0
    %vm2199 = vcmp.ne.s32.totalorder %v2153, 0
    %vm2200 = vcmp.ne.s32.totalorder %v2160, 0
    %vm2201 = vcmp.ne.s32.totalorder %v2167, 0
    %vm2202 = vcmp.ne.s32.totalorder %v2174, 0
    %vm2203 = vcmp.ne.s32.totalorder %v2181, 0
    %vm2204 = vcmp.ne.s32.totalorder %v2188, 0
    %vm2205 = vcmp.lt.s32.totalorder %v2083, 0
    %vm2206 = vcmp.lt.s32.totalorder %v2090, 0
    %vm2207 = vcmp.lt.s32.totalorder %v2097, 0
    %vm2208 = vcmp.lt.s32.totalorder %v2104, 0
    %vm2209 = vcmp.lt.s32.totalorder %v2111, 0
    %vm2210 = vcmp.lt.s32.totalorder %v2118, 0
    %vm2211 = vcmp.lt.s32.totalorder %v2125, 0
    %vm2212 = vcmp.lt.s32.totalorder %v2132, 0
    %vm2213 = vcmp.lt.s32.totalorder %v2139, 0
    %vm2214 = vcmp.lt.s32.totalorder %v2146, 0
    %vm2215 = vcmp.lt.s32.totalorder %v2153, 0
    %vm2216 = vcmp.lt.s32.totalorder %v2160, 0
    %vm2217 = vcmp.lt.s32.totalorder %v2167, 0
    %vm2218 = vcmp.lt.s32.totalorder %v2174, 0
    %vm2219 = vcmp.lt.s32.totalorder %v2181, 0
    %vm2220 = vcmp.lt.s32.totalorder %v2188, 0
    %vm2221 = vmand %vm2205, %vm2189
    %vm2222 = vmand %vm2206, %vm2190
    %vm2223 = vmand %vm2207, %vm2191
    %vm2224 = vmand %vm2208, %vm2192
    %vm2225 = vmand %vm2209, %vm2193
    %vm2226 = vmand %vm2210, %vm2194
    %vm2227 = vmand %vm2211, %vm2195
    %vm2228 = vmand %vm2212, %vm2196
    %vm2229 = vmand %vm2213, %vm2197
    %vm2230 = vmand %vm2214, %vm2198
    %vm2231 = vmand %vm2215, %vm2199
    %vm2232 = vmand %vm2216, %vm2200
    %vm2233 = vmand %vm2217, %vm2201
    %vm2234 = vmand %vm2218, %vm2202
    %vm2235 = vmand %vm2219, %vm2203
    %vm2236 = vmand %vm2220, %vm2204
    %v2237 = vadd.s32 %v2083, 32
    %v2238 = vadd.s32 %v2090, 32
    %v2239 = vadd.s32 %v2097, 32
    %v2240 = vadd.s32 %v2104, 32
    %v2241 = vadd.s32 %v2111, 32
    %v2242 = vadd.s32 %v2118, 32
    %v2243 = vadd.s32 %v2125, 32
    %v2244 = vadd.s32 %v2132, 32
    %v2245 = vadd.s32 %v2139, 32
    %v2246 = vadd.s32 %v2146, 32
    %v2247 = vadd.s32 %v2153, 32
    %v2248 = vadd.s32 %v2160, 32
    %v2249 = vadd.s32 %v2167, 32
    %v2250 = vadd.s32 %v2174, 32
    %v2251 = vadd.s32 %v2181, 32
    %v2252 = vadd.s32 %v2188, 32
    %v2253 = vsel %vm2221, %v2237, %v2083
    %v2254 = vsel %vm2222, %v2238, %v2090
    %v2255 = vsel %vm2223, %v2239, %v2097
    %v2256 = vsel %vm2224, %v2240, %v2104
    %v2257 = vsel %vm2225, %v2241, %v2111
    %v2258 = vsel %vm2226, %v2242, %v2118
    %v2259 = vsel %vm2227, %v2243, %v2125
    %v2260 = vsel %vm2228, %v2244, %v2132
    %v2261 = vsel %vm2229, %v2245, %v2139
    %v2262 = vsel %vm2230, %v2246, %v2146
    %v2263 = vsel %vm2231, %v2247, %v2153
    %v2264 = vsel %vm2232, %v2248, %v2160
    %v2265 = vsel %vm2233, %v2249, %v2167
    %v2266 = vsel %vm2234, %v2250, %v2174
    %v2267 = vsel %vm2235, %v2251, %v2181
    %v2268 = vsel %vm2236, %v2252, %v2188
    %vm2269 = vcmp.ge.s32.totalorder %v2253, 1
    %vm2270 = vcmp.ge.s32.totalorder %v2254, 1
    %vm2271 = vcmp.ge.s32.totalorder %v2255, 1
    %vm2272 = vcmp.ge.s32.totalorder %v2256, 1
    %vm2273 = vcmp.ge.s32.totalorder %v2257, 1
    %vm2274 = vcmp.ge.s32.totalorder %v2258, 1
    %vm2275 = vcmp.ge.s32.totalorder %v2259, 1
    %vm2276 = vcmp.ge.s32.totalorder %v2260, 1
    %vm2277 = vcmp.ge.s32.totalorder %v2261, 1
    %vm2278 = vcmp.ge.s32.totalorder %v2262, 1
    %vm2279 = vcmp.ge.s32.totalorder %v2263, 1
    %vm2280 = vcmp.ge.s32.totalorder %v2264, 1
    %vm2281 = vcmp.ge.s32.totalorder %v2265, 1
    %vm2282 = vcmp.ge.s32.totalorder %v2266, 1
    %vm2283 = vcmp.ge.s32.totalorder %v2267, 1
    %vm2284 = vcmp.ge.s32.totalorder %v2268, 1
    %vm2285 = vcmp.le.s32.totalorder %v2253, 30
    %vm2286 = vcmp.le.s32.totalorder %v2254, 30
    %vm2287 = vcmp.le.s32.totalorder %v2255, 30
    %vm2288 = vcmp.le.s32.totalorder %v2256, 30
    %vm2289 = vcmp.le.s32.totalorder %v2257, 30
    %vm2290 = vcmp.le.s32.totalorder %v2258, 30
    %vm2291 = vcmp.le.s32.totalorder %v2259, 30
    %vm2292 = vcmp.le.s32.totalorder %v2260, 30
    %vm2293 = vcmp.le.s32.totalorder %v2261, 30
    %vm2294 = vcmp.le.s32.totalorder %v2262, 30
    %vm2295 = vcmp.le.s32.totalorder %v2263, 30
    %vm2296 = vcmp.le.s32.totalorder %v2264, 30
    %vm2297 = vcmp.le.s32.totalorder %v2265, 30
    %vm2298 = vcmp.le.s32.totalorder %v2266, 30
    %vm2299 = vcmp.le.s32.totalorder %v2267, 30
    %vm2300 = vcmp.le.s32.totalorder %v2268, 30
    %v2301 = vld [vmem:[%s2] sm:$0x1]
    %v2302 = vld [vmem:[%s3] sm:$0x3]
    %v2303 = vld [vmem:[#allocation2] sm:$0xff]
    %v2304 = vld [vmem:[#allocation2 + $0x8] sm:$0xff]
    %v2305 = vld [vmem:[#allocation2 + $0x10] sm:$0x3]
    %v2306 = vld [vmem:[#allocation2 + $0x14] sm:$0xff]
    %v2307 = vld [vmem:[#allocation2 + $0x1c] sm:$0xff]
    %v2308 = vld [vmem:[#allocation2 + $0x24] sm:$0x3]
    %v2312 = vcombine.high %v2303, %v2303
    %v2314 = vunpack.c.l.s4 1983009808
    %v2315 = vunpack.c.0.s8 %v2314
    %v2316 = vlaneseq
    %v2317 = vshrl.u32 %v2316, 7
    %v2318 = vsub.s32 %v2315, %v2317
    %v2319 = vrot.slane %v2303, %v2318
    %v2321 = vunpack.c.l.s4 1983009808
    %v2322 = vunpack.c.0.s8 %v2321
    %v2323 = vlaneseq
    %v2324 = vshrl.u32 %v2323, 7
    %v2325 = vsub.s32 %v2322, %v2324
    %v2326 = vrot.slane %v2312, %v2325
    %v2327 = vcombine.high %v2319, %v2319
    %v2328 = vcombine.high %v2326, %v2326
    %v2329 = vcombine.high %v2304, %v2304
    %v2331 = vunpack.c.l.s4 1983009808
    %v2332 = vunpack.c.0.s8 %v2331
    %v2333 = vlaneseq
    %v2334 = vshrl.u32 %v2333, 7
    %v2335 = vsub.s32 %v2332, %v2334
    %v2336 = vrot.slane %v2304, %v2335
    %v2338 = vunpack.c.l.s4 1983009808
    %v2339 = vunpack.c.0.s8 %v2338
    %v2340 = vlaneseq
    %v2341 = vshrl.u32 %v2340, 7
    %v2342 = vsub.s32 %v2339, %v2341
    %v2343 = vrot.slane %v2329, %v2342
    %v2344 = vcombine.high %v2336, %v2336
    %v2345 = vcombine.high %v2343, %v2343
    %v2347 = vunpack.c.l.s4 1983009808
    %v2348 = vunpack.c.0.s8 %v2347
    %v2349 = vlaneseq
    %v2350 = vshrl.u32 %v2349, 7
    %v2351 = vsub.s32 %v2348, %v2350
    %v2352 = vrot.slane %v2305, %v2351
    %2353 = vrot.lane.b32.xlu0 %v2319, 33
    %v2354 = vpop.permute.xlu0 %2353
    %2355 = vrot.lane.b32.xlu0 %v2327, 33
    %v2356 = vpop.permute.xlu0 %2355
    %2357 = vrot.lane.b32.xlu0 %v2326, 33
    %v2358 = vpop.permute.xlu0 %2357
    %2359 = vrot.lane.b32.xlu0 %v2328, 33
    %v2360 = vpop.permute.xlu0 %2359
    %2361 = vrot.lane.b32.xlu0 %v2336, 33
    %v2362 = vpop.permute.xlu0 %2361
    %2363 = vrot.lane.b32.xlu0 %v2344, 33
    %v2364 = vpop.permute.xlu0 %2363
    %2365 = vrot.lane.b32.xlu0 %v2343, 33
    %v2366 = vpop.permute.xlu0 %2365
    %2367 = vrot.lane.b32.xlu0 %v2345, 33
    %v2368 = vpop.permute.xlu0 %2367
    %2369 = vrot.lane.b32.xlu0 %v2352, 33
    %v2370 = vpop.permute.xlu0 %2369
    %vm2371 = vcmask 269312
    %v2372 = vsel %vm2371, %v2354, %v2356
    %v2373 = vsel %vm2371, %v2356, %v2358
    %v2374 = vsel %vm2371, %v2358, %v2360
    %v2375 = vsel %vm2371, %v2360, %v2362
    %v2376 = vsel %vm2371, %v2362, %v2364
    %v2377 = vsel %vm2371, %v2364, %v2366
    %v2378 = vsel %vm2371, %v2366, %v2368
    %v2379 = vsel %vm2371, %v2368, %v2370
    %v2391 = vcombine.high %v2306, %v2306
    %v2393 = vunpack.c.l.s4 1983009808
    %v2394 = vunpack.c.0.s8 %v2393
    %v2395 = vlaneseq
    %v2396 = vshrl.u32 %v2395, 7
    %v2397 = vsub.s32 %v2394, %v2396
    %v2398 = vrot.slane %v2306, %v2397
    %v2400 = vunpack.c.l.s4 1983009808
    %v2401 = vunpack.c.0.s8 %v2400
    %v2402 = vlaneseq
    %v2403 = vshrl.u32 %v2402, 7
    %v2404 = vsub.s32 %v2401, %v2403
    %v2405 = vrot.slane %v2391, %v2404
    %v2406 = vcombine.high %v2398, %v2398
    %v2407 = vcombine.high %v2405, %v2405
    %v2408 = vcombine.high %v2307, %v2307
    %v2410 = vunpack.c.l.s4 1983009808
    %v2411 = vunpack.c.0.s8 %v2410
    %v2412 = vlaneseq
    %v2413 = vshrl.u32 %v2412, 7
    %v2414 = vsub.s32 %v2411, %v2413
    %v2415 = vrot.slane %v2307, %v2414
    %v2417 = vunpack.c.l.s4 1983009808
    %v2418 = vunpack.c.0.s8 %v2417
    %v2419 = vlaneseq
    %v2420 = vshrl.u32 %v2419, 7
    %v2421 = vsub.s32 %v2418, %v2420
    %v2422 = vrot.slane %v2408, %v2421
    %v2423 = vcombine.high %v2415, %v2415
    %v2424 = vcombine.high %v2422, %v2422
    %v2426 = vunpack.c.l.s4 1983009808
    %v2427 = vunpack.c.0.s8 %v2426
    %v2428 = vlaneseq
    %v2429 = vshrl.u32 %v2428, 7
    %v2430 = vsub.s32 %v2427, %v2429
    %v2431 = vrot.slane %v2308, %v2430
    %2432 = vrot.lane.b32.xlu0 %v2398, 33
    %v2433 = vpop.permute.xlu0 %2432
    %2434 = vrot.lane.b32.xlu0 %v2406, 33
    %v2435 = vpop.permute.xlu0 %2434
    %2436 = vrot.lane.b32.xlu0 %v2405, 33
    %v2437 = vpop.permute.xlu0 %2436
    %2438 = vrot.lane.b32.xlu0 %v2407, 33
    %v2439 = vpop.permute.xlu0 %2438
    %2440 = vrot.lane.b32.xlu0 %v2415, 33
    %v2441 = vpop.permute.xlu0 %2440
    %2442 = vrot.lane.b32.xlu0 %v2423, 33
    %v2443 = vpop.permute.xlu0 %2442
    %2444 = vrot.lane.b32.xlu0 %v2422, 33
    %v2445 = vpop.permute.xlu0 %2444
    %2446 = vrot.lane.b32.xlu0 %v2424, 33
    %v2447 = vpop.permute.xlu0 %2446
    %2448 = vrot.lane.b32.xlu0 %v2431, 33
    %v2449 = vpop.permute.xlu0 %2448
    %v2450 = vsel %vm2371, %v2433, %v2435
    %v2451 = vsel %vm2371, %v2435, %v2437
    %v2452 = vsel %vm2371, %v2437, %v2439
    %v2453 = vsel %vm2371, %v2439, %v2441
    %v2454 = vsel %vm2371, %v2441, %v2443
    %v2455 = vsel %vm2371, %v2443, %v2445
    %v2456 = vsel %vm2371, %v2445, %v2447
    %v2457 = vsel %vm2371, %v2447, %v2449
    %v2466 = vsel %vm2269, 1, 0
    %v2467 = vsel %vm2270, 1, 0
    %v2468 = vsel %vm2271, 1, 0
    %v2469 = vsel %vm2272, 1, 0
    %v2470 = vsel %vm2273, 1, 0
    %v2471 = vsel %vm2274, 1, 0
    %v2472 = vsel %vm2275, 1, 0
    %v2473 = vsel %vm2276, 1, 0
    %v2474 = vsel %vm2277, 1, 0
    %v2475 = vsel %vm2278, 1, 0
    %v2476 = vsel %vm2279, 1, 0
    %v2477 = vsel %vm2280, 1, 0
    %v2478 = vsel %vm2281, 1, 0
    %v2479 = vsel %vm2282, 1, 0
    %v2480 = vsel %vm2283, 1, 0
    %v2481 = vsel %vm2284, 1, 0
    %vm2482 = vcmp.eq.s32.totalorder %v2466, 1
    %vm2483 = vcmp.eq.s32.totalorder %v2467, 1
    %vm2484 = vcmp.eq.s32.totalorder %v2468, 1
    %vm2485 = vcmp.eq.s32.totalorder %v2469, 1
    %vm2486 = vcmp.eq.s32.totalorder %v2470, 1
    %vm2487 = vcmp.eq.s32.totalorder %v2471, 1
    %vm2488 = vcmp.eq.s32.totalorder %v2472, 1
    %vm2489 = vcmp.eq.s32.totalorder %v2473, 1
    %vm2490 = vcmp.eq.s32.totalorder %v2474, 1
    %vm2491 = vcmp.eq.s32.totalorder %v2475, 1
    %vm2492 = vcmp.eq.s32.totalorder %v2476, 1
    %vm2493 = vcmp.eq.s32.totalorder %v2477, 1
    %vm2494 = vcmp.eq.s32.totalorder %v2478, 1
    %vm2495 = vcmp.eq.s32.totalorder %v2479, 1
    %vm2496 = vcmp.eq.s32.totalorder %v2480, 1
    %vm2497 = vcmp.eq.s32.totalorder %v2481, 1
    %vm2498 = vmpackc.low %vm2483, %vm2482
    %vm2499 = vmpackc.low %vm2485, %vm2484
    %vm2500 = vmpackc.low %vm2487, %vm2486
    %vm2501 = vmpackc.low %vm2489, %vm2488
    %vm2502 = vmpackc.low %vm2491, %vm2490
    %vm2503 = vmpackc.low %vm2493, %vm2492
    %vm2504 = vmpackc.low %vm2495, %vm2494
    %vm2505 = vmpackc.low %vm2497, %vm2496
    %v2506 = vsel %vm2498, 65537, 0
    %v2507 = vsel %vm2499, 65537, 0
    %v2508 = vsel %vm2500, 65537, 0
    %v2509 = vsel %vm2501, 65537, 0
    %v2510 = vsel %vm2502, 65537, 0
    %v2511 = vsel %vm2503, 65537, 0
    %v2512 = vsel %vm2504, 65537, 0
    %v2513 = vsel %vm2505, 65537, 0
    %v2514 = vlaneseq
    %v2515 = vshrl.u32 %v2514, 7
    %v2516 = vsub.s32 0, %v2515
    %v2517 = vrot.slane %v2506, %v2516
    %v2518 = vlaneseq
    %v2519 = vshrl.u32 %v2518, 7
    %v2520 = vsub.s32 4, %v2519
    %v2521 = vrot.slane %v2506, %v2520
    %v2522 = vlaneseq
    %v2523 = vshrl.u32 %v2522, 7
    %v2524 = vsub.s32 0, %v2523
    %v2525 = vrot.slane %v2507, %v2524
    %v2526 = vlaneseq
    %v2527 = vshrl.u32 %v2526, 7
    %v2528 = vsub.s32 4, %v2527
    %v2529 = vrot.slane %v2507, %v2528
    %v2530 = vlaneseq
    %v2531 = vshrl.u32 %v2530, 7
    %v2532 = vsub.s32 0, %v2531
    %v2533 = vrot.slane %v2508, %v2532
    %v2534 = vlaneseq
    %v2535 = vshrl.u32 %v2534, 7
    %v2536 = vsub.s32 4, %v2535
    %v2537 = vrot.slane %v2508, %v2536
    %v2538 = vlaneseq
    %v2539 = vshrl.u32 %v2538, 7
    %v2540 = vsub.s32 0, %v2539
    %v2541 = vrot.slane %v2509, %v2540
    %v2542 = vlaneseq
    %v2543 = vshrl.u32 %v2542, 7
    %v2544 = vsub.s32 4, %v2543
    %v2545 = vrot.slane %v2509, %v2544
    %v2546 = vlaneseq
    %v2547 = vshrl.u32 %v2546, 7
    %v2548 = vsub.s32 0, %v2547
    %v2549 = vrot.slane %v2510, %v2548
    %v2550 = vlaneseq
    %v2551 = vshrl.u32 %v2550, 7
    %v2552 = vsub.s32 4, %v2551
    %v2553 = vrot.slane %v2510, %v2552
    %v2554 = vlaneseq
    %v2555 = vshrl.u32 %v2554, 7
    %v2556 = vsub.s32 0, %v2555
    %v2557 = vrot.slane %v2511, %v2556
    %v2558 = vlaneseq
    %v2559 = vshrl.u32 %v2558, 7
    %v2560 = vsub.s32 4, %v2559
    %v2561 = vrot.slane %v2511, %v2560
    %v2562 = vlaneseq
    %v2563 = vshrl.u32 %v2562, 7
    %v2564 = vsub.s32 0, %v2563
    %v2565 = vrot.slane %v2512, %v2564
    %v2566 = vlaneseq
    %v2567 = vshrl.u32 %v2566, 7
    %v2568 = vsub.s32 4, %v2567
    %v2569 = vrot.slane %v2512, %v2568
    %v2570 = vlaneseq
    %v2571 = vshrl.u32 %v2570, 7
    %v2572 = vsub.s32 0, %v2571
    %v2573 = vrot.slane %v2513, %v2572
    %v2574 = vlaneseq
    %v2575 = vshrl.u32 %v2574, 7
    %v2576 = vsub.s32 4, %v2575
    %v2577 = vrot.slane %v2513, %v2576
    %vm2578 = vcmp.ne.s16.totalorder %v2517, 0
    %vm2579 = vcmp.ne.s16.totalorder %v2521, 0
    %vm2580 = vcmp.ne.s16.totalorder %v2525, 0
    %vm2581 = vcmp.ne.s16.totalorder %v2529, 0
    %vm2582 = vcmp.ne.s16.totalorder %v2533, 0
    %vm2583 = vcmp.ne.s16.totalorder %v2537, 0
    %vm2584 = vcmp.ne.s16.totalorder %v2541, 0
    %vm2585 = vcmp.ne.s16.totalorder %v2545, 0
    %vm2586 = vcmp.ne.s16.totalorder %v2549, 0
    %vm2587 = vcmp.ne.s16.totalorder %v2553, 0
    %vm2588 = vcmp.ne.s16.totalorder %v2557, 0
    %vm2589 = vcmp.ne.s16.totalorder %v2561, 0
    %vm2590 = vcmp.ne.s16.totalorder %v2565, 0
    %vm2591 = vcmp.ne.s16.totalorder %v2569, 0
    %vm2592 = vcmp.ne.s16.totalorder %v2573, 0
    %vm2593 = vcmp.ne.s16.totalorder %v2577, 0
    %v2594 = vsel %vm2578, %v2372, 0
    %v2595 = vsel %vm2579, %v2373, 0
    %v2596 = vsel %vm2580, %v2374, 0
    %v2597 = vsel %vm2581, %v2375, 0
    %v2598 = vsel %vm2582, %v2376, 0
    %v2599 = vsel %vm2583, %v2377, 0
    %v2600 = vsel %vm2584, %v2378, 0
    %v2601 = vsel %vm2585, %v2379, 0
    %v2602 = vsel %vm2586, %v2450, 0
    %v2603 = vsel %vm2587, %v2451, 0
    %v2604 = vsel %vm2588, %v2452, 0
    %v2605 = vsel %vm2589, %v2453, 0
    %v2606 = vsel %vm2590, %v2454, 0
    %v2607 = vsel %vm2591, %v2455, 0
    %v2608 = vsel %vm2592, %v2456, 0
    %v2609 = vsel %vm2593, %v2457, 0
    %2610 = vrot.lane.b32.xlu0 %v2319, 32
    %v2611 = vpop.permute.xlu0 %2610
    %2612 = vrot.lane.b32.xlu0 %v2327, 32
    %v2613 = vpop.permute.xlu0 %2612
    %2614 = vrot.lane.b32.xlu0 %v2326, 32
    %v2615 = vpop.permute.xlu0 %2614
    %2616 = vrot.lane.b32.xlu0 %v2328, 32
    %v2617 = vpop.permute.xlu0 %2616
    %2618 = vrot.lane.b32.xlu0 %v2336, 32
    %v2619 = vpop.permute.xlu0 %2618
    %2620 = vrot.lane.b32.xlu0 %v2344, 32
    %v2621 = vpop.permute.xlu0 %2620
    %2622 = vrot.lane.b32.xlu0 %v2343, 32
    %v2623 = vpop.permute.xlu0 %2622
    %2624 = vrot.lane.b32.xlu0 %v2345, 32
    %v2625 = vpop.permute.xlu0 %2624
    %2626 = vrot.lane.b32.xlu0 %v2352, 32
    %v2627 = vpop.permute.xlu0 %2626
    %vm2628 = vcmask 261120
    %v2629 = vsel %vm2628, %v2611, %v2613
    %v2630 = vsel %vm2628, %v2613, %v2615
    %v2631 = vsel %vm2628, %v2615, %v2617
    %v2632 = vsel %vm2628, %v2617, %v2619
    %v2633 = vsel %vm2628, %v2619, %v2621
    %v2634 = vsel %vm2628, %v2621, %v2623
    %v2635 = vsel %vm2628, %v2623, %v2625
    %v2636 = vsel %vm2628, %v2625, %v2627
    %2637 = vrot.lane.b32.xlu0 %v2398, 32
    %v2638 = vpop.permute.xlu0 %2637
    %2639 = vrot.lane.b32.xlu0 %v2406, 32
    %v2640 = vpop.permute.xlu0 %2639
    %2641 = vrot.lane.b32.xlu0 %v2405, 32
    %v2642 = vpop.permute.xlu0 %2641
    %2643 = vrot.lane.b32.xlu0 %v2407, 32
    %v2644 = vpop.permute.xlu0 %2643
    %2645 = vrot.lane.b32.xlu0 %v2415, 32
    %v2646 = vpop.permute.xlu0 %2645
    %2647 = vrot.lane.b32.xlu0 %v2423, 32
    %v2648 = vpop.permute.xlu0 %2647
    %2649 = vrot.lane.b32.xlu0 %v2422, 32
    %v2650 = vpop.permute.xlu0 %2649
    %2651 = vrot.lane.b32.xlu0 %v2424, 32
    %v2652 = vpop.permute.xlu0 %2651
    %2653 = vrot.lane.b32.xlu0 %v2431, 32
    %v2654 = vpop.permute.xlu0 %2653
    %v2655 = vsel %vm2628, %v2638, %v2640
    %v2656 = vsel %vm2628, %v2640, %v2642
    %v2657 = vsel %vm2628, %v2642, %v2644
    %v2658 = vsel %vm2628, %v2644, %v2646
    %v2659 = vsel %vm2628, %v2646, %v2648
    %v2660 = vsel %vm2628, %v2648, %v2650
    %v2661 = vsel %vm2628, %v2650, %v2652
    %v2662 = vsel %vm2628, %v2652, %v2654
    %2663 = vrot.lane.b32.xlu0 %v2319, 31
    %v2664 = vpop.permute.xlu0 %2663
    %2665 = vrot.lane.b32.xlu0 %v2327, 31
    %v2666 = vpop.permute.xlu0 %2665
    %2667 = vrot.lane.b32.xlu0 %v2326, 31
    %v2668 = vpop.permute.xlu0 %2667
    %2669 = vrot.lane.b32.xlu0 %v2328, 31
    %v2670 = vpop.permute.xlu0 %2669
    %2671 = vrot.lane.b32.xlu0 %v2336, 31
    %v2672 = vpop.permute.xlu0 %2671
    %2673 = vrot.lane.b32.xlu0 %v2344, 31
    %v2674 = vpop.permute.xlu0 %2673
    %2675 = vrot.lane.b32.xlu0 %v2343, 31
    %v2676 = vpop.permute.xlu0 %2675
    %2677 = vrot.lane.b32.xlu0 %v2345, 31
    %v2678 = vpop.permute.xlu0 %2677
    %2679 = vrot.lane.b32.xlu0 %v2352, 31
    %v2680 = vpop.permute.xlu0 %2679
    %vm2681 = vcmask 252928
    %v2682 = vsel %vm2681, %v2664, %v2666
    %v2683 = vsel %vm2681, %v2666, %v2668
    %v2684 = vsel %vm2681, %v2668, %v2670
    %v2685 = vsel %vm2681, %v2670, %v2672
    %v2686 = vsel %vm2681, %v2672, %v2674
    %v2687 = vsel %vm2681, %v2674, %v2676
    %v2688 = vsel %vm2681, %v2676, %v2678
    %v2689 = vsel %vm2681, %v2678, %v2680
    %2698 = vrot.lane.b32.xlu0 %v2398, 31
    %v2699 = vpop.permute.xlu0 %2698
    %2700 = vrot.lane.b32.xlu0 %v2406, 31
    %v2701 = vpop.permute.xlu0 %2700
    %2702 = vrot.lane.b32.xlu0 %v2405, 31
    %v2703 = vpop.permute.xlu0 %2702
    %2704 = vrot.lane.b32.xlu0 %v2407, 31
    %v2705 = vpop.permute.xlu0 %2704
    %2706 = vrot.lane.b32.xlu0 %v2415, 31
    %v2707 = vpop.permute.xlu0 %2706
    %2708 = vrot.lane.b32.xlu0 %v2423, 31
    %v2709 = vpop.permute.xlu0 %2708
    %2710 = vrot.lane.b32.xlu0 %v2422, 31
    %v2711 = vpop.permute.xlu0 %2710
    %2712 = vrot.lane.b32.xlu0 %v2424, 31
    %v2713 = vpop.permute.xlu0 %2712
    %2714 = vrot.lane.b32.xlu0 %v2431, 31
    %v2715 = vpop.permute.xlu0 %2714
    %v2716 = vsel %vm2681, %v2699, %v2701
    %v2717 = vsel %vm2681, %v2701, %v2703
    %v2718 = vsel %vm2681, %v2703, %v2705
    %v2719 = vsel %vm2681, %v2705, %v2707
    %v2720 = vsel %vm2681, %v2707, %v2709
    %v2721 = vsel %vm2681, %v2709, %v2711
    %v2722 = vsel %vm2681, %v2711, %v2713
    %v2723 = vsel %vm2681, %v2713, %v2715
    %v2732 = vsel %vm2285, 1, 0
    %v2733 = vsel %vm2286, 1, 0
    %v2734 = vsel %vm2287, 1, 0
    %v2735 = vsel %vm2288, 1, 0
    %v2736 = vsel %vm2289, 1, 0
    %v2737 = vsel %vm2290, 1, 0
    %v2738 = vsel %vm2291, 1, 0
    %v2739 = vsel %vm2292, 1, 0
    %v2740 = vsel %vm2293, 1, 0
    %v2741 = vsel %vm2294, 1, 0
    %v2742 = vsel %vm2295, 1, 0
    %v2743 = vsel %vm2296, 1, 0
    %v2744 = vsel %vm2297, 1, 0
    %v2745 = vsel %vm2298, 1, 0
    %v2746 = vsel %vm2299, 1, 0
    %v2747 = vsel %vm2300, 1, 0
    %vm2748 = vcmp.eq.s32.totalorder %v2732, 1
    %vm2749 = vcmp.eq.s32.totalorder %v2733, 1
    %vm2750 = vcmp.eq.s32.totalorder %v2734, 1
    %vm2751 = vcmp.eq.s32.totalorder %v2735, 1
    %vm2752 = vcmp.eq.s32.totalorder %v2736, 1
    %vm2753 = vcmp.eq.s32.totalorder %v2737, 1
    %vm2754 = vcmp.eq.s32.totalorder %v2738, 1
    %vm2755 = vcmp.eq.s32.totalorder %v2739, 1
    %vm2756 = vcmp.eq.s32.totalorder %v2740, 1
    %vm2757 = vcmp.eq.s32.totalorder %v2741, 1
    %vm2758 = vcmp.eq.s32.totalorder %v2742, 1
    %vm2759 = vcmp.eq.s32.totalorder %v2743, 1
    %vm2760 = vcmp.eq.s32.totalorder %v2744, 1
    %vm2761 = vcmp.eq.s32.totalorder %v2745, 1
    %vm2762 = vcmp.eq.s32.totalorder %v2746, 1
    %vm2763 = vcmp.eq.s32.totalorder %v2747, 1
    %vm2764 = vmpackc.low %vm2749, %vm2748
    %vm2765 = vmpackc.low %vm2751, %vm2750
    %vm2766 = vmpackc.low %vm2753, %vm2752
    %vm2767 = vmpackc.low %vm2755, %vm2754
    %vm2768 = vmpackc.low %vm2757, %vm2756
    %vm2769 = vmpackc.low %vm2759, %vm2758
    %vm2770 = vmpackc.low %vm2761, %vm2760
    %vm2771 = vmpackc.low %vm2763, %vm2762
    %v2772 = vsel %vm2764, 65537, 0
    %v2773 = vsel %vm2765, 65537, 0
    %v2774 = vsel %vm2766, 65537, 0
    %v2775 = vsel %vm2767, 65537, 0
    %v2776 = vsel %vm2768, 65537, 0
    %v2777 = vsel %vm2769, 65537, 0
    %v2778 = vsel %vm2770, 65537, 0
    %v2779 = vsel %vm2771, 65537, 0
    %v2780 = vlaneseq
    %v2781 = vshrl.u32 %v2780, 7
    %v2782 = vsub.s32 0, %v2781
    %v2783 = vrot.slane %v2772, %v2782
    %v2784 = vlaneseq
    %v2785 = vshrl.u32 %v2784, 7
    %v2786 = vsub.s32 4, %v2785
    %v2787 = vrot.slane %v2772, %v2786
    %v2788 = vlaneseq
    %v2789 = vshrl.u32 %v2788, 7
    %v2790 = vsub.s32 0, %v2789
    %v2791 = vrot.slane %v2773, %v2790
    %v2792 = vlaneseq
    %v2793 = vshrl.u32 %v2792, 7
    %v2794 = vsub.s32 4, %v2793
    %v2795 = vrot.slane %v2773, %v2794
    %v2796 = vlaneseq
    %v2797 = vshrl.u32 %v2796, 7
    %v2798 = vsub.s32 0, %v2797
    %v2799 = vrot.slane %v2774, %v2798
    %v2800 = vlaneseq
    %v2801 = vshrl.u32 %v2800, 7
    %v2802 = vsub.s32 4, %v2801
    %v2803 = vrot.slane %v2774, %v2802
    %v2804 = vlaneseq
    %v2805 = vshrl.u32 %v2804, 7
    %v2806 = vsub.s32 0, %v2805
    %v2807 = vrot.slane %v2775, %v2806
    %v2808 = vlaneseq
    %v2809 = vshrl.u32 %v2808, 7
    %v2810 = vsub.s32 4, %v2809
    %v2811 = vrot.slane %v2775, %v2810
    %v2812 = vlaneseq
    %v2813 = vshrl.u32 %v2812, 7
    %v2814 = vsub.s32 0, %v2813
    %v2815 = vrot.slane %v2776, %v2814
    %v2816 = vlaneseq
    %v2817 = vshrl.u32 %v2816, 7
    %v2818 = vsub.s32 4, %v2817
    %v2819 = vrot.slane %v2776, %v2818
    %v2820 = vlaneseq
    %v2821 = vshrl.u32 %v2820, 7
    %v2822 = vsub.s32 0, %v2821
    %v2823 = vrot.slane %v2777, %v2822
    %v2824 = vlaneseq
    %v2825 = vshrl.u32 %v2824, 7
    %v2826 = vsub.s32 4, %v2825
    %v2827 = vrot.slane %v2777, %v2826
    %v2828 = vlaneseq
    %v2829 = vshrl.u32 %v2828, 7
    %v2830 = vsub.s32 0, %v2829
    %v2831 = vrot.slane %v2778, %v2830
    %v2832 = vlaneseq
    %v2833 = vshrl.u32 %v2832, 7
    %v2834 = vsub.s32 4, %v2833
    %v2835 = vrot.slane %v2778, %v2834
    %v2836 = vlaneseq
    %v2837 = vshrl.u32 %v2836, 7
    %v2838 = vsub.s32 0, %v2837
    %v2839 = vrot.slane %v2779, %v2838
    %v2840 = vlaneseq
    %v2841 = vshrl.u32 %v2840, 7
    %v2842 = vsub.s32 4, %v2841
    %v2843 = vrot.slane %v2779, %v2842
    %vm2844 = vcmp.ne.s16.totalorder %v2783, 0
    %vm2845 = vcmp.ne.s16.totalorder %v2787, 0
    %vm2846 = vcmp.ne.s16.totalorder %v2791, 0
    %vm2847 = vcmp.ne.s16.totalorder %v2795, 0
    %vm2848 = vcmp.ne.s16.totalorder %v2799, 0
    %vm2849 = vcmp.ne.s16.totalorder %v2803, 0
    %vm2850 = vcmp.ne.s16.totalorder %v2807, 0
    %vm2851 = vcmp.ne.s16.totalorder %v2811, 0
    %vm2852 = vcmp.ne.s16.totalorder %v2815, 0
    %vm2853 = vcmp.ne.s16.totalorder %v2819, 0
    %vm2854 = vcmp.ne.s16.totalorder %v2823, 0
    %vm2855 = vcmp.ne.s16.totalorder %v2827, 0
    %vm2856 = vcmp.ne.s16.totalorder %v2831, 0
    %vm2857 = vcmp.ne.s16.totalorder %v2835, 0
    %vm2858 = vcmp.ne.s16.totalorder %v2839, 0
    %vm2859 = vcmp.ne.s16.totalorder %v2843, 0
    %v2860 = vsel %vm2844, %v2682, 0
    %v2861 = vsel %vm2845, %v2683, 0
    %v2862 = vsel %vm2846, %v2684, 0
    %v2863 = vsel %vm2847, %v2685, 0
    %v2864 = vsel %vm2848, %v2686, 0
    %v2865 = vsel %vm2849, %v2687, 0
    %v2866 = vsel %vm2850, %v2688, 0
    %v2867 = vsel %vm2851, %v2689, 0
    %v2868 = vsel %vm2852, %v2716, 0
    %v2869 = vsel %vm2853, %v2717, 0
    %v2870 = vsel %vm2854, %v2718, 0
    %v2871 = vsel %vm2855, %v2719, 0
    %v2872 = vsel %vm2856, %v2720, 0
    %v2873 = vsel %vm2857, %v2721, 0
    %v2874 = vsel %vm2858, %v2722, 0
    %v2875 = vsel %vm2859, %v2723, 0
    %2876 = vrot.lane.b32.xlu0 %v2319, 1
    %v2877 = vpop.permute.xlu0 %2876
    %2878 = vrot.lane.b32.xlu0 %v2327, 1
    %v2879 = vpop.permute.xlu0 %2878
    %2880 = vrot.lane.b32.xlu0 %v2326, 1
    %v2881 = vpop.permute.xlu0 %2880
    %2882 = vrot.lane.b32.xlu0 %v2328, 1
    %v2883 = vpop.permute.xlu0 %2882
    %2884 = vrot.lane.b32.xlu0 %v2336, 1
    %v2885 = vpop.permute.xlu0 %2884
    %2886 = vrot.lane.b32.xlu0 %v2344, 1
    %v2887 = vpop.permute.xlu0 %2886
    %2888 = vrot.lane.b32.xlu0 %v2343, 1
    %v2889 = vpop.permute.xlu0 %2888
    %2890 = vrot.lane.b32.xlu0 %v2345, 1
    %v2891 = vpop.permute.xlu0 %2890
    %2892 = vrot.lane.b32.xlu0 %v2352, 1
    %v2893 = vpop.permute.xlu0 %2892
    %vm2894 = vcmask 7168
    %v2895 = vsel %vm2894, %v2877, %v2879
    %v2896 = vsel %vm2894, %v2879, %v2881
    %v2897 = vsel %vm2894, %v2881, %v2883
    %v2898 = vsel %vm2894, %v2883, %v2885
    %v2899 = vsel %vm2894, %v2885, %v2887
    %v2900 = vsel %vm2894, %v2887, %v2889
    %v2901 = vsel %vm2894, %v2889, %v2891
    %v2902 = vsel %vm2894, %v2891, %v2893
    %2911 = vrot.lane.b32.xlu0 %v2398, 1
    %v2912 = vpop.permute.xlu0 %2911
    %2913 = vrot.lane.b32.xlu0 %v2406, 1
    %v2914 = vpop.permute.xlu0 %2913
    %2915 = vrot.lane.b32.xlu0 %v2405, 1
    %v2916 = vpop.permute.xlu0 %2915
    %2917 = vrot.lane.b32.xlu0 %v2407, 1
    %v2918 = vpop.permute.xlu0 %2917
    %2919 = vrot.lane.b32.xlu0 %v2415, 1
    %v2920 = vpop.permute.xlu0 %2919
    %2921 = vrot.lane.b32.xlu0 %v2423, 1
    %v2922 = vpop.permute.xlu0 %2921
    %2923 = vrot.lane.b32.xlu0 %v2422, 1
    %v2924 = vpop.permute.xlu0 %2923
    %2925 = vrot.lane.b32.xlu0 %v2424, 1
    %v2926 = vpop.permute.xlu0 %2925
    %2927 = vrot.lane.b32.xlu0 %v2431, 1
    %v2928 = vpop.permute.xlu0 %2927
    %v2929 = vsel %vm2894, %v2912, %v2914
    %v2930 = vsel %vm2894, %v2914, %v2916
    %v2931 = vsel %vm2894, %v2916, %v2918
    %v2932 = vsel %vm2894, %v2918, %v2920
    %v2933 = vsel %vm2894, %v2920, %v2922
    %v2934 = vsel %vm2894, %v2922, %v2924
    %v2935 = vsel %vm2894, %v2924, %v2926
    %v2936 = vsel %vm2894, %v2926, %v2928
    %v2945 = vsel %vm2578, %v2895, 0
    %v2946 = vsel %vm2579, %v2896, 0
    %v2947 = vsel %vm2580, %v2897, 0
    %v2948 = vsel %vm2581, %v2898, 0
    %v2949 = vsel %vm2582, %v2899, 0
    %v2950 = vsel %vm2583, %v2900, 0
    %v2951 = vsel %vm2584, %v2901, 0
    %v2952 = vsel %vm2585, %v2902, 0
    %v2953 = vsel %vm2586, %v2929, 0
    %v2954 = vsel %vm2587, %v2930, 0
    %v2955 = vsel %vm2588, %v2931, 0
    %v2956 = vsel %vm2589, %v2932, 0
    %v2957 = vsel %vm2590, %v2933, 0
    %v2958 = vsel %vm2591, %v2934, 0
    %v2959 = vsel %vm2592, %v2935, 0
    %v2960 = vsel %vm2593, %v2936, 0
    %v2961 = vld [vmem:[#allocation2 + $0x2] sm:$0xff]
    %v2962 = vld [vmem:[#allocation2 + $0xa] sm:$0xff]
    %v2963 = vld [vmem:[#allocation2 + $0x16] sm:$0xff]
    %v2964 = vld [vmem:[#allocation2 + $0x1e] sm:$0xff]
    %v2967 = vcombine.high %v2961, %v2961
    %v2969 = vunpack.c.l.s4 1983009808
    %v2970 = vunpack.c.0.s8 %v2969
    %v2971 = vlaneseq
    %v2972 = vshrl.u32 %v2971, 7
    %v2973 = vsub.s32 %v2970, %v2972
    %v2974 = vrot.slane %v2961, %v2973
    %v2976 = vunpack.c.l.s4 1983009808
    %v2977 = vunpack.c.0.s8 %v2976
    %v2978 = vlaneseq
    %v2979 = vshrl.u32 %v2978, 7
    %v2980 = vsub.s32 %v2977, %v2979
    %v2981 = vrot.slane %v2967, %v2980
    %v2982 = vcombine.high %v2974, %v2974
    %v2983 = vcombine.high %v2981, %v2981
    %v2984 = vcombine.high %v2962, %v2962
    %v2986 = vunpack.c.l.s4 1983009808
    %v2987 = vunpack.c.0.s8 %v2986
    %v2988 = vlaneseq
    %v2989 = vshrl.u32 %v2988, 7
    %v2990 = vsub.s32 %v2987, %v2989
    %v2991 = vrot.slane %v2962, %v2990
    %v2993 = vunpack.c.l.s4 1983009808
    %v2994 = vunpack.c.0.s8 %v2993
    %v2995 = vlaneseq
    %v2996 = vshrl.u32 %v2995, 7
    %v2997 = vsub.s32 %v2994, %v2996
    %v2998 = vrot.slane %v2984, %v2997
    %v2999 = vcombine.high %v2991, %v2991
    %v3000 = vcombine.high %v2998, %v2998
    %v3003 = vcombine.high %v2963, %v2963
    %v3005 = vunpack.c.l.s4 1983009808
    %v3006 = vunpack.c.0.s8 %v3005
    %v3007 = vlaneseq
    %v3008 = vshrl.u32 %v3007, 7
    %v3009 = vsub.s32 %v3006, %v3008
    %v3010 = vrot.slane %v2963, %v3009
    %v3012 = vunpack.c.l.s4 1983009808
    %v3013 = vunpack.c.0.s8 %v3012
    %v3014 = vlaneseq
    %v3015 = vshrl.u32 %v3014, 7
    %v3016 = vsub.s32 %v3013, %v3015
    %v3017 = vrot.slane %v3003, %v3016
    %v3018 = vcombine.high %v3010, %v3010
    %v3019 = vcombine.high %v3017, %v3017
    %v3020 = vcombine.high %v2964, %v2964
    %v3022 = vunpack.c.l.s4 1983009808
    %v3023 = vunpack.c.0.s8 %v3022
    %v3024 = vlaneseq
    %v3025 = vshrl.u32 %v3024, 7
    %v3026 = vsub.s32 %v3023, %v3025
    %v3027 = vrot.slane %v2964, %v3026
    %v3029 = vunpack.c.l.s4 1983009808
    %v3030 = vunpack.c.0.s8 %v3029
    %v3031 = vlaneseq
    %v3032 = vshrl.u32 %v3031, 7
    %v3033 = vsub.s32 %v3030, %v3032
    %v3034 = vrot.slane %v3020, %v3033
    %v3035 = vcombine.high %v3027, %v3027
    %v3036 = vcombine.high %v3034, %v3034
    %v3037 = vld [vmem:[#allocation2 + $0x12] sm:$0x3]
    %v3038 = vld [vmem:[#allocation2 + $0x16] sm:$0xff]
    %v3039 = vld [vmem:[#allocation2 + $0x1e] sm:$0xff]
    %v3040 = vld [vmem:[#allocation2 + $0x26] sm:$0x3]
    %v3043 = vunpack.c.l.s4 1983009808
    %v3044 = vunpack.c.0.s8 %v3043
    %v3045 = vlaneseq
    %v3046 = vshrl.u32 %v3045, 7
    %v3047 = vsub.s32 %v3044, %v3046
    %v3048 = vrot.slane %v3037, %v3047
    %3049 = vrot.lane.b32.xlu0 %v2974, 127
    %v3050 = vpop.permute.xlu0 %3049
    %3051 = vrot.lane.b32.xlu0 %v2982, 127
    %v3052 = vpop.permute.xlu0 %3051
    %3053 = vrot.lane.b32.xlu0 %v2981, 127
    %v3054 = vpop.permute.xlu0 %3053
    %3055 = vrot.lane.b32.xlu0 %v2983, 127
    %v3056 = vpop.permute.xlu0 %3055
    %3057 = vrot.lane.b32.xlu0 %v2991, 127
    %v3058 = vpop.permute.xlu0 %3057
    %3059 = vrot.lane.b32.xlu0 %v2999, 127
    %v3060 = vpop.permute.xlu0 %3059
    %3061 = vrot.lane.b32.xlu0 %v2998, 127
    %v3062 = vpop.permute.xlu0 %3061
    %3063 = vrot.lane.b32.xlu0 %v3000, 127
    %v3064 = vpop.permute.xlu0 %3063
    %3065 = vrot.lane.b32.xlu0 %v3048, 127
    %v3066 = vpop.permute.xlu0 %3065
    %vm3067 = vcmask 1039360
    %v3068 = vsel %vm3067, %v3050, %v3052
    %v3069 = vsel %vm3067, %v3052, %v3054
    %v3070 = vsel %vm3067, %v3054, %v3056
    %v3071 = vsel %vm3067, %v3056, %v3058
    %v3072 = vsel %vm3067, %v3058, %v3060
    %v3073 = vsel %vm3067, %v3060, %v3062
    %v3074 = vsel %vm3067, %v3062, %v3064
    %v3075 = vsel %vm3067, %v3064, %v3066
    %v3087 = vcombine.high %v3038, %v3038
    %v3089 = vunpack.c.l.s4 1983009808
    %v3090 = vunpack.c.0.s8 %v3089
    %v3091 = vlaneseq
    %v3092 = vshrl.u32 %v3091, 7
    %v3093 = vsub.s32 %v3090, %v3092
    %v3094 = vrot.slane %v3038, %v3093
    %v3096 = vunpack.c.l.s4 1983009808
    %v3097 = vunpack.c.0.s8 %v3096
    %v3098 = vlaneseq
    %v3099 = vshrl.u32 %v3098, 7
    %v3100 = vsub.s32 %v3097, %v3099
    %v3101 = vrot.slane %v3087, %v3100
    %v3102 = vcombine.high %v3094, %v3094
    %v3103 = vcombine.high %v3101, %v3101
    %v3104 = vcombine.high %v3039, %v3039
    %v3106 = vunpack.c.l.s4 1983009808
    %v3107 = vunpack.c.0.s8 %v3106
    %v3108 = vlaneseq
    %v3109 = vshrl.u32 %v3108, 7
    %v3110 = vsub.s32 %v3107, %v3109
    %v3111 = vrot.slane %v3039, %v3110
    %v3113 = vunpack.c.l.s4 1983009808
    %v3114 = vunpack.c.0.s8 %v3113
    %v3115 = vlaneseq
    %v3116 = vshrl.u32 %v3115, 7
    %v3117 = vsub.s32 %v3114, %v3116
    %v3118 = vrot.slane %v3104, %v3117
    %v3119 = vcombine.high %v3111, %v3111
    %v3120 = vcombine.high %v3118, %v3118
    %v3122 = vunpack.c.l.s4 1983009808
    %v3123 = vunpack.c.0.s8 %v3122
    %v3124 = vlaneseq
    %v3125 = vshrl.u32 %v3124, 7
    %v3126 = vsub.s32 %v3123, %v3125
    %v3127 = vrot.slane %v3040, %v3126
    %3128 = vrot.lane.b32.xlu0 %v3094, 127
    %v3129 = vpop.permute.xlu0 %3128
    %3130 = vrot.lane.b32.xlu0 %v3102, 127
    %v3131 = vpop.permute.xlu0 %3130
    %3132 = vrot.lane.b32.xlu0 %v3101, 127
    %v3133 = vpop.permute.xlu0 %3132
    %3134 = vrot.lane.b32.xlu0 %v3103, 127
    %v3135 = vpop.permute.xlu0 %3134
    %3136 = vrot.lane.b32.xlu0 %v3111, 127
    %v3137 = vpop.permute.xlu0 %3136
    %3138 = vrot.lane.b32.xlu0 %v3119, 127
    %v3139 = vpop.permute.xlu0 %3138
    %3140 = vrot.lane.b32.xlu0 %v3118, 127
    %v3141 = vpop.permute.xlu0 %3140
    %3142 = vrot.lane.b32.xlu0 %v3120, 127
    %v3143 = vpop.permute.xlu0 %3142
    %3144 = vrot.lane.b32.xlu0 %v3127, 127
    %v3145 = vpop.permute.xlu0 %3144
    %v3146 = vsel %vm3067, %v3129, %v3131
    %v3147 = vsel %vm3067, %v3131, %v3133
    %v3148 = vsel %vm3067, %v3133, %v3135
    %v3149 = vsel %vm3067, %v3135, %v3137
    %v3150 = vsel %vm3067, %v3137, %v3139
    %v3151 = vsel %vm3067, %v3139, %v3141
    %v3152 = vsel %vm3067, %v3141, %v3143
    %v3153 = vsel %vm3067, %v3143, %v3145
    %v3162 = vsel %vm2844, %v3068, 0
    %v3163 = vsel %vm2845, %v3069, 0
    %v3164 = vsel %vm2846, %v3070, 0
    %v3165 = vsel %vm2847, %v3071, 0
    %v3166 = vsel %vm2848, %v3072, 0
    %v3167 = vsel %vm2849, %v3073, 0
    %v3168 = vsel %vm2850, %v3074, 0
    %v3169 = vsel %vm2851, %v3075, 0
    %v3170 = vsel %vm2852, %v3146, 0
    %v3171 = vsel %vm2853, %v3147, 0
    %v3172 = vsel %vm2854, %v3148, 0
    %v3173 = vsel %vm2855, %v3149, 0
    %v3174 = vsel %vm2856, %v3150, 0
    %v3175 = vsel %vm2857, %v3151, 0
    %v3176 = vsel %vm2858, %v3152, 0
    %v3177 = vsel %vm2859, %v3153, 0
    %3178 = vrot.lane.b32.xlu0 %v2974, 97
    %v3179 = vpop.permute.xlu0 %3178
    %3180 = vrot.lane.b32.xlu0 %v2982, 97
    %v3181 = vpop.permute.xlu0 %3180
    %3182 = vrot.lane.b32.xlu0 %v2981, 97
    %v3183 = vpop.permute.xlu0 %3182
    %3184 = vrot.lane.b32.xlu0 %v2983, 97
    %v3185 = vpop.permute.xlu0 %3184
    %3186 = vrot.lane.b32.xlu0 %v2991, 97
    %v3187 = vpop.permute.xlu0 %3186
    %3188 = vrot.lane.b32.xlu0 %v2999, 97
    %v3189 = vpop.permute.xlu0 %3188
    %3190 = vrot.lane.b32.xlu0 %v2998, 97
    %v3191 = vpop.permute.xlu0 %3190
    %3192 = vrot.lane.b32.xlu0 %v3000, 97
    %v3193 = vpop.permute.xlu0 %3192
    %3194 = vrot.lane.b32.xlu0 %v3048, 97
    %v3195 = vpop.permute.xlu0 %3194
    %vm3196 = vcmask 793600
    %v3197 = vsel %vm3196, %v3179, %v3181
    %v3198 = vsel %vm3196, %v3181, %v3183
    %v3199 = vsel %vm3196, %v3183, %v3185
    %v3200 = vsel %vm3196, %v3185, %v3187
    %v3201 = vsel %vm3196, %v3187, %v3189
    %v3202 = vsel %vm3196, %v3189, %v3191
    %v3203 = vsel %vm3196, %v3191, %v3193
    %v3204 = vsel %vm3196, %v3193, %v3195
    %3213 = vrot.lane.b32.xlu0 %v3094, 97
    %v3214 = vpop.permute.xlu0 %3213
    %3215 = vrot.lane.b32.xlu0 %v3102, 97
    %v3216 = vpop.permute.xlu0 %3215
    %3217 = vrot.lane.b32.xlu0 %v3101, 97
    %v3218 = vpop.permute.xlu0 %3217
    %3219 = vrot.lane.b32.xlu0 %v3103, 97
    %v3220 = vpop.permute.xlu0 %3219
    %3221 = vrot.lane.b32.xlu0 %v3111, 97
    %v3222 = vpop.permute.xlu0 %3221
    %3223 = vrot.lane.b32.xlu0 %v3119, 97
    %v3224 = vpop.permute.xlu0 %3223
    %3225 = vrot.lane.b32.xlu0 %v3118, 97
    %v3226 = vpop.permute.xlu0 %3225
    %3227 = vrot.lane.b32.xlu0 %v3120, 97
    %v3228 = vpop.permute.xlu0 %3227
    %3229 = vrot.lane.b32.xlu0 %v3127, 97
    %v3230 = vpop.permute.xlu0 %3229
    %v3231 = vsel %vm3196, %v3214, %v3216
    %v3232 = vsel %vm3196, %v3216, %v3218
    %v3233 = vsel %vm3196, %v3218, %v3220
    %v3234 = vsel %vm3196, %v3220, %v3222
    %v3235 = vsel %vm3196, %v3222, %v3224
    %v3236 = vsel %vm3196, %v3224, %v3226
    %v3237 = vsel %vm3196, %v3226, %v3228
    %v3238 = vsel %vm3196, %v3228, %v3230
    %v3247 = vsel %vm2578, %v3197, 0
    %v3248 = vsel %vm2579, %v3198, 0
    %v3249 = vsel %vm2580, %v3199, 0
    %v3250 = vsel %vm2581, %v3200, 0
    %v3251 = vsel %vm2582, %v3201, 0
    %v3252 = vsel %vm2583, %v3202, 0
    %v3253 = vsel %vm2584, %v3203, 0
    %v3254 = vsel %vm2585, %v3204, 0
    %v3255 = vsel %vm2586, %v3231, 0
    %v3256 = vsel %vm2587, %v3232, 0
    %v3257 = vsel %vm2588, %v3233, 0
    %v3258 = vsel %vm2589, %v3234, 0
    %v3259 = vsel %vm2590, %v3235, 0
    %v3260 = vsel %vm2591, %v3236, 0
    %v3261 = vsel %vm2592, %v3237, 0
    %v3262 = vsel %vm2593, %v3238, 0
    %3263 = vrot.lane.b32.xlu0 %v2974, 96
    %v3264 = vpop.permute.xlu0 %3263
    %3265 = vrot.lane.b32.xlu0 %v2982, 96
    %v3266 = vpop.permute.xlu0 %3265
    %3267 = vrot.lane.b32.xlu0 %v2981, 96
    %v3268 = vpop.permute.xlu0 %3267
    %3269 = vrot.lane.b32.xlu0 %v2983, 96
    %v3270 = vpop.permute.xlu0 %3269
    %3271 = vrot.lane.b32.xlu0 %v2991, 96
    %v3272 = vpop.permute.xlu0 %3271
    %3273 = vrot.lane.b32.xlu0 %v2999, 96
    %v3274 = vpop.permute.xlu0 %3273
    %3275 = vrot.lane.b32.xlu0 %v2998, 96
    %v3276 = vpop.permute.xlu0 %3275
    %3277 = vrot.lane.b32.xlu0 %v3000, 96
    %v3278 = vpop.permute.xlu0 %3277
    %3279 = vrot.lane.b32.xlu0 %v3048, 96
    %v3280 = vpop.permute.xlu0 %3279
    %vm3281 = vcmask 785408
    %v3282 = vsel %vm3281, %v3264, %v3266
    %v3283 = vsel %vm3281, %v3266, %v3268
    %v3284 = vsel %vm3281, %v3268, %v3270
    %v3285 = vsel %vm3281, %v3270, %v3272
    %v3286 = vsel %vm3281, %v3272, %v3274
    %v3287 = vsel %vm3281, %v3274, %v3276
    %v3288 = vsel %vm3281, %v3276, %v3278
    %v3289 = vsel %vm3281, %v3278, %v3280
    %3290 = vrot.lane.b32.xlu0 %v3094, 96
    %v3291 = vpop.permute.xlu0 %3290
    %3292 = vrot.lane.b32.xlu0 %v3102, 96
    %v3293 = vpop.permute.xlu0 %3292
    %3294 = vrot.lane.b32.xlu0 %v3101, 96
    %v3295 = vpop.permute.xlu0 %3294
    %3296 = vrot.lane.b32.xlu0 %v3103, 96
    %v3297 = vpop.permute.xlu0 %3296
    %3298 = vrot.lane.b32.xlu0 %v3111, 96
    %v3299 = vpop.permute.xlu0 %3298
    %3300 = vrot.lane.b32.xlu0 %v3119, 96
    %v3301 = vpop.permute.xlu0 %3300
    %3302 = vrot.lane.b32.xlu0 %v3118, 96
    %v3303 = vpop.permute.xlu0 %3302
    %3304 = vrot.lane.b32.xlu0 %v3120, 96
    %v3305 = vpop.permute.xlu0 %3304
    %3306 = vrot.lane.b32.xlu0 %v3127, 96
    %v3307 = vpop.permute.xlu0 %3306
    %v3308 = vsel %vm3281, %v3291, %v3293
    %v3309 = vsel %vm3281, %v3293, %v3295
    %v3310 = vsel %vm3281, %v3295, %v3297
    %v3311 = vsel %vm3281, %v3297, %v3299
    %v3312 = vsel %vm3281, %v3299, %v3301
    %v3313 = vsel %vm3281, %v3301, %v3303
    %v3314 = vsel %vm3281, %v3303, %v3305
    %v3315 = vsel %vm3281, %v3305, %v3307
    %3316 = vrot.lane.b32.xlu0 %v2974, 95
    %v3317 = vpop.permute.xlu0 %3316
    %3318 = vrot.lane.b32.xlu0 %v2982, 95
    %v3319 = vpop.permute.xlu0 %3318
    %3320 = vrot.lane.b32.xlu0 %v2981, 95
    %v3321 = vpop.permute.xlu0 %3320
    %3322 = vrot.lane.b32.xlu0 %v2983, 95
    %v3323 = vpop.permute.xlu0 %3322
    %3324 = vrot.lane.b32.xlu0 %v2991, 95
    %v3325 = vpop.permute.xlu0 %3324
    %3326 = vrot.lane.b32.xlu0 %v2999, 95
    %v3327 = vpop.permute.xlu0 %3326
    %3328 = vrot.lane.b32.xlu0 %v2998, 95
    %v3329 = vpop.permute.xlu0 %3328
    %3330 = vrot.lane.b32.xlu0 %v3000, 95
    %v3331 = vpop.permute.xlu0 %3330
    %3332 = vrot.lane.b32.xlu0 %v3048, 95
    %v3333 = vpop.permute.xlu0 %3332
    %vm3334 = vcmask 777216
    %v3335 = vsel %vm3334, %v3317, %v3319
    %v3336 = vsel %vm3334, %v3319, %v3321
    %v3337 = vsel %vm3334, %v3321, %v3323
    %v3338 = vsel %vm3334, %v3323, %v3325
    %v3339 = vsel %vm3334, %v3325, %v3327
    %v3340 = vsel %vm3334, %v3327, %v3329
    %v3341 = vsel %vm3334, %v3329, %v3331
    %v3342 = vsel %vm3334, %v3331, %v3333
    %3351 = vrot.lane.b32.xlu0 %v3094, 95
    %v3352 = vpop.permute.xlu0 %3351
    %3353 = vrot.lane.b32.xlu0 %v3102, 95
    %v3354 = vpop.permute.xlu0 %3353
    %3355 = vrot.lane.b32.xlu0 %v3101, 95
    %v3356 = vpop.permute.xlu0 %3355
    %3357 = vrot.lane.b32.xlu0 %v3103, 95
    %v3358 = vpop.permute.xlu0 %3357
    %3359 = vrot.lane.b32.xlu0 %v3111, 95
    %v3360 = vpop.permute.xlu0 %3359
    %3361 = vrot.lane.b32.xlu0 %v3119, 95
    %v3362 = vpop.permute.xlu0 %3361
    %3363 = vrot.lane.b32.xlu0 %v3118, 95
    %v3364 = vpop.permute.xlu0 %3363
    %3365 = vrot.lane.b32.xlu0 %v3120, 95
    %v3366 = vpop.permute.xlu0 %3365
    %3367 = vrot.lane.b32.xlu0 %v3127, 95
    %v3368 = vpop.permute.xlu0 %3367
    %v3369 = vsel %vm3334, %v3352, %v3354
    %v3370 = vsel %vm3334, %v3354, %v3356
    %v3371 = vsel %vm3334, %v3356, %v3358
    %v3372 = vsel %vm3334, %v3358, %v3360
    %v3373 = vsel %vm3334, %v3360, %v3362
    %v3374 = vsel %vm3334, %v3362, %v3364
    %v3375 = vsel %vm3334, %v3364, %v3366
    %v3376 = vsel %vm3334, %v3366, %v3368
    %v3385 = vsel %vm2844, %v3335, 0
    %v3386 = vsel %vm2845, %v3336, 0
    %v3387 = vsel %vm2846, %v3337, 0
    %v3388 = vsel %vm2847, %v3338, 0
    %v3389 = vsel %vm2848, %v3339, 0
    %v3390 = vsel %vm2849, %v3340, 0
    %v3391 = vsel %vm2850, %v3341, 0
    %v3392 = vsel %vm2851, %v3342, 0
    %v3393 = vsel %vm2852, %v3369, 0
    %v3394 = vsel %vm2853, %v3370, 0
    %v3395 = vsel %vm2854, %v3371, 0
    %v3396 = vsel %vm2855, %v3372, 0
    %v3397 = vsel %vm2856, %v3373, 0
    %v3398 = vsel %vm2857, %v3374, 0
    %v3399 = vsel %vm2858, %v3375, 0
    %v3400 = vsel %vm2859, %v3376, 0
    %v3401 = vrot.slane %v2629, 6
    %v3402 = vrot.slane %v2630, 6
    %v3403 = vrot.slane %v2631, 6
    %v3404 = vrot.slane %v2632, 6
    %v3405 = vrot.slane %v2633, 6
    %v3406 = vrot.slane %v2634, 6
    %v3407 = vrot.slane %v2635, 6
    %v3408 = vrot.slane %v2636, 6
    %v3409 = vrot.slane %v2655, 6
    %v3410 = vrot.slane %v2656, 6
    %v3411 = vrot.slane %v2657, 6
    %v3412 = vrot.slane %v2658, 6
    %v3413 = vrot.slane %v2659, 6
    %v3414 = vrot.slane %v2660, 6
    %v3415 = vrot.slane %v2661, 6
    %v3416 = vrot.slane %v2662, 6
    %v3433 = vrot.slane %v2860, 4
    %v3434 = vrot.slane %v2861, 4
    %v3435 = vrot.slane %v2862, 4
    %v3436 = vrot.slane %v2863, 4
    %v3437 = vrot.slane %v2864, 4
    %v3438 = vrot.slane %v2865, 4
    %v3439 = vrot.slane %v2866, 4
    %v3440 = vrot.slane %v2867, 4
    %v3441 = vrot.slane %v2868, 4
    %v3442 = vrot.slane %v2869, 4
    %v3443 = vrot.slane %v2870, 4
    %v3444 = vrot.slane %v2871, 4
    %v3445 = vrot.slane %v2872, 4
    %v3446 = vrot.slane %v2873, 4
    %v3447 = vrot.slane %v2874, 4
    %v3448 = vrot.slane %v2875, 4
    %v3465 = vrot.slane %v2945, 2
    %v3466 = vrot.slane %v2946, 2
    %v3467 = vrot.slane %v2947, 2
    %v3468 = vrot.slane %v2948, 2
    %v3469 = vrot.slane %v2949, 2
    %v3470 = vrot.slane %v2950, 2
    %v3471 = vrot.slane %v2951, 2
    %v3472 = vrot.slane %v2952, 2
    %v3473 = vrot.slane %v2953, 2
    %v3474 = vrot.slane %v2954, 2
    %v3475 = vrot.slane %v2955, 2
    %v3476 = vrot.slane %v2956, 2
    %v3477 = vrot.slane %v2957, 2
    %v3478 = vrot.slane %v2958, 2
    %v3479 = vrot.slane %v2959, 2
    %v3480 = vrot.slane %v2960, 2
    %v3497 = vrot.slane %v3162, 6
    %v3498 = vrot.slane %v3163, 6
    %v3499 = vrot.slane %v3164, 6
    %v3500 = vrot.slane %v3165, 6
    %v3501 = vrot.slane %v3166, 6
    %v3502 = vrot.slane %v3167, 6
    %v3503 = vrot.slane %v3168, 6
    %v3504 = vrot.slane %v3169, 6
    %v3505 = vrot.slane %v3170, 6
    %v3506 = vrot.slane %v3171, 6
    %v3507 = vrot.slane %v3172, 6
    %v3508 = vrot.slane %v3173, 6
    %v3509 = vrot.slane %v3174, 6
    %v3510 = vrot.slane %v3175, 6
    %v3511 = vrot.slane %v3176, 6
    %v3512 = vrot.slane %v3177, 6
    %v3529 = vrot.slane %v3247, 4
    %v3530 = vrot.slane %v3248, 4
    %v3531 = vrot.slane %v3249, 4
    %v3532 = vrot.slane %v3250, 4
    %v3533 = vrot.slane %v3251, 4
    %v3534 = vrot.slane %v3252, 4
    %v3535 = vrot.slane %v3253, 4
    %v3536 = vrot.slane %v3254, 4
    %v3537 = vrot.slane %v3255, 4
    %v3538 = vrot.slane %v3256, 4
    %v3539 = vrot.slane %v3257, 4
    %v3540 = vrot.slane %v3258, 4
    %v3541 = vrot.slane %v3259, 4
    %v3542 = vrot.slane %v3260, 4
    %v3543 = vrot.slane %v3261, 4
    %v3544 = vrot.slane %v3262, 4
    %v3545 = vrot.slane %v3282, 2
    %v3546 = vrot.slane %v3283, 2
    %v3547 = vrot.slane %v3284, 2
    %v3548 = vrot.slane %v3285, 2
    %v3549 = vrot.slane %v3286, 2
    %v3550 = vrot.slane %v3287, 2
    %v3551 = vrot.slane %v3288, 2
    %v3552 = vrot.slane %v3289, 2
    %v3553 = vrot.slane %v3308, 2
    %v3554 = vrot.slane %v3309, 2
    %v3555 = vrot.slane %v3310, 2
    %v3556 = vrot.slane %v3311, 2
    %v3557 = vrot.slane %v3312, 2
    %v3558 = vrot.slane %v3313, 2
    %v3559 = vrot.slane %v3314, 2
    %v3560 = vrot.slane %v3315, 2
    %vm3561 = vcmask 1041408
    %v3564 = vsel %vm3561, %v2594, %v3401
    %v3567 = vsel %vm3561, %v2595, %v3402
    %v3570 = vsel %vm3561, %v2596, %v3403
    %v3573 = vsel %vm3561, %v2597, %v3404
    %v3576 = vsel %vm3561, %v2598, %v3405
    %v3579 = vsel %vm3561, %v2599, %v3406
    %v3582 = vsel %vm3561, %v2600, %v3407
    %v3585 = vsel %vm3561, %v2601, %v3408
    %v3588 = vsel %vm3561, %v2602, %v3409
    %v3591 = vsel %vm3561, %v2603, %v3410
    %v3594 = vsel %vm3561, %v2604, %v3411
    %v3597 = vsel %vm3561, %v2605, %v3412
    %v3600 = vsel %vm3561, %v2606, %v3413
    %v3603 = vsel %vm3561, %v2607, %v3414
    %v3606 = vsel %vm3561, %v2608, %v3415
    %v3609 = vsel %vm3561, %v2609, %v3416
    %vm3610 = vcmask 1043456
    %v3612 = vsel %vm3610, %v3564, %v3433
    %v3614 = vsel %vm3610, %v3567, %v3434
    %v3616 = vsel %vm3610, %v3570, %v3435
    %v3618 = vsel %vm3610, %v3573, %v3436
    %v3620 = vsel %vm3610, %v3576, %v3437
    %v3622 = vsel %vm3610, %v3579, %v3438
    %v3624 = vsel %vm3610, %v3582, %v3439
    %v3626 = vsel %vm3610, %v3585, %v3440
    %v3628 = vsel %vm3610, %v3588, %v3441
    %v3630 = vsel %vm3610, %v3591, %v3442
    %v3632 = vsel %vm3610, %v3594, %v3443
    %v3634 = vsel %vm3610, %v3597, %v3444
    %v3636 = vsel %vm3610, %v3600, %v3445
    %v3638 = vsel %vm3610, %v3603, %v3446
    %v3640 = vsel %vm3610, %v3606, %v3447
    %v3642 = vsel %vm3610, %v3609, %v3448
    %vm3643 = vcmask 1045504
    %v3645 = vsel %vm3643, %v3612, %v3465
    %v3648 = vsel %vm3643, %v3614, %v3466
    %v3651 = vsel %vm3643, %v3616, %v3467
    %v3654 = vsel %vm3643, %v3618, %v3468
    %v3657 = vsel %vm3643, %v3620, %v3469
    %v3660 = vsel %vm3643, %v3622, %v3470
    %v3663 = vsel %vm3643, %v3624, %v3471
    %v3666 = vsel %vm3643, %v3626, %v3472
    %v3669 = vsel %vm3643, %v3628, %v3473
    %v3672 = vsel %vm3643, %v3630, %v3474
    %v3675 = vsel %vm3643, %v3632, %v3475
    %v3678 = vsel %vm3643, %v3634, %v3476
    %v3681 = vsel %vm3643, %v3636, %v3477
    %v3684 = vsel %vm3643, %v3638, %v3478
    %v3687 = vsel %vm3643, %v3640, %v3479
    %v3690 = vsel %vm3643, %v3642, %v3480
    %v3694 = vsel %vm3561, %v2974, %v3497
    %v3697 = vsel %vm3561, %v2982, %v3498
    %v3700 = vsel %vm3561, %v2981, %v3499
    %v3703 = vsel %vm3561, %v2983, %v3500
    %v3706 = vsel %vm3561, %v2991, %v3501
    %v3709 = vsel %vm3561, %v2999, %v3502
    %v3712 = vsel %vm3561, %v2998, %v3503
    %v3715 = vsel %vm3561, %v3000, %v3504
    %v3718 = vsel %vm3561, %v3010, %v3505
    %v3721 = vsel %vm3561, %v3018, %v3506
    %v3724 = vsel %vm3561, %v3017, %v3507
    %v3727 = vsel %vm3561, %v3019, %v3508
    %v3730 = vsel %vm3561, %v3027, %v3509
    %v3733 = vsel %vm3561, %v3035, %v3510
    %v3736 = vsel %vm3561, %v3034, %v3511
    %v3739 = vsel %vm3561, %v3036, %v3512
    %v3741 = vsel %vm3610, %v3694, %v3529
    %v3743 = vsel %vm3610, %v3697, %v3530
    %v3745 = vsel %vm3610, %v3700, %v3531
    %v3747 = vsel %vm3610, %v3703, %v3532
    %v3749 = vsel %vm3610, %v3706, %v3533
    %v3751 = vsel %vm3610, %v3709, %v3534
    %v3753 = vsel %vm3610, %v3712, %v3535
    %v3755 = vsel %vm3610, %v3715, %v3536
    %v3757 = vsel %vm3610, %v3718, %v3537
    %v3759 = vsel %vm3610, %v3721, %v3538
    %v3761 = vsel %vm3610, %v3724, %v3539
    %v3763 = vsel %vm3610, %v3727, %v3540
    %v3765 = vsel %vm3610, %v3730, %v3541
    %v3767 = vsel %vm3610, %v3733, %v3542
    %v3769 = vsel %vm3610, %v3736, %v3543
    %v3771 = vsel %vm3610, %v3739, %v3544
    %v3773 = vsel %vm3643, %v3741, %v3545
    %v3776 = vsel %vm3643, %v3743, %v3546
    %v3779 = vsel %vm3643, %v3745, %v3547
    %v3782 = vsel %vm3643, %v3747, %v3548
    %v3785 = vsel %vm3643, %v3749, %v3549
    %v3788 = vsel %vm3643, %v3751, %v3550
    %v3791 = vsel %vm3643, %v3753, %v3551
    %v3794 = vsel %vm3643, %v3755, %v3552
    %v3797 = vsel %vm3643, %v3757, %v3553
    %v3800 = vsel %vm3643, %v3759, %v3554
    %v3803 = vsel %vm3643, %v3761, %v3555
    %v3806 = vsel %vm3643, %v3763, %v3556
    %v3809 = vsel %vm3643, %v3765, %v3557
    %v3812 = vsel %vm3643, %v3767, %v3558
    %v3815 = vsel %vm3643, %v3769, %v3559
    %v3818 = vsel %vm3643, %v3771, %v3560
    %3821 = vset.pattern.permute.xlu0 0
    %3822 = vperm.xlu0 %3821, %v2302
    %v3823 = vpop.permute.xlu0 %3822
    %vm3825 = vcmask 293888
    %v3827 = vsel %vm3825, %v2301, 0
    %v3830 = vsel %vm3561, %v3385, 0
    %v3833 = vsel %vm3561, %v3386, 0
    %v3836 = vsel %vm3561, %v3387, 0
    %v3839 = vsel %vm3561, %v3388, 0
    %v3842 = vsel %vm3561, %v3389, 0
    %v3845 = vsel %vm3561, %v3390, 0
    %v3848 = vsel %vm3561, %v3391, 0
    %v3851 = vsel %vm3561, %v3392, 0
    %v3854 = vsel %vm3561, %v3393, 0
    %v3857 = vsel %vm3561, %v3394, 0
    %v3860 = vsel %vm3561, %v3395, 0
    %v3863 = vsel %vm3561, %v3396, 0
    %v3866 = vsel %vm3561, %v3397, 0
    %v3869 = vsel %vm3561, %v3398, 0
    %v3872 = vsel %vm3561, %v3399, 0
    %v3875 = vsel %vm3561, %v3400, 0
    %3877 = vmatprep.subr.bf16.mxu0 %v3648
    %3878 = vmatpush1.bf16.msra.mxu0 %v3645
    %3879 = vmatprep.subr.bf16.mxu0 %v3776
    %3880 = vmatpush1.bf16.msra.mxu0 %v3773
    %3881 = vmatprep.subr.bf16.mxu0 %v3833
    %3882 = vmatpush1.bf16.msra.mxu0 %v3830
    %3883 = vmatprep.subr.bf16.mxu0 0
    %3884 = vmatpush1.bf16.msra.mxu0 0
    %3885 = vmatprep.subr.bf16.mxu0 0
    %3886 = vmatpush1.bf16.msra.mxu0 0
    %3887 = vmatprep.subr.bf16.mxu0 0
    %3888 = vmatpush1.bf16.msra.mxu0 0
    %3889 = vmatprep.subr.bf16.mxu0 0
    %3890 = vmatpush1.bf16.msra.mxu0 0
    %3891 = vmatprep.subr.bf16.mxu0 0
    %3892 = vmatpush1.bf16.msra.mxu0 0
    %3893 = vmatprep.subr.bf16.mxu0 0
    %3894 = vmatpush1.bf16.msra.mxu0 0
    %3895 = vmatprep.subr.bf16.mxu0 0
    %3896 = vmatpush1.bf16.msra.mxu0 0
    %3897 = vmatprep.subr.bf16.mxu0 0
    %3898 = vmatpush1.bf16.msra.mxu0 0
    %3899 = vmatprep.subr.bf16.mxu0 0
    %3900 = vmatpush1.bf16.msra.mxu0 0
    %3901 = vmatprep.subr.bf16.mxu0 0
    %3902 = vmatpush1.bf16.msra.mxu0 0
    %3903 = vmatprep.subr.bf16.mxu0 0
    %3904 = vmatpush1.bf16.msra.mxu0 0
    %3905 = vmatprep.subr.bf16.mxu0 0
    %3906 = vmatpush1.bf16.msra.mxu0 0
    %3907 = vmatprep.subr.bf16.mxu0 0
    %3908 = vmatpush1.bf16.msra.mxu0 0
    %3909 = vmatprep.mubr.bf16.mxu0 0
    %3910 = vmatmul.mubr.bf16.gmra.mrb[0].mxu0 %v3827
    %v3911 = vpop.f32.mrb[0].mxu0
    %v3912 = vadd.f32 %v3823, %v3911
    %v3913 = vpop.f32.mrb[0].mxu0
    %v3914 = vadd.f32 %v3823, %v3913
    %v3915 = vpop.f32.mrb[0].mxu0
    %v3916 = vpop.f32.mrb[0].mxu0
    %3917 = vdwg.mxu0
    %3918 = vmatprep.subr.bf16.mxu0 %v3654
    %3919 = vmatpush1.bf16.msra.mxu0 %v3651
    %3920 = vmatprep.subr.bf16.mxu0 %v3782
    %3921 = vmatpush1.bf16.msra.mxu0 %v3779
    %3922 = vmatprep.subr.bf16.mxu0 %v3839
    %3923 = vmatpush1.bf16.msra.mxu0 %v3836
    %3924 = vmatprep.subr.bf16.mxu0 0
    %3925 = vmatpush1.bf16.msra.mxu0 0
    %3926 = vmatprep.subr.bf16.mxu0 0
    %3927 = vmatpush1.bf16.msra.mxu0 0
    %3928 = vmatprep.subr.bf16.mxu0 0
    %3929 = vmatpush1.bf16.msra.mxu0 0
    %3930 = vmatprep.subr.bf16.mxu0 0
    %3931 = vmatpush1.bf16.msra.mxu0 0
    %3932 = vmatprep.subr.bf16.mxu0 0
    %3933 = vmatpush1.bf16.msra.mxu0 0
    %3934 = vmatprep.subr.bf16.mxu0 0
    %3935 = vmatpush1.bf16.msra.mxu0 0
    %3936 = vmatprep.subr.bf16.mxu0 0
    %3937 = vmatpush1.bf16.msra.mxu0 0
    %3938 = vmatprep.subr.bf16.mxu0 0
    %3939 = vmatpush1.bf16.msra.mxu0 0
    %3940 = vmatprep.subr.bf16.mxu0 0
    %3941 = vmatpush1.bf16.msra.mxu0 0
    %3942 = vmatprep.subr.bf16.mxu0 0
    %3943 = vmatpush1.bf16.msra.mxu0 0
    %3944 = vmatprep.subr.bf16.mxu0 0
    %3945 = vmatpush1.bf16.msra.mxu0 0
    %3946 = vmatprep.subr.bf16.mxu0 0
    %3947 = vmatpush1.bf16.msra.mxu0 0
    %3948 = vmatprep.subr.bf16.mxu0 0
    %3949 = vmatpush1.bf16.msra.mxu0 0
    %3950 = vmatprep.mubr.bf16.mxu0 0
    %3951 = vmatmul.mubr.bf16.gmra.mrb[0].mxu0 %v3827
    %v3952 = vpop.f32.mrb[0].mxu0
    %v3953 = vadd.f32 %v3823, %v3952
    %v3954 = vpop.f32.mrb[0].mxu0
    %v3955 = vadd.f32 %v3823, %v3954
    %v3956 = vpop.f32.mrb[0].mxu0
    %v3957 = vpop.f32.mrb[0].mxu0
    %3958 = vdwg.mxu0
    %3959 = vmatprep.subr.bf16.mxu0 %v3660
    %3960 = vmatpush1.bf16.msra.mxu0 %v3657
    %3961 = vmatprep.subr.bf16.mxu0 %v3788
    %3962 = vmatpush1.bf16.msra.mxu0 %v3785
    %3963 = vmatprep.subr.bf16.mxu0 %v3845
    %3964 = vmatpush1.bf16.msra.mxu0 %v3842
    %3965 = vmatprep.subr.bf16.mxu0 0
    %3966 = vmatpush1.bf16.msra.mxu0 0
    %3967 = vmatprep.subr.bf16.mxu0 0
    %3968 = vmatpush1.bf16.msra.mxu0 0
    %3969 = vmatprep.subr.bf16.mxu0 0
    %3970 = vmatpush1.bf16.msra.mxu0 0
    %3971 = vmatprep.subr.bf16.mxu0 0
    %3972 = vmatpush1.bf16.msra.mxu0 0
    %3973 = vmatprep.subr.bf16.mxu0 0
    %3974 = vmatpush1.bf16.msra.mxu0 0
    %3975 = vmatprep.subr.bf16.mxu0 0
    %3976 = vmatpush1.bf16.msra.mxu0 0
    %3977 = vmatprep.subr.bf16.mxu0 0
    %3978 = vmatpush1.bf16.msra.mxu0 0
    %3979 = vmatprep.subr.bf16.mxu0 0
    %3980 = vmatpush1.bf16.msra.mxu0 0
    %3981 = vmatprep.subr.bf16.mxu0 0
    %3982 = vmatpush1.bf16.msra.mxu0 0
    %3983 = vmatprep.subr.bf16.mxu0 0
    %3984 = vmatpush1.bf16.msra.mxu0 0
    %3985 = vmatprep.subr.bf16.mxu0 0
    %3986 = vmatpush1.bf16.msra.mxu0 0
    %3987 = vmatprep.subr.bf16.mxu0 0
    %3988 = vmatpush1.bf16.msra.mxu0 0
    %3989 = vmatprep.subr.bf16.mxu0 0
    %3990 = vmatpush1.bf16.msra.mxu0 0
    %3991 = vmatprep.mubr.bf16.mxu0 0
    %3992 = vmatmul.mubr.bf16.gmra.mrb[0].mxu0 %v3827
    %v3993 = vpop.f32.mrb[0].mxu0
    %v3994 = vadd.f32 %v3823, %v3993
    %v3995 = vpop.f32.mrb[0].mxu0
    %v3996 = vadd.f32 %v3823, %v3995
    %v3997 = vpop.f32.mrb[0].mxu0
    %v3998 = vpop.f32.mrb[0].mxu0
    %3999 = vdwg.mxu0
    %4000 = vmatprep.subr.bf16.mxu0 %v3666
    %4001 = vmatpush1.bf16.msra.mxu0 %v3663
    %4002 = vmatprep.subr.bf16.mxu0 %v3794
    %4003 = vmatpush1.bf16.msra.mxu0 %v3791
    %4004 = vmatprep.subr.bf16.mxu0 %v3851
    %4005 = vmatpush1.bf16.msra.mxu0 %v3848
    %4006 = vmatprep.subr.bf16.mxu0 0
    %4007 = vmatpush1.bf16.msra.mxu0 0
    %4008 = vmatprep.subr.bf16.mxu0 0
    %4009 = vmatpush1.bf16.msra.mxu0 0
    %4010 = vmatprep.subr.bf16.mxu0 0
    %4011 = vmatpush1.bf16.msra.mxu0 0
    %4012 = vmatprep.subr.bf16.mxu0 0
    %4013 = vmatpush1.bf16.msra.mxu0 0
    %4014 = vmatprep.subr.bf16.mxu0 0
    %4015 = vmatpush1.bf16.msra.mxu0 0
    %4016 = vmatprep.subr.bf16.mxu0 0
    %4017 = vmatpush1.bf16.msra.mxu0 0
    %4018 = vmatprep.subr.bf16.mxu0 0
    %4019 = vmatpush1.bf16.msra.mxu0 0
    %4020 = vmatprep.subr.bf16.mxu0 0
    %4021 = vmatpush1.bf16.msra.mxu0 0
    %4022 = vmatprep.subr.bf16.mxu0 0
    %4023 = vmatpush1.bf16.msra.mxu0 0
    %4024 = vmatprep.subr.bf16.mxu0 0
    %4025 = vmatpush1.bf16.msra.mxu0 0
    %4026 = vmatprep.subr.bf16.mxu0 0
    %4027 = vmatpush1.bf16.msra.mxu0 0
    %4028 = vmatprep.subr.bf16.mxu0 0
    %4029 = vmatpush1.bf16.msra.mxu0 0
    %4030 = vmatprep.subr.bf16.mxu0 0
    %4031 = vmatpush1.bf16.msra.mxu0 0
    %4032 = vmatprep.mubr.bf16.mxu0 0
    %4033 = vmatmul.mubr.bf16.gmra.mrb[0].mxu0 %v3827
    %v4034 = vpop.f32.mrb[0].mxu0
    %v4035 = vadd.f32 %v3823, %v4034
    %v4036 = vpop.f32.mrb[0].mxu0
    %v4037 = vadd.f32 %v3823, %v4036
    %v4038 = vpop.f32.mrb[0].mxu0
    %v4039 = vpop.f32.mrb[0].mxu0
    %4040 = vdwg.mxu0
    %4041 = vmatprep.subr.bf16.mxu0 %v3672
    %4042 = vmatpush1.bf16.msra.mxu0 %v3669
    %4043 = vmatprep.subr.bf16.mxu0 %v3800
    %4044 = vmatpush1.bf16.msra.mxu0 %v3797
    %4045 = vmatprep.subr.bf16.mxu0 %v3857
    %4046 = vmatpush1.bf16.msra.mxu0 %v3854
    %4047 = vmatprep.subr.bf16.mxu0 0
    %4048 = vmatpush1.bf16.msra.mxu0 0
    %4049 = vmatprep.subr.bf16.mxu0 0
    %4050 = vmatpush1.bf16.msra.mxu0 0
    %4051 = vmatprep.subr.bf16.mxu0 0
    %4052 = vmatpush1.bf16.msra.mxu0 0
    %4053 = vmatprep.subr.bf16.mxu0 0
    %4054 = vmatpush1.bf16.msra.mxu0 0
    %4055 = vmatprep.subr.bf16.mxu0 0
    %4056 = vmatpush1.bf16.msra.mxu0 0
    %4057 = vmatprep.subr.bf16.mxu0 0
    %4058 = vmatpush1.bf16.msra.mxu0 0
    %4059 = vmatprep.subr.bf16.mxu0 0
    %4060 = vmatpush1.bf16.msra.mxu0 0
    %4061 = vmatprep.subr.bf16.mxu0 0
    %4062 = vmatpush1.bf16.msra.mxu0 0
    %4063 = vmatprep.subr.bf16.mxu0 0
    %4064 = vmatpush1.bf16.msra.mxu0 0
    %4065 = vmatprep.subr.bf16.mxu0 0
    %4066 = vmatpush1.bf16.msra.mxu0 0
    %4067 = vmatprep.subr.bf16.mxu0 0
    %4068 = vmatpush1.bf16.msra.mxu0 0
    %4069 = vmatprep.subr.bf16.mxu0 0
    %4070 = vmatpush1.bf16.msra.mxu0 0
    %4071 = vmatprep.subr.bf16.mxu0 0
    %4072 = vmatpush1.bf16.msra.mxu0 0
    %4073 = vmatprep.mubr.bf16.mxu0 0
    %4074 = vmatmul.mubr.bf16.gmra.mrb[0].mxu0 %v3827
    %v4075 = vpop.f32.mrb[0].mxu0
    %v4076 = vadd.f32 %v3823, %v4075
    %v4077 = vpop.f32.mrb[0].mxu0
    %v4078 = vadd.f32 %v3823, %v4077
    %v4079 = vpop.f32.mrb[0].mxu0
    %v4080 = vpop.f32.mrb[0].mxu0
    %4081 = vdwg.mxu0
    %4082 = vmatprep.subr.bf16.mxu0 %v3678
    %4083 = vmatpush1.bf16.msra.mxu0 %v3675
    %4084 = vmatprep.subr.bf16.mxu0 %v3806
    %4085 = vmatpush1.bf16.msra.mxu0 %v3803
    %4086 = vmatprep.subr.bf16.mxu0 %v3863
    %4087 = vmatpush1.bf16.msra.mxu0 %v3860
    %4088 = vmatprep.subr.bf16.mxu0 0
    %4089 = vmatpush1.bf16.msra.mxu0 0
    %4090 = vmatprep.subr.bf16.mxu0 0
    %4091 = vmatpush1.bf16.msra.mxu0 0
    %4092 = vmatprep.subr.bf16.mxu0 0
    %4093 = vmatpush1.bf16.msra.mxu0 0
    %4094 = vmatprep.subr.bf16.mxu0 0
    %4095 = vmatpush1.bf16.msra.mxu0 0
    %4096 = vmatprep.subr.bf16.mxu0 0
    %4097 = vmatpush1.bf16.msra.mxu0 0
    %4098 = vmatprep.subr.bf16.mxu0 0
    %4099 = vmatpush1.bf16.msra.mxu0 0
    %4100 = vmatprep.subr.bf16.mxu0 0
    %4101 = vmatpush1.bf16.msra.mxu0 0
    %4102 = vmatprep.subr.bf16.mxu0 0
    %4103 = vmatpush1.bf16.msra.mxu0 0
    %4104 = vmatprep.subr.bf16.mxu0 0
    %4105 = vmatpush1.bf16.msra.mxu0 0
    %4106 = vmatprep.subr.bf16.mxu0 0
    %4107 = vmatpush1.bf16.msra.mxu0 0
    %4108 = vmatprep.subr.bf16.mxu0 0
    %4109 = vmatpush1.bf16.msra.mxu0 0
    %4110 = vmatprep.subr.bf16.mxu0 0
    %4111 = vmatpush1.bf16.msra.mxu0 0
    %4112 = vmatprep.subr.bf16.mxu0 0
    %4113 = vmatpush1.bf16.msra.mxu0 0
    %4114 = vmatprep.mubr.bf16.mxu0 0
    %4115 = vmatmul.mubr.bf16.gmra.mrb[0].mxu0 %v3827
    %v4116 = vpop.f32.mrb[0].mxu0
    %v4117 = vadd.f32 %v3823, %v4116
    %v4118 = vpop.f32.mrb[0].mxu0
    %v4119 = vadd.f32 %v3823, %v4118
    %v4120 = vpop.f32.mrb[0].mxu0
    %v4121 = vpop.f32.mrb[0].mxu0
    %4122 = vdwg.mxu0
    %4123 = vmatprep.subr.bf16.mxu0 %v3684
    %4124 = vmatpush1.bf16.msra.mxu0 %v3681
    %4125 = vmatprep.subr.bf16.mxu0 %v3812
    %4126 = vmatpush1.bf16.msra.mxu0 %v3809
    %4127 = vmatprep.subr.bf16.mxu0 %v3869
    %4128 = vmatpush1.bf16.msra.mxu0 %v3866
    %4129 = vmatprep.subr.bf16.mxu0 0
    %4130 = vmatpush1.bf16.msra.mxu0 0
    %4131 = vmatprep.subr.bf16.mxu0 0
    %4132 = vmatpush1.bf16.msra.mxu0 0
    %4133 = vmatprep.subr.bf16.mxu0 0
    %4134 = vmatpush1.bf16.msra.mxu0 0
    %4135 = vmatprep.subr.bf16.mxu0 0
    %4136 = vmatpush1.bf16.msra.mxu0 0
    %4137 = vmatprep.subr.bf16.mxu0 0
    %4138 = vmatpush1.bf16.msra.mxu0 0
    %4139 = vmatprep.subr.bf16.mxu0 0
    %4140 = vmatpush1.bf16.msra.mxu0 0
    %4141 = vmatprep.subr.bf16.mxu0 0
    %4142 = vmatpush1.bf16.msra.mxu0 0
    %4143 = vmatprep.subr.bf16.mxu0 0
    %4144 = vmatpush1.bf16.msra.mxu0 0
    %4145 = vmatprep.subr.bf16.mxu0 0
    %4146 = vmatpush1.bf16.msra.mxu0 0
    %4147 = vmatprep.subr.bf16.mxu0 0
    %4148 = vmatpush1.bf16.msra.mxu0 0
    %4149 = vmatprep.subr.bf16.mxu0 0
    %4150 = vmatpush1.bf16.msra.mxu0 0
    %4151 = vmatprep.subr.bf16.mxu0 0
    %4152 = vmatpush1.bf16.msra.mxu0 0
    %4153 = vmatprep.subr.bf16.mxu0 0
    %4154 = vmatpush1.bf16.msra.mxu0 0
    %4155 = vmatprep.mubr.bf16.mxu0 0
    %4156 = vmatmul.mubr.bf16.gmra.mrb[0].mxu0 %v3827
    %v4157 = vpop.f32.mrb[0].mxu0
    %v4158 = vadd.f32 %v3823, %v4157
    %v4159 = vpop.f32.mrb[0].mxu0
    %v4160 = vadd.f32 %v3823, %v4159
    %v4161 = vpop.f32.mrb[0].mxu0
    %v4162 = vpop.f32.mrb[0].mxu0
    %4163 = vdwg.mxu0
    %4164 = vmatprep.subr.bf16.mxu0 %v3690
    %4165 = vmatpush1.bf16.msra.mxu0 %v3687
    %4166 = vmatprep.subr.bf16.mxu0 %v3818
    %4167 = vmatpush1.bf16.msra.mxu0 %v3815
    %4168 = vmatprep.subr.bf16.mxu0 %v3875
    %4169 = vmatpush1.bf16.msra.mxu0 %v3872
    %4170 = vmatprep.subr.bf16.mxu0 0
    %4171 = vmatpush1.bf16.msra.mxu0 0
    %4172 = vmatprep.subr.bf16.mxu0 0
    %4173 = vmatpush1.bf16.msra.mxu0 0
    %4174 = vmatprep.subr.bf16.mxu0 0
    %4175 = vmatpush1.bf16.msra.mxu0 0
    %4176 = vmatprep.subr.bf16.mxu0 0
    %4177 = vmatpush1.bf16.msra.mxu0 0
    %4178 = vmatprep.subr.bf16.mxu0 0
    %4179 = vmatpush1.bf16.msra.mxu0 0
    %4180 = vmatprep.subr.bf16.mxu0 0
    %4181 = vmatpush1.bf16.msra.mxu0 0
    %4182 = vmatprep.subr.bf16.mxu0 0
    %4183 = vmatpush1.bf16.msra.mxu0 0
    %4184 = vmatprep.subr.bf16.mxu0 0
    %4185 = vmatpush1.bf16.msra.mxu0 0
    %4186 = vmatprep.subr.bf16.mxu0 0
    %4187 = vmatpush1.bf16.msra.mxu0 0
    %4188 = vmatprep.subr.bf16.mxu0 0
    %4189 = vmatpush1.bf16.msra.mxu0 0
    %4190 = vmatprep.subr.bf16.mxu0 0
    %4191 = vmatpush1.bf16.msra.mxu0 0
    %4192 = vmatprep.subr.bf16.mxu0 0
    %4193 = vmatpush1.bf16.msra.mxu0 0
    %4194 = vmatprep.subr.bf16.mxu0 0
    %4195 = vmatpush1.bf16.msra.mxu0 0
    %4196 = vmatprep.mubr.bf16.mxu0 0
    %4197 = vmatmul.mubr.bf16.gmra.mrb[0].mxu0 %v3827
    %v4198 = vpop.f32.mrb[0].mxu0
    %v4199 = vadd.f32 %v3823, %v4198
    %v4200 = vpop.f32.mrb[0].mxu0
    %v4201 = vadd.f32 %v3823, %v4200
    %v4202 = vpop.f32.mrb[0].mxu0
    %v4203 = vpop.f32.mrb[0].mxu0
    %4204 = vdwg.mxu0
    %v4205 = vmax.f32 %v3912, 0.0
    %v4206 = vmax.f32 %v3914, 0.0
    %v4207 = vmax.f32 %v3953, 0.0
    %v4208 = vmax.f32 %v3955, 0.0
    %v4209 = vmax.f32 %v3994, 0.0
    %v4210 = vmax.f32 %v3996, 0.0
    %v4211 = vmax.f32 %v4035, 0.0
    %v4212 = vmax.f32 %v4037, 0.0
    %v4213 = vmax.f32 %v4076, 0.0
    %v4214 = vmax.f32 %v4078, 0.0
    %v4215 = vmax.f32 %v4117, 0.0
    %v4216 = vmax.f32 %v4119, 0.0
    %v4217 = vmax.f32 %v4158, 0.0
    %v4218 = vmax.f32 %v4160, 0.0
    %v4219 = vmax.f32 %v4199, 0.0
    %v4220 = vmax.f32 %v4201, 0.0
    %v4221 = vpack.c.bf16 %v4205, %v4205
    %v4222 = vpack.c.bf16 %v4206, %v4206
    %v4223 = vpack.c.bf16 %v4207, %v4207
    %v4224 = vpack.c.bf16 %v4208, %v4208
    %v4225 = vpack.c.bf16 %v4209, %v4209
    %v4226 = vpack.c.bf16 %v4210, %v4210
    %v4227 = vpack.c.bf16 %v4211, %v4211
    %v4228 = vpack.c.bf16 %v4212, %v4212
    %v4237 = vcombine.low %v4221, %v4222
    %v4238 = vcombine.low %v4223, %v4224
    %v4239 = vcombine.low %v4225, %v4226
    %v4240 = vcombine.low %v4227, %v4228
    %v4242 = vunpack.c.l.s4 1966171168
    %v4243 = vunpack.c.0.s8 %v4242
    %v4244 = vlaneseq
    %v4245 = vshrl.u32 %v4244, 7
    %v4246 = vsub.s32 %v4243, %v4245
    %v4247 = vrot.slane %v4237, %v4246
    %v4249 = vunpack.c.l.s4 1966171168
    %v4250 = vunpack.c.0.s8 %v4249
    %v4251 = vlaneseq
    %v4252 = vshrl.u32 %v4251, 7
    %v4253 = vsub.s32 %v4250, %v4252
    %v4254 = vrot.slane %v4238, %v4253
    %v4256 = vunpack.c.l.s4 1966171168
    %v4257 = vunpack.c.0.s8 %v4256
    %v4258 = vlaneseq
    %v4259 = vshrl.u32 %v4258, 7
    %v4260 = vsub.s32 %v4257, %v4259
    %v4261 = vrot.slane %v4239, %v4260
    %v4263 = vunpack.c.l.s4 1966171168
    %v4264 = vunpack.c.0.s8 %v4263
    %v4265 = vlaneseq
    %v4266 = vshrl.u32 %v4265, 7
    %v4267 = vsub.s32 %v4264, %v4266
    %v4268 = vrot.slane %v4240, %v4267
    %v4269 = vcombine.low %v4247, %v4254
    %v4270 = vcombine.low %v4261, %v4268
    %v4272 = vunpack.c.l.s4 1966171168
    %v4273 = vunpack.c.0.s8 %v4272
    %v4274 = vlaneseq
    %v4275 = vshrl.u32 %v4274, 7
    %v4276 = vsub.s32 %v4273, %v4275
    %v4277 = vrot.slane %v4269, %v4276
    %v4279 = vunpack.c.l.s4 1966171168
    %v4280 = vunpack.c.0.s8 %v4279
    %v4281 = vlaneseq
    %v4282 = vshrl.u32 %v4281, 7
    %v4283 = vsub.s32 %v4280, %v4282
    %v4284 = vrot.slane %v4270, %v4283
    %v4285 = vcombine.low %v4277, %v4284
    %4287 = vst [vmem:[#allocation3 + $0x1] sm:$0xff] %v4285
    %v4288 = vpack.c.bf16 %v4213, %v4213
    %v4289 = vpack.c.bf16 %v4214, %v4214
    %v4290 = vpack.c.bf16 %v4215, %v4215
    %v4291 = vpack.c.bf16 %v4216, %v4216
    %v4292 = vpack.c.bf16 %v4217, %v4217
    %v4293 = vpack.c.bf16 %v4218, %v4218
    %v4294 = vpack.c.bf16 %v4219, %v4219
    %v4295 = vpack.c.bf16 %v4220, %v4220
    %v4304 = vcombine.low %v4288, %v4289
    %v4305 = vcombine.low %v4290, %v4291
    %v4306 = vcombine.low %v4292, %v4293
    %v4307 = vcombine.low %v4294, %v4295
    %v4309 = vunpack.c.l.s4 1966171168
    %v4310 = vunpack.c.0.s8 %v4309
    %v4311 = vlaneseq
    %v4312 = vshrl.u32 %v4311, 7
    %v4313 = vsub.s32 %v4310, %v4312
    %v4314 = vrot.slane %v4304, %v4313
    %v4316 = vunpack.c.l.s4 1966171168
    %v4317 = vunpack.c.0.s8 %v4316
    %v4318 = vlaneseq
    %v4319 = vshrl.u32 %v4318, 7
    %v4320 = vsub.s32 %v4317, %v4319
    %v4321 = vrot.slane %v4305, %v4320
    %v4323 = vunpack.c.l.s4 1966171168
    %v4324 = vunpack.c.0.s8 %v4323
    %v4325 = vlaneseq
    %v4326 = vshrl.u32 %v4325, 7
    %v4327 = vsub.s32 %v4324, %v4326
    %v4328 = vrot.slane %v4306, %v4327
    %v4330 = vunpack.c.l.s4 1966171168
    %v4331 = vunpack.c.0.s8 %v4330
    %v4332 = vlaneseq
    %v4333 = vshrl.u32 %v4332, 7
    %v4334 = vsub.s32 %v4331, %v4333
    %v4335 = vrot.slane %v4307, %v4334
    %v4336 = vcombine.low %v4314, %v4321
    %v4337 = vcombine.low %v4328, %v4335
    %v4339 = vunpack.c.l.s4 1966171168
    %v4340 = vunpack.c.0.s8 %v4339
    %v4341 = vlaneseq
    %v4342 = vshrl.u32 %v4341, 7
    %v4343 = vsub.s32 %v4340, %v4342
    %v4344 = vrot.slane %v4336, %v4343
    %v4346 = vunpack.c.l.s4 1966171168
    %v4347 = vunpack.c.0.s8 %v4346
    %v4348 = vlaneseq
    %v4349 = vshrl.u32 %v4348, 7
    %v4350 = vsub.s32 %v4347, %v4349
    %v4351 = vrot.slane %v4337, %v4350
    %v4352 = vcombine.low %v4344, %v4351
    %4354 = vst [vmem:[#allocation3 + $0xb] sm:$0xff] %v4352
    %v4355 = vld [vmem:[%s4] sm:$0x1]
    %v4356 = vld [vmem:[%s5] sm:$0x3]
    %v4357 = vld [vmem:[#allocation3] sm:$0xff]
    %v4358 = vld [vmem:[#allocation3 + $0x8] sm:$0x1]
    %v4359 = vld [vmem:[#allocation3 + $0xa] sm:$0xff]
    %v4360 = vld [vmem:[#allocation3 + $0x12] sm:$0x1]
    %v4363 = vcombine.high %v4357, %v4357
    %v4365 = vunpack.c.l.s4 1966171168
    %v4366 = vunpack.c.0.s8 %v4365
    %v4367 = vlaneseq
    %v4368 = vshrl.u32 %v4367, 7
    %v4369 = vsub.s32 %v4366, %v4368
    %v4370 = vrot.slane %v4357, %v4369
    %v4372 = vunpack.c.l.s4 1966171168
    %v4373 = vunpack.c.0.s8 %v4372
    %v4374 = vlaneseq
    %v4375 = vshrl.u32 %v4374, 7
    %v4376 = vsub.s32 %v4373, %v4375
    %v4377 = vrot.slane %v4363, %v4376
    %v4378 = vcombine.high %v4370, %v4370
    %v4379 = vcombine.high %v4377, %v4377
    %v4381 = vunpack.c.l.s4 1966171168
    %v4382 = vunpack.c.0.s8 %v4381
    %v4383 = vlaneseq
    %v4384 = vshrl.u32 %v4383, 7
    %v4385 = vsub.s32 %v4382, %v4384
    %v4386 = vrot.slane %v4370, %v4385
    %v4388 = vunpack.c.l.s4 1966171168
    %v4389 = vunpack.c.0.s8 %v4388
    %v4390 = vlaneseq
    %v4391 = vshrl.u32 %v4390, 7
    %v4392 = vsub.s32 %v4389, %v4391
    %v4393 = vrot.slane %v4377, %v4392
    %v4395 = vunpack.c.l.s4 1966171168
    %v4396 = vunpack.c.0.s8 %v4395
    %v4397 = vlaneseq
    %v4398 = vshrl.u32 %v4397, 7
    %v4399 = vsub.s32 %v4396, %v4398
    %v4400 = vrot.slane %v4378, %v4399
    %v4402 = vunpack.c.l.s4 1966171168
    %v4403 = vunpack.c.0.s8 %v4402
    %v4404 = vlaneseq
    %v4405 = vshrl.u32 %v4404, 7
    %v4406 = vsub.s32 %v4403, %v4405
    %v4407 = vrot.slane %v4379, %v4406
    %v4408 = vcombine.high %v4386, %v4386
    %v4409 = vcombine.high %v4393, %v4393
    %v4410 = vcombine.high %v4400, %v4400
    %v4411 = vcombine.high %v4407, %v4407
    %v4413 = vunpack.c.l.s4 1966171168
    %v4414 = vunpack.c.0.s8 %v4413
    %v4415 = vlaneseq
    %v4416 = vshrl.u32 %v4415, 7
    %v4417 = vsub.s32 %v4414, %v4416
    %v4418 = vrot.slane %v4358, %v4417
    %v4420 = vunpack.c.l.s4 1966171168
    %v4421 = vunpack.c.0.s8 %v4420
    %v4422 = vlaneseq
    %v4423 = vshrl.u32 %v4422, 7
    %v4424 = vsub.s32 %v4421, %v4423
    %v4425 = vrot.slane %v4418, %v4424
    %4426 = vrot.lane.b32.xlu0 %v4386, 33
    %v4427 = vpop.permute.xlu0 %4426
    %4428 = vrot.lane.b32.xlu0 %v4400, 33
    %v4429 = vpop.permute.xlu0 %4428
    %4430 = vrot.lane.b32.xlu0 %v4408, 33
    %v4431 = vpop.permute.xlu0 %4430
    %4432 = vrot.lane.b32.xlu0 %v4410, 33
    %v4433 = vpop.permute.xlu0 %4432
    %4434 = vrot.lane.b32.xlu0 %v4393, 33
    %v4435 = vpop.permute.xlu0 %4434
    %4436 = vrot.lane.b32.xlu0 %v4407, 33
    %v4437 = vpop.permute.xlu0 %4436
    %4438 = vrot.lane.b32.xlu0 %v4409, 33
    %v4439 = vpop.permute.xlu0 %4438
    %4440 = vrot.lane.b32.xlu0 %v4411, 33
    %v4441 = vpop.permute.xlu0 %4440
    %4442 = vrot.lane.b32.xlu0 %v4425, 33
    %v4443 = vpop.permute.xlu0 %4442
    %v4444 = vsel %vm2371, %v4427, %v4429
    %v4445 = vsel %vm2371, %v4429, %v4431
    %v4446 = vsel %vm2371, %v4431, %v4433
    %v4447 = vsel %vm2371, %v4433, %v4435
    %v4448 = vsel %vm2371, %v4435, %v4437
    %v4449 = vsel %vm2371, %v4437, %v4439
    %v4450 = vsel %vm2371, %v4439, %v4441
    %v4451 = vsel %vm2371, %v4441, %v4443
    %v4462 = vcombine.high %v4359, %v4359
    %v4464 = vunpack.c.l.s4 1966171168
    %v4465 = vunpack.c.0.s8 %v4464
    %v4466 = vlaneseq
    %v4467 = vshrl.u32 %v4466, 7
    %v4468 = vsub.s32 %v4465, %v4467
    %v4469 = vrot.slane %v4359, %v4468
    %v4471 = vunpack.c.l.s4 1966171168
    %v4472 = vunpack.c.0.s8 %v4471
    %v4473 = vlaneseq
    %v4474 = vshrl.u32 %v4473, 7
    %v4475 = vsub.s32 %v4472, %v4474
    %v4476 = vrot.slane %v4462, %v4475
    %v4477 = vcombine.high %v4469, %v4469
    %v4478 = vcombine.high %v4476, %v4476
    %v4480 = vunpack.c.l.s4 1966171168
    %v4481 = vunpack.c.0.s8 %v4480
    %v4482 = vlaneseq
    %v4483 = vshrl.u32 %v4482, 7
    %v4484 = vsub.s32 %v4481, %v4483
    %v4485 = vrot.slane %v4469, %v4484
    %v4487 = vunpack.c.l.s4 1966171168
    %v4488 = vunpack.c.0.s8 %v4487
    %v4489 = vlaneseq
    %v4490 = vshrl.u32 %v4489, 7
    %v4491 = vsub.s32 %v4488, %v4490
    %v4492 = vrot.slane %v4476, %v4491
    %v4494 = vunpack.c.l.s4 1966171168
    %v4495 = vunpack.c.0.s8 %v4494
    %v4496 = vlaneseq
    %v4497 = vshrl.u32 %v4496, 7
    %v4498 = vsub.s32 %v4495, %v4497
    %v4499 = vrot.slane %v4477, %v4498
    %v4501 = vunpack.c.l.s4 1966171168
    %v4502 = vunpack.c.0.s8 %v4501
    %v4503 = vlaneseq
    %v4504 = vshrl.u32 %v4503, 7
    %v4505 = vsub.s32 %v4502, %v4504
    %v4506 = vrot.slane %v4478, %v4505
    %v4507 = vcombine.high %v4485, %v4485
    %v4508 = vcombine.high %v4492, %v4492
    %v4509 = vcombine.high %v4499, %v4499
    %v4510 = vcombine.high %v4506, %v4506
    %v4512 = vunpack.c.l.s4 1966171168
    %v4513 = vunpack.c.0.s8 %v4512
    %v4514 = vlaneseq
    %v4515 = vshrl.u32 %v4514, 7
    %v4516 = vsub.s32 %v4513, %v4515
    %v4517 = vrot.slane %v4360, %v4516
    %v4519 = vunpack.c.l.s4 1966171168
    %v4520 = vunpack.c.0.s8 %v4519
    %v4521 = vlaneseq
    %v4522 = vshrl.u32 %v4521, 7
    %v4523 = vsub.s32 %v4520, %v4522
    %v4524 = vrot.slane %v4517, %v4523
    %4525 = vrot.lane.b32.xlu0 %v4485, 33
    %v4526 = vpop.permute.xlu0 %4525
    %4527 = vrot.lane.b32.xlu0 %v4499, 33
    %v4528 = vpop.permute.xlu0 %4527
    %4529 = vrot.lane.b32.xlu0 %v4507, 33
    %v4530 = vpop.permute.xlu0 %4529
    %4531 = vrot.lane.b32.xlu0 %v4509, 33
    %v4532 = vpop.permute.xlu0 %4531
    %4533 = vrot.lane.b32.xlu0 %v4492, 33
    %v4534 = vpop.permute.xlu0 %4533
    %4535 = vrot.lane.b32.xlu0 %v4506, 33
    %v4536 = vpop.permute.xlu0 %4535
    %4537 = vrot.lane.b32.xlu0 %v4508, 33
    %v4538 = vpop.permute.xlu0 %4537
    %4539 = vrot.lane.b32.xlu0 %v4510, 33
    %v4540 = vpop.permute.xlu0 %4539
    %4541 = vrot.lane.b32.xlu0 %v4524, 33
    %v4542 = vpop.permute.xlu0 %4541
    %v4543 = vsel %vm2371, %v4526, %v4528
    %v4544 = vsel %vm2371, %v4528, %v4530
    %v4545 = vsel %vm2371, %v4530, %v4532
    %v4546 = vsel %vm2371, %v4532, %v4534
    %v4547 = vsel %vm2371, %v4534, %v4536
    %v4548 = vsel %vm2371, %v4536, %v4538
    %v4549 = vsel %vm2371, %v4538, %v4540
    %v4550 = vsel %vm2371, %v4540, %v4542
    %v4559 = vsel %vm2578, %v4444, 0
    %v4560 = vsel %vm2579, %v4445, 0
    %v4561 = vsel %vm2580, %v4446, 0
    %v4562 = vsel %vm2581, %v4447, 0
    %v4563 = vsel %vm2582, %v4448, 0
    %v4564 = vsel %vm2583, %v4449, 0
    %v4565 = vsel %vm2584, %v4450, 0
    %v4566 = vsel %vm2585, %v4451, 0
    %v4567 = vsel %vm2586, %v4543, 0
    %v4568 = vsel %vm2587, %v4544, 0
    %v4569 = vsel %vm2588, %v4545, 0
    %v4570 = vsel %vm2589, %v4546, 0
    %v4571 = vsel %vm2590, %v4547, 0
    %v4572 = vsel %vm2591, %v4548, 0
    %v4573 = vsel %vm2592, %v4549, 0
    %v4574 = vsel %vm2593, %v4550, 0
    %4575 = vrot.lane.b32.xlu0 %v4386, 32
    %v4576 = vpop.permute.xlu0 %4575
    %4577 = vrot.lane.b32.xlu0 %v4400, 32
    %v4578 = vpop.permute.xlu0 %4577
    %4579 = vrot.lane.b32.xlu0 %v4408, 32
    %v4580 = vpop.permute.xlu0 %4579
    %4581 = vrot.lane.b32.xlu0 %v4410, 32
    %v4582 = vpop.permute.xlu0 %4581
    %4583 = vrot.lane.b32.xlu0 %v4393, 32
    %v4584 = vpop.permute.xlu0 %4583
    %4585 = vrot.lane.b32.xlu0 %v4407, 32
    %v4586 = vpop.permute.xlu0 %4585
    %4587 = vrot.lane.b32.xlu0 %v4409, 32
    %v4588 = vpop.permute.xlu0 %4587
    %4589 = vrot.lane.b32.xlu0 %v4411, 32
    %v4590 = vpop.permute.xlu0 %4589
    %4591 = vrot.lane.b32.xlu0 %v4425, 32
    %v4592 = vpop.permute.xlu0 %4591
    %v4593 = vsel %vm2628, %v4576, %v4578
    %v4594 = vsel %vm2628, %v4578, %v4580
    %v4595 = vsel %vm2628, %v4580, %v4582
    %v4596 = vsel %vm2628, %v4582, %v4584
    %v4597 = vsel %vm2628, %v4584, %v4586
    %v4598 = vsel %vm2628, %v4586, %v4588
    %v4599 = vsel %vm2628, %v4588, %v4590
    %v4600 = vsel %vm2628, %v4590, %v4592
    %4601 = vrot.lane.b32.xlu0 %v4485, 32
    %v4602 = vpop.permute.xlu0 %4601
    %4603 = vrot.lane.b32.xlu0 %v4499, 32
    %v4604 = vpop.permute.xlu0 %4603
    %4605 = vrot.lane.b32.xlu0 %v4507, 32
    %v4606 = vpop.permute.xlu0 %4605
    %4607 = vrot.lane.b32.xlu0 %v4509, 32
    %v4608 = vpop.permute.xlu0 %4607
    %4609 = vrot.lane.b32.xlu0 %v4492, 32
    %v4610 = vpop.permute.xlu0 %4609
    %4611 = vrot.lane.b32.xlu0 %v4506, 32
    %v4612 = vpop.permute.xlu0 %4611
    %4613 = vrot.lane.b32.xlu0 %v4508, 32
    %v4614 = vpop.permute.xlu0 %4613
    %4615 = vrot.lane.b32.xlu0 %v4510, 32
    %v4616 = vpop.permute.xlu0 %4615
    %4617 = vrot.lane.b32.xlu0 %v4524, 32
    %v4618 = vpop.permute.xlu0 %4617
    %v4619 = vsel %vm2628, %v4602, %v4604
    %v4620 = vsel %vm2628, %v4604, %v4606
    %v4621 = vsel %vm2628, %v4606, %v4608
    %v4622 = vsel %vm2628, %v4608, %v4610
    %v4623 = vsel %vm2628, %v4610, %v4612
    %v4624 = vsel %vm2628, %v4612, %v4614
    %v4625 = vsel %vm2628, %v4614, %v4616
    %v4626 = vsel %vm2628, %v4616, %v4618
    %4627 = vrot.lane.b32.xlu0 %v4386, 31
    %v4628 = vpop.permute.xlu0 %4627
    %4629 = vrot.lane.b32.xlu0 %v4400, 31
    %v4630 = vpop.permute.xlu0 %4629
    %4631 = vrot.lane.b32.xlu0 %v4408, 31
    %v4632 = vpop.permute.xlu0 %4631
    %4633 = vrot.lane.b32.xlu0 %v4410, 31
    %v4634 = vpop.permute.xlu0 %4633
    %4635 = vrot.lane.b32.xlu0 %v4393, 31
    %v4636 = vpop.permute.xlu0 %4635
    %4637 = vrot.lane.b32.xlu0 %v4407, 31
    %v4638 = vpop.permute.xlu0 %4637
    %4639 = vrot.lane.b32.xlu0 %v4409, 31
    %v4640 = vpop.permute.xlu0 %4639
    %4641 = vrot.lane.b32.xlu0 %v4411, 31
    %v4642 = vpop.permute.xlu0 %4641
    %4643 = vrot.lane.b32.xlu0 %v4425, 31
    %v4644 = vpop.permute.xlu0 %4643
    %v4645 = vsel %vm2681, %v4628, %v4630
    %v4646 = vsel %vm2681, %v4630, %v4632
    %v4647 = vsel %vm2681, %v4632, %v4634
    %v4648 = vsel %vm2681, %v4634, %v4636
    %v4649 = vsel %vm2681, %v4636, %v4638
    %v4650 = vsel %vm2681, %v4638, %v4640
    %v4651 = vsel %vm2681, %v4640, %v4642
    %v4652 = vsel %vm2681, %v4642, %v4644
    %4661 = vrot.lane.b32.xlu0 %v4485, 31
    %v4662 = vpop.permute.xlu0 %4661
    %4663 = vrot.lane.b32.xlu0 %v4499, 31
    %v4664 = vpop.permute.xlu0 %4663
    %4665 = vrot.lane.b32.xlu0 %v4507, 31
    %v4666 = vpop.permute.xlu0 %4665
    %4667 = vrot.lane.b32.xlu0 %v4509, 31
    %v4668 = vpop.permute.xlu0 %4667
    %4669 = vrot.lane.b32.xlu0 %v4492, 31
    %v4670 = vpop.permute.xlu0 %4669
    %4671 = vrot.lane.b32.xlu0 %v4506, 31
    %v4672 = vpop.permute.xlu0 %4671
    %4673 = vrot.lane.b32.xlu0 %v4508, 31
    %v4674 = vpop.permute.xlu0 %4673
    %4675 = vrot.lane.b32.xlu0 %v4510, 31
    %v4676 = vpop.permute.xlu0 %4675
    %4677 = vrot.lane.b32.xlu0 %v4524, 31
    %v4678 = vpop.permute.xlu0 %4677
    %v4679 = vsel %vm2681, %v4662, %v4664
    %v4680 = vsel %vm2681, %v4664, %v4666
    %v4681 = vsel %vm2681, %v4666, %v4668
    %v4682 = vsel %vm2681, %v4668, %v4670
    %v4683 = vsel %vm2681, %v4670, %v4672
    %v4684 = vsel %vm2681, %v4672, %v4674
    %v4685 = vsel %vm2681, %v4674, %v4676
    %v4686 = vsel %vm2681, %v4676, %v4678
    %v4695 = vsel %vm2844, %v4645, 0
    %v4696 = vsel %vm2845, %v4646, 0
    %v4697 = vsel %vm2846, %v4647, 0
    %v4698 = vsel %vm2847, %v4648, 0
    %v4699 = vsel %vm2848, %v4649, 0
    %v4700 = vsel %vm2849, %v4650, 0
    %v4701 = vsel %vm2850, %v4651, 0
    %v4702 = vsel %vm2851, %v4652, 0
    %v4703 = vsel %vm2852, %v4679, 0
    %v4704 = vsel %vm2853, %v4680, 0
    %v4705 = vsel %vm2854, %v4681, 0
    %v4706 = vsel %vm2855, %v4682, 0
    %v4707 = vsel %vm2856, %v4683, 0
    %v4708 = vsel %vm2857, %v4684, 0
    %v4709 = vsel %vm2858, %v4685, 0
    %v4710 = vsel %vm2859, %v4686, 0
    %4711 = vrot.lane.b32.xlu0 %v4386, 1
    %v4712 = vpop.permute.xlu0 %4711
    %4713 = vrot.lane.b32.xlu0 %v4400, 1
    %v4714 = vpop.permute.xlu0 %4713
    %4715 = vrot.lane.b32.xlu0 %v4408, 1
    %v4716 = vpop.permute.xlu0 %4715
    %4717 = vrot.lane.b32.xlu0 %v4410, 1
    %v4718 = vpop.permute.xlu0 %4717
    %4719 = vrot.lane.b32.xlu0 %v4393, 1
    %v4720 = vpop.permute.xlu0 %4719
    %4721 = vrot.lane.b32.xlu0 %v4407, 1
    %v4722 = vpop.permute.xlu0 %4721
    %4723 = vrot.lane.b32.xlu0 %v4409, 1
    %v4724 = vpop.permute.xlu0 %4723
    %4725 = vrot.lane.b32.xlu0 %v4411, 1
    %v4726 = vpop.permute.xlu0 %4725
    %4727 = vrot.lane.b32.xlu0 %v4425, 1
    %v4728 = vpop.permute.xlu0 %4727
    %v4729 = vsel %vm2894, %v4712, %v4714
    %v4730 = vsel %vm2894, %v4714, %v4716
    %v4731 = vsel %vm2894, %v4716, %v4718
    %v4732 = vsel %vm2894, %v4718, %v4720
    %v4733 = vsel %vm2894, %v4720, %v4722
    %v4734 = vsel %vm2894, %v4722, %v4724
    %v4735 = vsel %vm2894, %v4724, %v4726
    %v4736 = vsel %vm2894, %v4726, %v4728
    %4745 = vrot.lane.b32.xlu0 %v4485, 1
    %v4746 = vpop.permute.xlu0 %4745
    %4747 = vrot.lane.b32.xlu0 %v4499, 1
    %v4748 = vpop.permute.xlu0 %4747
    %4749 = vrot.lane.b32.xlu0 %v4507, 1
    %v4750 = vpop.permute.xlu0 %4749
    %4751 = vrot.lane.b32.xlu0 %v4509, 1
    %v4752 = vpop.permute.xlu0 %4751
    %4753 = vrot.lane.b32.xlu0 %v4492, 1
    %v4754 = vpop.permute.xlu0 %4753
    %4755 = vrot.lane.b32.xlu0 %v4506, 1
    %v4756 = vpop.permute.xlu0 %4755
    %4757 = vrot.lane.b32.xlu0 %v4508, 1
    %v4758 = vpop.permute.xlu0 %4757
    %4759 = vrot.lane.b32.xlu0 %v4510, 1
    %v4760 = vpop.permute.xlu0 %4759
    %4761 = vrot.lane.b32.xlu0 %v4524, 1
    %v4762 = vpop.permute.xlu0 %4761
    %v4763 = vsel %vm2894, %v4746, %v4748
    %v4764 = vsel %vm2894, %v4748, %v4750
    %v4765 = vsel %vm2894, %v4750, %v4752
    %v4766 = vsel %vm2894, %v4752, %v4754
    %v4767 = vsel %vm2894, %v4754, %v4756
    %v4768 = vsel %vm2894, %v4756, %v4758
    %v4769 = vsel %vm2894, %v4758, %v4760
    %v4770 = vsel %vm2894, %v4760, %v4762
    %v4779 = vsel %vm2578, %v4729, 0
    %v4780 = vsel %vm2579, %v4730, 0
    %v4781 = vsel %vm2580, %v4731, 0
    %v4782 = vsel %vm2581, %v4732, 0
    %v4783 = vsel %vm2582, %v4733, 0
    %v4784 = vsel %vm2583, %v4734, 0
    %v4785 = vsel %vm2584, %v4735, 0
    %v4786 = vsel %vm2585, %v4736, 0
    %v4787 = vsel %vm2586, %v4763, 0
    %v4788 = vsel %vm2587, %v4764, 0
    %v4789 = vsel %vm2588, %v4765, 0
    %v4790 = vsel %vm2589, %v4766, 0
    %v4791 = vsel %vm2590, %v4767, 0
    %v4792 = vsel %vm2591, %v4768, 0
    %v4793 = vsel %vm2592, %v4769, 0
    %v4794 = vsel %vm2593, %v4770, 0
    %v4795 = vld [vmem:[#allocation3 + $0x1] sm:$0xff]
    %v4796 = vld [vmem:[#allocation3 + $0xb] sm:$0xff]
    %v4798 = vcombine.high %v4795, %v4795
    %v4800 = vunpack.c.l.s4 1966171168
    %v4801 = vunpack.c.0.s8 %v4800
    %v4802 = vlaneseq
    %v4803 = vshrl.u32 %v4802, 7
    %v4804 = vsub.s32 %v4801, %v4803
    %v4805 = vrot.slane %v4795, %v4804
    %v4807 = vunpack.c.l.s4 1966171168
    %v4808 = vunpack.c.0.s8 %v4807
    %v4809 = vlaneseq
    %v4810 = vshrl.u32 %v4809, 7
    %v4811 = vsub.s32 %v4808, %v4810
    %v4812 = vrot.slane %v4798, %v4811
    %v4813 = vcombine.high %v4805, %v4805
    %v4814 = vcombine.high %v4812, %v4812
    %v4816 = vunpack.c.l.s4 1966171168
    %v4817 = vunpack.c.0.s8 %v4816
    %v4818 = vlaneseq
    %v4819 = vshrl.u32 %v4818, 7
    %v4820 = vsub.s32 %v4817, %v4819
    %v4821 = vrot.slane %v4805, %v4820
    %v4823 = vunpack.c.l.s4 1966171168
    %v4824 = vunpack.c.0.s8 %v4823
    %v4825 = vlaneseq
    %v4826 = vshrl.u32 %v4825, 7
    %v4827 = vsub.s32 %v4824, %v4826
    %v4828 = vrot.slane %v4812, %v4827
    %v4830 = vunpack.c.l.s4 1966171168
    %v4831 = vunpack.c.0.s8 %v4830
    %v4832 = vlaneseq
    %v4833 = vshrl.u32 %v4832, 7
    %v4834 = vsub.s32 %v4831, %v4833
    %v4835 = vrot.slane %v4813, %v4834
    %v4837 = vunpack.c.l.s4 1966171168
    %v4838 = vunpack.c.0.s8 %v4837
    %v4839 = vlaneseq
    %v4840 = vshrl.u32 %v4839, 7
    %v4841 = vsub.s32 %v4838, %v4840
    %v4842 = vrot.slane %v4814, %v4841
    %v4843 = vcombine.high %v4821, %v4821
    %v4844 = vcombine.high %v4828, %v4828
    %v4845 = vcombine.high %v4835, %v4835
    %v4846 = vcombine.high %v4842, %v4842
    %v4848 = vcombine.high %v4796, %v4796
    %v4850 = vunpack.c.l.s4 1966171168
    %v4851 = vunpack.c.0.s8 %v4850
    %v4852 = vlaneseq
    %v4853 = vshrl.u32 %v4852, 7
    %v4854 = vsub.s32 %v4851, %v4853
    %v4855 = vrot.slane %v4796, %v4854
    %v4857 = vunpack.c.l.s4 1966171168
    %v4858 = vunpack.c.0.s8 %v4857
    %v4859 = vlaneseq
    %v4860 = vshrl.u32 %v4859, 7
    %v4861 = vsub.s32 %v4858, %v4860
    %v4862 = vrot.slane %v4848, %v4861
    %v4863 = vcombine.high %v4855, %v4855
    %v4864 = vcombine.high %v4862, %v4862
    %v4866 = vunpack.c.l.s4 1966171168
    %v4867 = vunpack.c.0.s8 %v4866
    %v4868 = vlaneseq
    %v4869 = vshrl.u32 %v4868, 7
    %v4870 = vsub.s32 %v4867, %v4869
    %v4871 = vrot.slane %v4855, %v4870
    %v4873 = vunpack.c.l.s4 1966171168
    %v4874 = vunpack.c.0.s8 %v4873
    %v4875 = vlaneseq
    %v4876 = vshrl.u32 %v4875, 7
    %v4877 = vsub.s32 %v4874, %v4876
    %v4878 = vrot.slane %v4862, %v4877
    %v4880 = vunpack.c.l.s4 1966171168
    %v4881 = vunpack.c.0.s8 %v4880
    %v4882 = vlaneseq
    %v4883 = vshrl.u32 %v4882, 7
    %v4884 = vsub.s32 %v4881, %v4883
    %v4885 = vrot.slane %v4863, %v4884
    %v4887 = vunpack.c.l.s4 1966171168
    %v4888 = vunpack.c.0.s8 %v4887
    %v4889 = vlaneseq
    %v4890 = vshrl.u32 %v4889, 7
    %v4891 = vsub.s32 %v4888, %v4890
    %v4892 = vrot.slane %v4864, %v4891
    %v4893 = vcombine.high %v4871, %v4871
    %v4894 = vcombine.high %v4878, %v4878
    %v4895 = vcombine.high %v4885, %v4885
    %v4896 = vcombine.high %v4892, %v4892
    %v4897 = vld [vmem:[#allocation3 + $0x9] sm:$0x1]
    %v4898 = vld [vmem:[#allocation3 + $0xb] sm:$0xff]
    %v4899 = vld [vmem:[#allocation3 + $0x13] sm:$0x1]
    %v4902 = vunpack.c.l.s4 1966171168
    %v4903 = vunpack.c.0.s8 %v4902
    %v4904 = vlaneseq
    %v4905 = vshrl.u32 %v4904, 7
    %v4906 = vsub.s32 %v4903, %v4905
    %v4907 = vrot.slane %v4897, %v4906
    %v4909 = vunpack.c.l.s4 1966171168
    %v4910 = vunpack.c.0.s8 %v4909
    %v4911 = vlaneseq
    %v4912 = vshrl.u32 %v4911, 7
    %v4913 = vsub.s32 %v4910, %v4912
    %v4914 = vrot.slane %v4907, %v4913
    %4915 = vrot.lane.b32.xlu0 %v4821, 127
    %v4916 = vpop.permute.xlu0 %4915
    %4917 = vrot.lane.b32.xlu0 %v4835, 127
    %v4918 = vpop.permute.xlu0 %4917
    %4919 = vrot.lane.b32.xlu0 %v4843, 127
    %v4920 = vpop.permute.xlu0 %4919
    %4921 = vrot.lane.b32.xlu0 %v4845, 127
    %v4922 = vpop.permute.xlu0 %4921
    %4923 = vrot.lane.b32.xlu0 %v4828, 127
    %v4924 = vpop.permute.xlu0 %4923
    %4925 = vrot.lane.b32.xlu0 %v4842, 127
    %v4926 = vpop.permute.xlu0 %4925
    %4927 = vrot.lane.b32.xlu0 %v4844, 127
    %v4928 = vpop.permute.xlu0 %4927
    %4929 = vrot.lane.b32.xlu0 %v4846, 127
    %v4930 = vpop.permute.xlu0 %4929
    %4931 = vrot.lane.b32.xlu0 %v4914, 127
    %v4932 = vpop.permute.xlu0 %4931
    %v4933 = vsel %vm3067, %v4916, %v4918
    %v4934 = vsel %vm3067, %v4918, %v4920
    %v4935 = vsel %vm3067, %v4920, %v4922
    %v4936 = vsel %vm3067, %v4922, %v4924
    %v4937 = vsel %vm3067, %v4924, %v4926
    %v4938 = vsel %vm3067, %v4926, %v4928
    %v4939 = vsel %vm3067, %v4928, %v4930
    %v4940 = vsel %vm3067, %v4930, %v4932
    %v4951 = vcombine.high %v4898, %v4898
    %v4953 = vunpack.c.l.s4 1966171168
    %v4954 = vunpack.c.0.s8 %v4953
    %v4955 = vlaneseq
    %v4956 = vshrl.u32 %v4955, 7
    %v4957 = vsub.s32 %v4954, %v4956
    %v4958 = vrot.slane %v4898, %v4957
    %v4960 = vunpack.c.l.s4 1966171168
    %v4961 = vunpack.c.0.s8 %v4960
    %v4962 = vlaneseq
    %v4963 = vshrl.u32 %v4962, 7
    %v4964 = vsub.s32 %v4961, %v4963
    %v4965 = vrot.slane %v4951, %v4964
    %v4966 = vcombine.high %v4958, %v4958
    %v4967 = vcombine.high %v4965, %v4965
    %v4969 = vunpack.c.l.s4 1966171168
    %v4970 = vunpack.c.0.s8 %v4969
    %v4971 = vlaneseq
    %v4972 = vshrl.u32 %v4971, 7
    %v4973 = vsub.s32 %v4970, %v4972
    %v4974 = vrot.slane %v4958, %v4973
    %v4976 = vunpack.c.l.s4 1966171168
    %v4977 = vunpack.c.0.s8 %v4976
    %v4978 = vlaneseq
    %v4979 = vshrl.u32 %v4978, 7
    %v4980 = vsub.s32 %v4977, %v4979
    %v4981 = vrot.slane %v4965, %v4980
    %v4983 = vunpack.c.l.s4 1966171168
    %v4984 = vunpack.c.0.s8 %v4983
    %v4985 = vlaneseq
    %v4986 = vshrl.u32 %v4985, 7
    %v4987 = vsub.s32 %v4984, %v4986
    %v4988 = vrot.slane %v4966, %v4987
    %v4990 = vunpack.c.l.s4 1966171168
    %v4991 = vunpack.c.0.s8 %v4990
    %v4992 = vlaneseq
    %v4993 = vshrl.u32 %v4992, 7
    %v4994 = vsub.s32 %v4991, %v4993
    %v4995 = vrot.slane %v4967, %v4994
    %v4996 = vcombine.high %v4974, %v4974
    %v4997 = vcombine.high %v4981, %v4981
    %v4998 = vcombine.high %v4988, %v4988
    %v4999 = vcombine.high %v4995, %v4995
    %v5001 = vunpack.c.l.s4 1966171168
    %v5002 = vunpack.c.0.s8 %v5001
    %v5003 = vlaneseq
    %v5004 = vshrl.u32 %v5003, 7
    %v5005 = vsub.s32 %v5002, %v5004
    %v5006 = vrot.slane %v4899, %v5005
    %v5008 = vunpack.c.l.s4 1966171168
    %v5009 = vunpack.c.0.s8 %v5008
    %v5010 = vlaneseq
    %v5011 = vshrl.u32 %v5010, 7
    %v5012 = vsub.s32 %v5009, %v5011
    %v5013 = vrot.slane %v5006, %v5012
    %5014 = vrot.lane.b32.xlu0 %v4974, 127
    %v5015 = vpop.permute.xlu0 %5014
    %5016 = vrot.lane.b32.xlu0 %v4988, 127
    %v5017 = vpop.permute.xlu0 %5016
    %5018 = vrot.lane.b32.xlu0 %v4996, 127
    %v5019 = vpop.permute.xlu0 %5018
    %5020 = vrot.lane.b32.xlu0 %v4998, 127
    %v5021 = vpop.permute.xlu0 %5020
    %5022 = vrot.lane.b32.xlu0 %v4981, 127
    %v5023 = vpop.permute.xlu0 %5022
    %5024 = vrot.lane.b32.xlu0 %v4995, 127
    %v5025 = vpop.permute.xlu0 %5024
    %5026 = vrot.lane.b32.xlu0 %v4997, 127
    %v5027 = vpop.permute.xlu0 %5026
    %5028 = vrot.lane.b32.xlu0 %v4999, 127
    %v5029 = vpop.permute.xlu0 %5028
    %5030 = vrot.lane.b32.xlu0 %v5013, 127
    %v5031 = vpop.permute.xlu0 %5030
    %v5032 = vsel %vm3067, %v5015, %v5017
    %v5033 = vsel %vm3067, %v5017, %v5019
    %v5034 = vsel %vm3067, %v5019, %v5021
    %v5035 = vsel %vm3067, %v5021, %v5023
    %v5036 = vsel %vm3067, %v5023, %v5025
    %v5037 = vsel %vm3067, %v5025, %v5027
    %v5038 = vsel %vm3067, %v5027, %v5029
    %v5039 = vsel %vm3067, %v5029, %v5031
    %v5048 = vsel %vm2844, %v4933, 0
    %v5049 = vsel %vm2845, %v4934, 0
    %v5050 = vsel %vm2846, %v4935, 0
    %v5051 = vsel %vm2847, %v4936, 0
    %v5052 = vsel %vm2848, %v4937, 0
    %v5053 = vsel %vm2849, %v4938, 0
    %v5054 = vsel %vm2850, %v4939, 0
    %v5055 = vsel %vm2851, %v4940, 0
    %v5056 = vsel %vm2852, %v5032, 0
    %v5057 = vsel %vm2853, %v5033, 0
    %v5058 = vsel %vm2854, %v5034, 0
    %v5059 = vsel %vm2855, %v5035, 0
    %v5060 = vsel %vm2856, %v5036, 0
    %v5061 = vsel %vm2857, %v5037, 0
    %v5062 = vsel %vm2858, %v5038, 0
    %v5063 = vsel %vm2859, %v5039, 0
    %5064 = vrot.lane.b32.xlu0 %v4821, 97
    %v5065 = vpop.permute.xlu0 %5064
    %5066 = vrot.lane.b32.xlu0 %v4835, 97
    %v5067 = vpop.permute.xlu0 %5066
    %5068 = vrot.lane.b32.xlu0 %v4843, 97
    %v5069 = vpop.permute.xlu0 %5068
    %5070 = vrot.lane.b32.xlu0 %v4845, 97
    %v5071 = vpop.permute.xlu0 %5070
    %5072 = vrot.lane.b32.xlu0 %v4828, 97
    %v5073 = vpop.permute.xlu0 %5072
    %5074 = vrot.lane.b32.xlu0 %v4842, 97
    %v5075 = vpop.permute.xlu0 %5074
    %5076 = vrot.lane.b32.xlu0 %v4844, 97
    %v5077 = vpop.permute.xlu0 %5076
    %5078 = vrot.lane.b32.xlu0 %v4846, 97
    %v5079 = vpop.permute.xlu0 %5078
    %5080 = vrot.lane.b32.xlu0 %v4914, 97
    %v5081 = vpop.permute.xlu0 %5080
    %v5082 = vsel %vm3196, %v5065, %v5067
    %v5083 = vsel %vm3196, %v5067, %v5069
    %v5084 = vsel %vm3196, %v5069, %v5071
    %v5085 = vsel %vm3196, %v5071, %v5073
    %v5086 = vsel %vm3196, %v5073, %v5075
    %v5087 = vsel %vm3196, %v5075, %v5077
    %v5088 = vsel %vm3196, %v5077, %v5079
    %v5089 = vsel %vm3196, %v5079, %v5081
    %5098 = vrot.lane.b32.xlu0 %v4974, 97
    %v5099 = vpop.permute.xlu0 %5098
    %5100 = vrot.lane.b32.xlu0 %v4988, 97
    %v5101 = vpop.permute.xlu0 %5100
    %5102 = vrot.lane.b32.xlu0 %v4996, 97
    %v5103 = vpop.permute.xlu0 %5102
    %5104 = vrot.lane.b32.xlu0 %v4998, 97
    %v5105 = vpop.permute.xlu0 %5104
    %5106 = vrot.lane.b32.xlu0 %v4981, 97
    %v5107 = vpop.permute.xlu0 %5106
    %5108 = vrot.lane.b32.xlu0 %v4995, 97
    %v5109 = vpop.permute.xlu0 %5108
    %5110 = vrot.lane.b32.xlu0 %v4997, 97
    %v5111 = vpop.permute.xlu0 %5110
    %5112 = vrot.lane.b32.xlu0 %v4999, 97
    %v5113 = vpop.permute.xlu0 %5112
    %5114 = vrot.lane.b32.xlu0 %v5013, 97
    %v5115 = vpop.permute.xlu0 %5114
    %v5116 = vsel %vm3196, %v5099, %v5101
    %v5117 = vsel %vm3196, %v5101, %v5103
    %v5118 = vsel %vm3196, %v5103, %v5105
    %v5119 = vsel %vm3196, %v5105, %v5107
    %v5120 = vsel %vm3196, %v5107, %v5109
    %v5121 = vsel %vm3196, %v5109, %v5111
    %v5122 = vsel %vm3196, %v5111, %v5113
    %v5123 = vsel %vm3196, %v5113, %v5115
    %v5132 = vsel %vm2578, %v5082, 0
    %v5133 = vsel %vm2579, %v5083, 0
    %v5134 = vsel %vm2580, %v5084, 0
    %v5135 = vsel %vm2581, %v5085, 0
    %v5136 = vsel %vm2582, %v5086, 0
    %v5137 = vsel %vm2583, %v5087, 0
    %v5138 = vsel %vm2584, %v5088, 0
    %v5139 = vsel %vm2585, %v5089, 0
    %v5140 = vsel %vm2586, %v5116, 0
    %v5141 = vsel %vm2587, %v5117, 0
    %v5142 = vsel %vm2588, %v5118, 0
    %v5143 = vsel %vm2589, %v5119, 0
    %v5144 = vsel %vm2590, %v5120, 0
    %v5145 = vsel %vm2591, %v5121, 0
    %v5146 = vsel %vm2592, %v5122, 0
    %v5147 = vsel %vm2593, %v5123, 0
    %5148 = vrot.lane.b32.xlu0 %v4821, 96
    %v5149 = vpop.permute.xlu0 %5148
    %5150 = vrot.lane.b32.xlu0 %v4835, 96
    %v5151 = vpop.permute.xlu0 %5150
    %5152 = vrot.lane.b32.xlu0 %v4843, 96
    %v5153 = vpop.permute.xlu0 %5152
    %5154 = vrot.lane.b32.xlu0 %v4845, 96
    %v5155 = vpop.permute.xlu0 %5154
    %5156 = vrot.lane.b32.xlu0 %v4828, 96
    %v5157 = vpop.permute.xlu0 %5156
    %5158 = vrot.lane.b32.xlu0 %v4842, 96
    %v5159 = vpop.permute.xlu0 %5158
    %5160 = vrot.lane.b32.xlu0 %v4844, 96
    %v5161 = vpop.permute.xlu0 %5160
    %5162 = vrot.lane.b32.xlu0 %v4846, 96
    %v5163 = vpop.permute.xlu0 %5162
    %5164 = vrot.lane.b32.xlu0 %v4914, 96
    %v5165 = vpop.permute.xlu0 %5164
    %v5166 = vsel %vm3281, %v5149, %v5151
    %v5167 = vsel %vm3281, %v5151, %v5153
    %v5168 = vsel %vm3281, %v5153, %v5155
    %v5169 = vsel %vm3281, %v5155, %v5157
    %v5170 = vsel %vm3281, %v5157, %v5159
    %v5171 = vsel %vm3281, %v5159, %v5161
    %v5172 = vsel %vm3281, %v5161, %v5163
    %v5173 = vsel %vm3281, %v5163, %v5165
    %5174 = vrot.lane.b32.xlu0 %v4974, 96
    %v5175 = vpop.permute.xlu0 %5174
    %5176 = vrot.lane.b32.xlu0 %v4988, 96
    %v5177 = vpop.permute.xlu0 %5176
    %5178 = vrot.lane.b32.xlu0 %v4996, 96
    %v5179 = vpop.permute.xlu0 %5178
    %5180 = vrot.lane.b32.xlu0 %v4998, 96
    %v5181 = vpop.permute.xlu0 %5180
    %5182 = vrot.lane.b32.xlu0 %v4981, 96
    %v5183 = vpop.permute.xlu0 %5182
    %5184 = vrot.lane.b32.xlu0 %v4995, 96
    %v5185 = vpop.permute.xlu0 %5184
    %5186 = vrot.lane.b32.xlu0 %v4997, 96
    %v5187 = vpop.permute.xlu0 %5186
    %5188 = vrot.lane.b32.xlu0 %v4999, 96
    %v5189 = vpop.permute.xlu0 %5188
    %5190 = vrot.lane.b32.xlu0 %v5013, 96
    %v5191 = vpop.permute.xlu0 %5190
    %v5192 = vsel %vm3281, %v5175, %v5177
    %v5193 = vsel %vm3281, %v5177, %v5179
    %v5194 = vsel %vm3281, %v5179, %v5181
    %v5195 = vsel %vm3281, %v5181, %v5183
    %v5196 = vsel %vm3281, %v5183, %v5185
    %v5197 = vsel %vm3281, %v5185, %v5187
    %v5198 = vsel %vm3281, %v5187, %v5189
    %v5199 = vsel %vm3281, %v5189, %v5191
    %5200 = vrot.lane.b32.xlu0 %v4821, 95
    %v5201 = vpop.permute.xlu0 %5200
    %5202 = vrot.lane.b32.xlu0 %v4835, 95
    %v5203 = vpop.permute.xlu0 %5202
    %5204 = vrot.lane.b32.xlu0 %v4843, 95
    %v5205 = vpop.permute.xlu0 %5204
    %5206 = vrot.lane.b32.xlu0 %v4845, 95
    %v5207 = vpop.permute.xlu0 %5206
    %5208 = vrot.lane.b32.xlu0 %v4828, 95
    %v5209 = vpop.permute.xlu0 %5208
    %5210 = vrot.lane.b32.xlu0 %v4842, 95
    %v5211 = vpop.permute.xlu0 %5210
    %5212 = vrot.lane.b32.xlu0 %v4844, 95
    %v5213 = vpop.permute.xlu0 %5212
    %5214 = vrot.lane.b32.xlu0 %v4846, 95
    %v5215 = vpop.permute.xlu0 %5214
    %5216 = vrot.lane.b32.xlu0 %v4914, 95
    %v5217 = vpop.permute.xlu0 %5216
    %v5218 = vsel %vm3334, %v5201, %v5203
    %v5219 = vsel %vm3334, %v5203, %v5205
    %v5220 = vsel %vm3334, %v5205, %v5207
    %v5221 = vsel %vm3334, %v5207, %v5209
    %v5222 = vsel %vm3334, %v5209, %v5211
    %v5223 = vsel %vm3334, %v5211, %v5213
    %v5224 = vsel %vm3334, %v5213, %v5215
    %v5225 = vsel %vm3334, %v5215, %v5217
    %5234 = vrot.lane.b32.xlu0 %v4974, 95
    %v5235 = vpop.permute.xlu0 %5234
    %5236 = vrot.lane.b32.xlu0 %v4988, 95
    %v5237 = vpop.permute.xlu0 %5236
    %5238 = vrot.lane.b32.xlu0 %v4996, 95
    %v5239 = vpop.permute.xlu0 %5238
    %5240 = vrot.lane.b32.xlu0 %v4998, 95
    %v5241 = vpop.permute.xlu0 %5240
    %5242 = vrot.lane.b32.xlu0 %v4981, 95
    %v5243 = vpop.permute.xlu0 %5242
    %5244 = vrot.lane.b32.xlu0 %v4995, 95
    %v5245 = vpop.permute.xlu0 %5244
    %5246 = vrot.lane.b32.xlu0 %v4997, 95
    %v5247 = vpop.permute.xlu0 %5246
    %5248 = vrot.lane.b32.xlu0 %v4999, 95
    %v5249 = vpop.permute.xlu0 %5248
    %5250 = vrot.lane.b32.xlu0 %v5013, 95
    %v5251 = vpop.permute.xlu0 %5250
    %v5252 = vsel %vm3334, %v5235, %v5237
    %v5253 = vsel %vm3334, %v5237, %v5239
    %v5254 = vsel %vm3334, %v5239, %v5241
    %v5255 = vsel %vm3334, %v5241, %v5243
    %v5256 = vsel %vm3334, %v5243, %v5245
    %v5257 = vsel %vm3334, %v5245, %v5247
    %v5258 = vsel %vm3334, %v5247, %v5249
    %v5259 = vsel %vm3334, %v5249, %v5251
    %v5268 = vsel %vm2844, %v5218, 0
    %v5269 = vsel %vm2845, %v5219, 0
    %v5270 = vsel %vm2846, %v5220, 0
    %v5271 = vsel %vm2847, %v5221, 0
    %v5272 = vsel %vm2848, %v5222, 0
    %v5273 = vsel %vm2849, %v5223, 0
    %v5274 = vsel %vm2850, %v5224, 0
    %v5275 = vsel %vm2851, %v5225, 0
    %v5276 = vsel %vm2852, %v5252, 0
    %v5277 = vsel %vm2853, %v5253, 0
    %v5278 = vsel %vm2854, %v5254, 0
    %v5279 = vsel %vm2855, %v5255, 0
    %v5280 = vsel %vm2856, %v5256, 0
    %v5281 = vsel %vm2857, %v5257, 0
    %v5282 = vsel %vm2858, %v5258, 0
    %v5283 = vsel %vm2859, %v5259, 0
    %v5284 = vrot.slane %v4593, 7
    %v5285 = vrot.slane %v4594, 7
    %v5286 = vrot.slane %v4595, 7
    %v5287 = vrot.slane %v4596, 7
    %v5288 = vrot.slane %v4597, 7
    %v5289 = vrot.slane %v4598, 7
    %v5290 = vrot.slane %v4599, 7
    %v5291 = vrot.slane %v4600, 7
    %v5292 = vrot.slane %v4619, 7
    %v5293 = vrot.slane %v4620, 7
    %v5294 = vrot.slane %v4621, 7
    %v5295 = vrot.slane %v4622, 7
    %v5296 = vrot.slane %v4623, 7
    %v5297 = vrot.slane %v4624, 7
    %v5298 = vrot.slane %v4625, 7
    %v5299 = vrot.slane %v4626, 7
    %v5316 = vrot.slane %v4695, 6
    %v5317 = vrot.slane %v4696, 6
    %v5318 = vrot.slane %v4697, 6
    %v5319 = vrot.slane %v4698, 6
    %v5320 = vrot.slane %v4699, 6
    %v5321 = vrot.slane %v4700, 6
    %v5322 = vrot.slane %v4701, 6
    %v5323 = vrot.slane %v4702, 6
    %v5324 = vrot.slane %v4703, 6
    %v5325 = vrot.slane %v4704, 6
    %v5326 = vrot.slane %v4705, 6
    %v5327 = vrot.slane %v4706, 6
    %v5328 = vrot.slane %v4707, 6
    %v5329 = vrot.slane %v4708, 6
    %v5330 = vrot.slane %v4709, 6
    %v5331 = vrot.slane %v4710, 6
    %v5348 = vrot.slane %v4779, 5
    %v5349 = vrot.slane %v4780, 5
    %v5350 = vrot.slane %v4781, 5
    %v5351 = vrot.slane %v4782, 5
    %v5352 = vrot.slane %v4783, 5
    %v5353 = vrot.slane %v4784, 5
    %v5354 = vrot.slane %v4785, 5
    %v5355 = vrot.slane %v4786, 5
    %v5356 = vrot.slane %v4787, 5
    %v5357 = vrot.slane %v4788, 5
    %v5358 = vrot.slane %v4789, 5
    %v5359 = vrot.slane %v4790, 5
    %v5360 = vrot.slane %v4791, 5
    %v5361 = vrot.slane %v4792, 5
    %v5362 = vrot.slane %v4793, 5
    %v5363 = vrot.slane %v4794, 5
    %v5364 = vrot.slane %v4821, 4
    %v5365 = vrot.slane %v4835, 4
    %v5366 = vrot.slane %v4843, 4
    %v5367 = vrot.slane %v4845, 4
    %v5368 = vrot.slane %v4828, 4
    %v5369 = vrot.slane %v4842, 4
    %v5370 = vrot.slane %v4844, 4
    %v5371 = vrot.slane %v4846, 4
    %v5372 = vrot.slane %v4871, 4
    %v5373 = vrot.slane %v4885, 4
    %v5374 = vrot.slane %v4893, 4
    %v5375 = vrot.slane %v4895, 4
    %v5376 = vrot.slane %v4878, 4
    %v5377 = vrot.slane %v4892, 4
    %v5378 = vrot.slane %v4894, 4
    %v5379 = vrot.slane %v4896, 4
    %v5396 = vrot.slane %v5048, 3
    %v5397 = vrot.slane %v5049, 3
    %v5398 = vrot.slane %v5050, 3
    %v5399 = vrot.slane %v5051, 3
    %v5400 = vrot.slane %v5052, 3
    %v5401 = vrot.slane %v5053, 3
    %v5402 = vrot.slane %v5054, 3
    %v5403 = vrot.slane %v5055, 3
    %v5404 = vrot.slane %v5056, 3
    %v5405 = vrot.slane %v5057, 3
    %v5406 = vrot.slane %v5058, 3
    %v5407 = vrot.slane %v5059, 3
    %v5408 = vrot.slane %v5060, 3
    %v5409 = vrot.slane %v5061, 3
    %v5410 = vrot.slane %v5062, 3
    %v5411 = vrot.slane %v5063, 3
    %v5428 = vrot.slane %v5132, 2
    %v5429 = vrot.slane %v5133, 2
    %v5430 = vrot.slane %v5134, 2
    %v5431 = vrot.slane %v5135, 2
    %v5432 = vrot.slane %v5136, 2
    %v5433 = vrot.slane %v5137, 2
    %v5434 = vrot.slane %v5138, 2
    %v5435 = vrot.slane %v5139, 2
    %v5436 = vrot.slane %v5140, 2
    %v5437 = vrot.slane %v5141, 2
    %v5438 = vrot.slane %v5142, 2
    %v5439 = vrot.slane %v5143, 2
    %v5440 = vrot.slane %v5144, 2
    %v5441 = vrot.slane %v5145, 2
    %v5442 = vrot.slane %v5146, 2
    %v5443 = vrot.slane %v5147, 2
    %v5444 = vrot.slane %v5166, 1
    %v5445 = vrot.slane %v5167, 1
    %v5446 = vrot.slane %v5168, 1
    %v5447 = vrot.slane %v5169, 1
    %v5448 = vrot.slane %v5170, 1
    %v5449 = vrot.slane %v5171, 1
    %v5450 = vrot.slane %v5172, 1
    %v5451 = vrot.slane %v5173, 1
    %v5452 = vrot.slane %v5192, 1
    %v5453 = vrot.slane %v5193, 1
    %v5454 = vrot.slane %v5194, 1
    %v5455 = vrot.slane %v5195, 1
    %v5456 = vrot.slane %v5196, 1
    %v5457 = vrot.slane %v5197, 1
    %v5458 = vrot.slane %v5198, 1
    %v5459 = vrot.slane %v5199, 1
    %vm5460 = vcmask 1040384
    %v5463 = vsel %vm5460, %v4559, %v5284
    %v5466 = vsel %vm5460, %v4560, %v5285
    %v5469 = vsel %vm5460, %v4561, %v5286
    %v5472 = vsel %vm5460, %v4562, %v5287
    %v5475 = vsel %vm5460, %v4563, %v5288
    %v5478 = vsel %vm5460, %v4564, %v5289
    %v5481 = vsel %vm5460, %v4565, %v5290
    %v5484 = vsel %vm5460, %v4566, %v5291
    %v5487 = vsel %vm5460, %v4567, %v5292
    %v5490 = vsel %vm5460, %v4568, %v5293
    %v5493 = vsel %vm5460, %v4569, %v5294
    %v5496 = vsel %vm5460, %v4570, %v5295
    %v5499 = vsel %vm5460, %v4571, %v5296
    %v5502 = vsel %vm5460, %v4572, %v5297
    %v5505 = vsel %vm5460, %v4573, %v5298
    %v5508 = vsel %vm5460, %v4574, %v5299
    %v5510 = vsel %vm3561, %v5463, %v5316
    %v5512 = vsel %vm3561, %v5466, %v5317
    %v5514 = vsel %vm3561, %v5469, %v5318
    %v5516 = vsel %vm3561, %v5472, %v5319
    %v5518 = vsel %vm3561, %v5475, %v5320
    %v5520 = vsel %vm3561, %v5478, %v5321
    %v5522 = vsel %vm3561, %v5481, %v5322
    %v5524 = vsel %vm3561, %v5484, %v5323
    %v5526 = vsel %vm3561, %v5487, %v5324
    %v5528 = vsel %vm3561, %v5490, %v5325
    %v5530 = vsel %vm3561, %v5493, %v5326
    %v5532 = vsel %vm3561, %v5496, %v5327
    %v5534 = vsel %vm3561, %v5499, %v5328
    %v5536 = vsel %vm3561, %v5502, %v5329
    %v5538 = vsel %vm3561, %v5505, %v5330
    %v5540 = vsel %vm3561, %v5508, %v5331
    %vm5541 = vcmask 1042432
    %v5543 = vsel %vm5541, %v5510, %v5348
    %v5545 = vsel %vm5541, %v5512, %v5349
    %v5547 = vsel %vm5541, %v5514, %v5350
    %v5549 = vsel %vm5541, %v5516, %v5351
    %v5551 = vsel %vm5541, %v5518, %v5352
    %v5553 = vsel %vm5541, %v5520, %v5353
    %v5555 = vsel %vm5541, %v5522, %v5354
    %v5557 = vsel %vm5541, %v5524, %v5355
    %v5559 = vsel %vm5541, %v5526, %v5356
    %v5561 = vsel %vm5541, %v5528, %v5357
    %v5563 = vsel %vm5541, %v5530, %v5358
    %v5565 = vsel %vm5541, %v5532, %v5359
    %v5567 = vsel %vm5541, %v5534, %v5360
    %v5569 = vsel %vm5541, %v5536, %v5361
    %v5571 = vsel %vm5541, %v5538, %v5362
    %v5573 = vsel %vm5541, %v5540, %v5363
    %v5575 = vsel %vm3610, %v5543, %v5364
    %v5577 = vsel %vm3610, %v5545, %v5365
    %v5579 = vsel %vm3610, %v5547, %v5366
    %v5581 = vsel %vm3610, %v5549, %v5367
    %v5583 = vsel %vm3610, %v5551, %v5368
    %v5585 = vsel %vm3610, %v5553, %v5369
    %v5587 = vsel %vm3610, %v5555, %v5370
    %v5589 = vsel %vm3610, %v5557, %v5371
    %v5591 = vsel %vm3610, %v5559, %v5372
    %v5593 = vsel %vm3610, %v5561, %v5373
    %v5595 = vsel %vm3610, %v5563, %v5374
    %v5597 = vsel %vm3610, %v5565, %v5375
    %v5599 = vsel %vm3610, %v5567, %v5376
    %v5601 = vsel %vm3610, %v5569, %v5377
    %v5603 = vsel %vm3610, %v5571, %v5378
    %v5605 = vsel %vm3610, %v5573, %v5379
    %vm5606 = vcmask 1044480
    %v5608 = vsel %vm5606, %v5575, %v5396
    %v5610 = vsel %vm5606, %v5577, %v5397
    %v5612 = vsel %vm5606, %v5579, %v5398
    %v5614 = vsel %vm5606, %v5581, %v5399
    %v5616 = vsel %vm5606, %v5583, %v5400
    %v5618 = vsel %vm5606, %v5585, %v5401
    %v5620 = vsel %vm5606, %v5587, %v5402
    %v5622 = vsel %vm5606, %v5589, %v5403
    %v5624 = vsel %vm5606, %v5591, %v5404
    %v5626 = vsel %vm5606, %v5593, %v5405
    %v5628 = vsel %vm5606, %v5595, %v5406
    %v5630 = vsel %vm5606, %v5597, %v5407
    %v5632 = vsel %vm5606, %v5599, %v5408
    %v5634 = vsel %vm5606, %v5601, %v5409
    %v5636 = vsel %vm5606, %v5603, %v5410
    %v5638 = vsel %vm5606, %v5605, %v5411
    %v5640 = vsel %vm3643, %v5608, %v5428
    %v5642 = vsel %vm3643, %v5610, %v5429
    %v5644 = vsel %vm3643, %v5612, %v5430
    %v5646 = vsel %vm3643, %v5614, %v5431
    %v5648 = vsel %vm3643, %v5616, %v5432
    %v5650 = vsel %vm3643, %v5618, %v5433
    %v5652 = vsel %vm3643, %v5620, %v5434
    %v5654 = vsel %vm3643, %v5622, %v5435
    %v5656 = vsel %vm3643, %v5624, %v5436
    %v5658 = vsel %vm3643, %v5626, %v5437
    %v5660 = vsel %vm3643, %v5628, %v5438
    %v5662 = vsel %vm3643, %v5630, %v5439
    %v5664 = vsel %vm3643, %v5632, %v5440
    %v5666 = vsel %vm3643, %v5634, %v5441
    %v5668 = vsel %vm3643, %v5636, %v5442
    %v5670 = vsel %vm3643, %v5638, %v5443
    %vm5671 = vcmask 1046528
    %v5673 = vsel %vm5671, %v5640, %v5444
    %v5676 = vsel %vm5671, %v5642, %v5445
    %v5679 = vsel %vm5671, %v5644, %v5446
    %v5682 = vsel %vm5671, %v5646, %v5447
    %v5685 = vsel %vm5671, %v5648, %v5448
    %v5688 = vsel %vm5671, %v5650, %v5449
    %v5691 = vsel %vm5671, %v5652, %v5450
    %v5694 = vsel %vm5671, %v5654, %v5451
    %v5697 = vsel %vm5671, %v5656, %v5452
    %v5700 = vsel %vm5671, %v5658, %v5453
    %v5703 = vsel %vm5671, %v5660, %v5454
    %v5706 = vsel %vm5671, %v5662, %v5455
    %v5709 = vsel %vm5671, %v5664, %v5456
    %v5712 = vsel %vm5671, %v5666, %v5457
    %v5715 = vsel %vm5671, %v5668, %v5458
    %v5718 = vsel %vm5671, %v5670, %v5459
    %5721 = vset.pattern.permute.xlu0 0
    %5722 = vperm.xlu0 %5721, %v4356
    %v5723 = vpop.permute.xlu0 %5722
    %vm5725 = vcmask 146432
    %v5727 = vsel %vm5725, %v4355, 0
    %v5730 = vsel %vm5460, %v5268, 0
    %v5733 = vsel %vm5460, %v5269, 0
    %v5736 = vsel %vm5460, %v5270, 0
    %v5739 = vsel %vm5460, %v5271, 0
    %v5742 = vsel %vm5460, %v5272, 0
    %v5745 = vsel %vm5460, %v5273, 0
    %v5748 = vsel %vm5460, %v5274, 0
    %v5751 = vsel %vm5460, %v5275, 0
    %v5754 = vsel %vm5460, %v5276, 0
    %v5757 = vsel %vm5460, %v5277, 0
    %v5760 = vsel %vm5460, %v5278, 0
    %v5763 = vsel %vm5460, %v5279, 0
    %v5766 = vsel %vm5460, %v5280, 0
    %v5769 = vsel %vm5460, %v5281, 0
    %v5772 = vsel %vm5460, %v5282, 0
    %v5775 = vsel %vm5460, %v5283, 0
    %5777 = vmatprep.subr.bf16.mxu0 %v5676
    %5778 = vmatpush1.bf16.msra.mxu0 %v5673
    %5779 = vmatprep.subr.bf16.mxu0 %v5733
    %5780 = vmatpush1.bf16.msra.mxu0 %v5730
    %5781 = vmatprep.subr.bf16.mxu0 0
    %5782 = vmatpush1.bf16.msra.mxu0 0
    %5783 = vmatprep.subr.bf16.mxu0 0
    %5784 = vmatpush1.bf16.msra.mxu0 0
    %5785 = vmatprep.subr.bf16.mxu0 0
    %5786 = vmatpush1.bf16.msra.mxu0 0
    %5787 = vmatprep.subr.bf16.mxu0 0
    %5788 = vmatpush1.bf16.msra.mxu0 0
    %5789 = vmatprep.subr.bf16.mxu0 0
    %5790 = vmatpush1.bf16.msra.mxu0 0
    %5791 = vmatprep.subr.bf16.mxu0 0
    %5792 = vmatpush1.bf16.msra.mxu0 0
    %5793 = vmatprep.subr.bf16.mxu0 0
    %5794 = vmatpush1.bf16.msra.mxu0 0
    %5795 = vmatprep.subr.bf16.mxu0 0
    %5796 = vmatpush1.bf16.msra.mxu0 0
    %5797 = vmatprep.subr.bf16.mxu0 0
    %5798 = vmatpush1.bf16.msra.mxu0 0
    %5799 = vmatprep.subr.bf16.mxu0 0
    %5800 = vmatpush1.bf16.msra.mxu0 0
    %5801 = vmatprep.subr.bf16.mxu0 0
    %5802 = vmatpush1.bf16.msra.mxu0 0
    %5803 = vmatprep.subr.bf16.mxu0 0
    %5804 = vmatpush1.bf16.msra.mxu0 0
    %5805 = vmatprep.subr.bf16.mxu0 0
    %5806 = vmatpush1.bf16.msra.mxu0 0
    %5807 = vmatprep.subr.bf16.mxu0 0
    %5808 = vmatpush1.bf16.msra.mxu0 0
    %5809 = vmatprep.mubr.bf16.mxu0 0
    %5810 = vmatmul.mubr.bf16.gmra.mrb[0].mxu0 %v5727
    %v5811 = vpop.f32.mrb[0].mxu0
    %v5812 = vadd.f32 %v5723, %v5811
    %v5813 = vpop.f32.mrb[0].mxu0
    %v5814 = vadd.f32 %v5723, %v5813
    %v5815 = vpop.f32.mrb[0].mxu0
    %v5816 = vpop.f32.mrb[0].mxu0
    %5817 = vdwg.mxu0
    %5818 = vmatprep.subr.bf16.mxu0 %v5682
    %5819 = vmatpush1.bf16.msra.mxu0 %v5679
    %5820 = vmatprep.subr.bf16.mxu0 %v5739
    %5821 = vmatpush1.bf16.msra.mxu0 %v5736
    %5822 = vmatprep.subr.bf16.mxu0 0
    %5823 = vmatpush1.bf16.msra.mxu0 0
    %5824 = vmatprep.subr.bf16.mxu0 0
    %5825 = vmatpush1.bf16.msra.mxu0 0
    %5826 = vmatprep.subr.bf16.mxu0 0
    %5827 = vmatpush1.bf16.msra.mxu0 0
    %5828 = vmatprep.subr.bf16.mxu0 0
    %5829 = vmatpush1.bf16.msra.mxu0 0
    %5830 = vmatprep.subr.bf16.mxu0 0
    %5831 = vmatpush1.bf16.msra.mxu0 0
    %5832 = vmatprep.subr.bf16.mxu0 0
    %5833 = vmatpush1.bf16.msra.mxu0 0
    %5834 = vmatprep.subr.bf16.mxu0 0
    %5835 = vmatpush1.bf16.msra.mxu0 0
    %5836 = vmatprep.subr.bf16.mxu0 0
    %5837 = vmatpush1.bf16.msra.mxu0 0
    %5838 = vmatprep.subr.bf16.mxu0 0
    %5839 = vmatpush1.bf16.msra.mxu0 0
    %5840 = vmatprep.subr.bf16.mxu0 0
    %5841 = vmatpush1.bf16.msra.mxu0 0
    %5842 = vmatprep.subr.bf16.mxu0 0
    %5843 = vmatpush1.bf16.msra.mxu0 0
    %5844 = vmatprep.subr.bf16.mxu0 0
    %5845 = vmatpush1.bf16.msra.mxu0 0
    %5846 = vmatprep.subr.bf16.mxu0 0
    %5847 = vmatpush1.bf16.msra.mxu0 0
    %5848 = vmatprep.subr.bf16.mxu0 0
    %5849 = vmatpush1.bf16.msra.mxu0 0
    %5850 = vmatprep.mubr.bf16.mxu0 0
    %5851 = vmatmul.mubr.bf16.gmra.mrb[0].mxu0 %v5727
    %v5852 = vpop.f32.mrb[0].mxu0
    %v5853 = vadd.f32 %v5723, %v5852
    %v5854 = vpop.f32.mrb[0].mxu0
    %v5855 = vadd.f32 %v5723, %v5854
    %v5856 = vpop.f32.mrb[0].mxu0
    %v5857 = vpop.f32.mrb[0].mxu0
    %5858 = vdwg.mxu0
    %5859 = vmatprep.subr.bf16.mxu0 %v5688
    %5860 = vmatpush1.bf16.msra.mxu0 %v5685
    %5861 = vmatprep.subr.bf16.mxu0 %v5745
    %5862 = vmatpush1.bf16.msra.mxu0 %v5742
    %5863 = vmatprep.subr.bf16.mxu0 0
    %5864 = vmatpush1.bf16.msra.mxu0 0
    %5865 = vmatprep.subr.bf16.mxu0 0
    %5866 = vmatpush1.bf16.msra.mxu0 0
    %5867 = vmatprep.subr.bf16.mxu0 0
    %5868 = vmatpush1.bf16.msra.mxu0 0
    %5869 = vmatprep.subr.bf16.mxu0 0
    %5870 = vmatpush1.bf16.msra.mxu0 0
    %5871 = vmatprep.subr.bf16.mxu0 0
    %5872 = vmatpush1.bf16.msra.mxu0 0
    %5873 = vmatprep.subr.bf16.mxu0 0
    %5874 = vmatpush1.bf16.msra.mxu0 0
    %5875 = vmatprep.subr.bf16.mxu0 0
    %5876 = vmatpush1.bf16.msra.mxu0 0
    %5877 = vmatprep.subr.bf16.mxu0 0
    %5878 = vmatpush1.bf16.msra.mxu0 0
    %5879 = vmatprep.subr.bf16.mxu0 0
    %5880 = vmatpush1.bf16.msra.mxu0 0
    %5881 = vmatprep.subr.bf16.mxu0 0
    %5882 = vmatpush1.bf16.msra.mxu0 0
    %5883 = vmatprep.subr.bf16.mxu0 0
    %5884 = vmatpush1.bf16.msra.mxu0 0
    %5885 = vmatprep.subr.bf16.mxu0 0
    %5886 = vmatpush1.bf16.msra.mxu0 0
    %5887 = vmatprep.subr.bf16.mxu0 0
    %5888 = vmatpush1.bf16.msra.mxu0 0
    %5889 = vmatprep.subr.bf16.mxu0 0
    %5890 = vmatpush1.bf16.msra.mxu0 0
    %5891 = vmatprep.mubr.bf16.mxu0 0
    %5892 = vmatmul.mubr.bf16.gmra.mrb[0].mxu0 %v5727
    %v5893 = vpop.f32.mrb[0].mxu0
    %v5894 = vadd.f32 %v5723, %v5893
    %v5895 = vpop.f32.mrb[0].mxu0
    %v5896 = vadd.f32 %v5723, %v5895
    %v5897 = vpop.f32.mrb[0].mxu0
    %v5898 = vpop.f32.mrb[0].mxu0
    %5899 = vdwg.mxu0
    %5900 = vmatprep.subr.bf16.mxu0 %v5694
    %5901 = vmatpush1.bf16.msra.mxu0 %v5691
    %5902 = vmatprep.subr.bf16.mxu0 %v5751
    %5903 = vmatpush1.bf16.msra.mxu0 %v5748
    %5904 = vmatprep.subr.bf16.mxu0 0
    %5905 = vmatpush1.bf16.msra.mxu0 0
    %5906 = vmatprep.subr.bf16.mxu0 0
    %5907 = vmatpush1.bf16.msra.mxu0 0
    %5908 = vmatprep.subr.bf16.mxu0 0
    %5909 = vmatpush1.bf16.msra.mxu0 0
    %5910 = vmatprep.subr.bf16.mxu0 0
    %5911 = vmatpush1.bf16.msra.mxu0 0
    %5912 = vmatprep.subr.bf16.mxu0 0
    %5913 = vmatpush1.bf16.msra.mxu0 0
    %5914 = vmatprep.subr.bf16.mxu0 0
    %5915 = vmatpush1.bf16.msra.mxu0 0
    %5916 = vmatprep.subr.bf16.mxu0 0
    %5917 = vmatpush1.bf16.msra.mxu0 0
    %5918 = vmatprep.subr.bf16.mxu0 0
    %5919 = vmatpush1.bf16.msra.mxu0 0
    %5920 = vmatprep.subr.bf16.mxu0 0
    %5921 = vmatpush1.bf16.msra.mxu0 0
    %5922 = vmatprep.subr.bf16.mxu0 0
    %5923 = vmatpush1.bf16.msra.mxu0 0
    %5924 = vmatprep.subr.bf16.mxu0 0
    %5925 = vmatpush1.bf16.msra.mxu0 0
    %5926 = vmatprep.subr.bf16.mxu0 0
    %5927 = vmatpush1.bf16.msra.mxu0 0
    %5928 = vmatprep.subr.bf16.mxu0 0
    %5929 = vmatpush1.bf16.msra.mxu0 0
    %5930 = vmatprep.subr.bf16.mxu0 0
    %5931 = vmatpush1.bf16.msra.mxu0 0
    %5932 = vmatprep.mubr.bf16.mxu0 0
    %5933 = vmatmul.mubr.bf16.gmra.mrb[0].mxu0 %v5727
    %v5934 = vpop.f32.mrb[0].mxu0
    %v5935 = vadd.f32 %v5723, %v5934
    %v5936 = vpop.f32.mrb[0].mxu0
    %v5937 = vadd.f32 %v5723, %v5936
    %v5938 = vpop.f32.mrb[0].mxu0
    %v5939 = vpop.f32.mrb[0].mxu0
    %5940 = vdwg.mxu0
    %5941 = vmatprep.subr.bf16.mxu0 %v5700
    %5942 = vmatpush1.bf16.msra.mxu0 %v5697
    %5943 = vmatprep.subr.bf16.mxu0 %v5757
    %5944 = vmatpush1.bf16.msra.mxu0 %v5754
    %5945 = vmatprep.subr.bf16.mxu0 0
    %5946 = vmatpush1.bf16.msra.mxu0 0
    %5947 = vmatprep.subr.bf16.mxu0 0
    %5948 = vmatpush1.bf16.msra.mxu0 0
    %5949 = vmatprep.subr.bf16.mxu0 0
    %5950 = vmatpush1.bf16.msra.mxu0 0
    %5951 = vmatprep.subr.bf16.mxu0 0
    %5952 = vmatpush1.bf16.msra.mxu0 0
    %5953 = vmatprep.subr.bf16.mxu0 0
    %5954 = vmatpush1.bf16.msra.mxu0 0
    %5955 = vmatprep.subr.bf16.mxu0 0
    %5956 = vmatpush1.bf16.msra.mxu0 0
    %5957 = vmatprep.subr.bf16.mxu0 0
    %5958 = vmatpush1.bf16.msra.mxu0 0
    %5959 = vmatprep.subr.bf16.mxu0 0
    %5960 = vmatpush1.bf16.msra.mxu0 0
    %5961 = vmatprep.subr.bf16.mxu0 0
    %5962 = vmatpush1.bf16.msra.mxu0 0
    %5963 = vmatprep.subr.bf16.mxu0 0
    %5964 = vmatpush1.bf16.msra.mxu0 0
    %5965 = vmatprep.subr.bf16.mxu0 0
    %5966 = vmatpush1.bf16.msra.mxu0 0
    %5967 = vmatprep.subr.bf16.mxu0 0
    %5968 = vmatpush1.bf16.msra.mxu0 0
    %5969 = vmatprep.subr.bf16.mxu0 0
    %5970 = vmatpush1.bf16.msra.mxu0 0
    %5971 = vmatprep.subr.bf16.mxu0 0
    %5972 = vmatpush1.bf16.msra.mxu0 0
    %5973 = vmatprep.mubr.bf16.mxu0 0
    %5974 = vmatmul.mubr.bf16.gmra.mrb[0].mxu0 %v5727
    %v5975 = vpop.f32.mrb[0].mxu0
    %v5976 = vadd.f32 %v5723, %v5975
    %v5977 = vpop.f32.mrb[0].mxu0
    %v5978 = vadd.f32 %v5723, %v5977
    %v5979 = vpop.f32.mrb[0].mxu0
    %v5980 = vpop.f32.mrb[0].mxu0
    %5981 = vdwg.mxu0
    %5982 = vmatprep.subr.bf16.mxu0 %v5706
    %5983 = vmatpush1.bf16.msra.mxu0 %v5703
    %5984 = vmatprep.subr.bf16.mxu0 %v5763
    %5985 = vmatpush1.bf16.msra.mxu0 %v5760
    %5986 = vmatprep.subr.bf16.mxu0 0
    %5987 = vmatpush1.bf16.msra.mxu0 0
    %5988 = vmatprep.subr.bf16.mxu0 0
    %5989 = vmatpush1.bf16.msra.mxu0 0
    %5990 = vmatprep.subr.bf16.mxu0 0
    %5991 = vmatpush1.bf16.msra.mxu0 0
    %5992 = vmatprep.subr.bf16.mxu0 0
    %5993 = vmatpush1.bf16.msra.mxu0 0
    %5994 = vmatprep.subr.bf16.mxu0 0
    %5995 = vmatpush1.bf16.msra.mxu0 0
    %5996 = vmatprep.subr.bf16.mxu0 0
    %5997 = vmatpush1.bf16.msra.mxu0 0
    %5998 = vmatprep.subr.bf16.mxu0 0
    %5999 = vmatpush1.bf16.msra.mxu0 0
    %6000 = vmatprep.subr.bf16.mxu0 0
    %6001 = vmatpush1.bf16.msra.mxu0 0
    %6002 = vmatprep.subr.bf16.mxu0 0
    %6003 = vmatpush1.bf16.msra.mxu0 0
    %6004 = vmatprep.subr.bf16.mxu0 0
    %6005 = vmatpush1.bf16.msra.mxu0 0
    %6006 = vmatprep.subr.bf16.mxu0 0
    %6007 = vmatpush1.bf16.msra.mxu0 0
    %6008 = vmatprep.subr.bf16.mxu0 0
    %6009 = vmatpush1.bf16.msra.mxu0 0
    %6010 = vmatprep.subr.bf16.mxu0 0
    %6011 = vmatpush1.bf16.msra.mxu0 0
    %6012 = vmatprep.subr.bf16.mxu0 0
    %6013 = vmatpush1.bf16.msra.mxu0 0
    %6014 = vmatprep.mubr.bf16.mxu0 0
    %6015 = vmatmul.mubr.bf16.gmra.mrb[0].mxu0 %v5727
    %v6016 = vpop.f32.mrb[0].mxu0
    %v6017 = vadd.f32 %v5723, %v6016
    %v6018 = vpop.f32.mrb[0].mxu0
    %v6019 = vadd.f32 %v5723, %v6018
    %v6020 = vpop.f32.mrb[0].mxu0
    %v6021 = vpop.f32.mrb[0].mxu0
    %6022 = vdwg.mxu0
    %6023 = vmatprep.subr.bf16.mxu0 %v5712
    %6024 = vmatpush1.bf16.msra.mxu0 %v5709
    %6025 = vmatprep.subr.bf16.mxu0 %v5769
    %6026 = vmatpush1.bf16.msra.mxu0 %v5766
    %6027 = vmatprep.subr.bf16.mxu0 0
    %6028 = vmatpush1.bf16.msra.mxu0 0
    %6029 = vmatprep.subr.bf16.mxu0 0
    %6030 = vmatpush1.bf16.msra.mxu0 0
    %6031 = vmatprep.subr.bf16.mxu0 0
    %6032 = vmatpush1.bf16.msra.mxu0 0
    %6033 = vmatprep.subr.bf16.mxu0 0
    %6034 = vmatpush1.bf16.msra.mxu0 0
    %6035 = vmatprep.subr.bf16.mxu0 0
    %6036 = vmatpush1.bf16.msra.mxu0 0
    %6037 = vmatprep.subr.bf16.mxu0 0
    %6038 = vmatpush1.bf16.msra.mxu0 0
    %6039 = vmatprep.subr.bf16.mxu0 0
    %6040 = vmatpush1.bf16.msra.mxu0 0
    %6041 = vmatprep.subr.bf16.mxu0 0
    %6042 = vmatpush1.bf16.msra.mxu0 0
    %6043 = vmatprep.subr.bf16.mxu0 0
    %6044 = vmatpush1.bf16.msra.mxu0 0
    %6045 = vmatprep.subr.bf16.mxu0 0
    %6046 = vmatpush1.bf16.msra.mxu0 0
    %6047 = vmatprep.subr.bf16.mxu0 0
    %6048 = vmatpush1.bf16.msra.mxu0 0
    %6049 = vmatprep.subr.bf16.mxu0 0
    %6050 = vmatpush1.bf16.msra.mxu0 0
    %6051 = vmatprep.subr.bf16.mxu0 0
    %6052 = vmatpush1.bf16.msra.mxu0 0
    %6053 = vmatprep.subr.bf16.mxu0 0
    %6054 = vmatpush1.bf16.msra.mxu0 0
    %6055 = vmatprep.mubr.bf16.mxu0 0
    %6056 = vmatmul.mubr.bf16.gmra.mrb[0].mxu0 %v5727
    %v6057 = vpop.f32.mrb[0].mxu0
    %v6058 = vadd.f32 %v5723, %v6057
    %v6059 = vpop.f32.mrb[0].mxu0
    %v6060 = vadd.f32 %v5723, %v6059
    %v6061 = vpop.f32.mrb[0].mxu0
    %v6062 = vpop.f32.mrb[0].mxu0
    %6063 = vdwg.mxu0
    %6064 = vmatprep.subr.bf16.mxu0 %v5718
    %6065 = vmatpush1.bf16.msra.mxu0 %v5715
    %6066 = vmatprep.subr.bf16.mxu0 %v5775
    %6067 = vmatpush1.bf16.msra.mxu0 %v5772
    %6068 = vmatprep.subr.bf16.mxu0 0
    %6069 = vmatpush1.bf16.msra.mxu0 0
    %6070 = vmatprep.subr.bf16.mxu0 0
    %6071 = vmatpush1.bf16.msra.mxu0 0
    %6072 = vmatprep.subr.bf16.mxu0 0
    %6073 = vmatpush1.bf16.msra.mxu0 0
    %6074 = vmatprep.subr.bf16.mxu0 0
    %6075 = vmatpush1.bf16.msra.mxu0 0
    %6076 = vmatprep.subr.bf16.mxu0 0
    %6077 = vmatpush1.bf16.msra.mxu0 0
    %6078 = vmatprep.subr.bf16.mxu0 0
    %6079 = vmatpush1.bf16.msra.mxu0 0
    %6080 = vmatprep.subr.bf16.mxu0 0
    %6081 = vmatpush1.bf16.msra.mxu0 0
    %6082 = vmatprep.subr.bf16.mxu0 0
    %6083 = vmatpush1.bf16.msra.mxu0 0
    %6084 = vmatprep.subr.bf16.mxu0 0
    %6085 = vmatpush1.bf16.msra.mxu0 0
    %6086 = vmatprep.subr.bf16.mxu0 0
    %6087 = vmatpush1.bf16.msra.mxu0 0
    %6088 = vmatprep.subr.bf16.mxu0 0
    %6089 = vmatpush1.bf16.msra.mxu0 0
    %6090 = vmatprep.subr.bf16.mxu0 0
    %6091 = vmatpush1.bf16.msra.mxu0 0
    %6092 = vmatprep.subr.bf16.mxu0 0
    %6093 = vmatpush1.bf16.msra.mxu0 0
    %6094 = vmatprep.subr.bf16.mxu0 0
    %6095 = vmatpush1.bf16.msra.mxu0 0
    %6096 = vmatprep.mubr.bf16.mxu0 0
    %6097 = vmatmul.mubr.bf16.gmra.mrb[0].mxu0 %v5727
    %v6098 = vpop.f32.mrb[0].mxu0
    %v6099 = vadd.f32 %v5723, %v6098
    %v6100 = vpop.f32.mrb[0].mxu0
    %v6101 = vadd.f32 %v5723, %v6100
    %v6102 = vpop.f32.mrb[0].mxu0
    %v6103 = vpop.f32.mrb[0].mxu0
    %6104 = vdwg.mxu0
    %v6105 = vmax.f32 %v5812, 0.0
    %v6106 = vmax.f32 %v5814, 0.0
    %v6107 = vmax.f32 %v5853, 0.0
    %v6108 = vmax.f32 %v5855, 0.0
    %v6109 = vmax.f32 %v5894, 0.0
    %v6110 = vmax.f32 %v5896, 0.0
    %v6111 = vmax.f32 %v5935, 0.0
    %v6112 = vmax.f32 %v5937, 0.0
    %v6113 = vmax.f32 %v5976, 0.0
    %v6114 = vmax.f32 %v5978, 0.0
    %v6115 = vmax.f32 %v6017, 0.0
    %v6116 = vmax.f32 %v6019, 0.0
    %v6117 = vmax.f32 %v6058, 0.0
    %v6118 = vmax.f32 %v6060, 0.0
    %v6119 = vmax.f32 %v6099, 0.0
    %v6120 = vmax.f32 %v6101, 0.0
    %v6129 = vcombine.low %v6105, %v6106
    %v6130 = vcombine.low %v6107, %v6108
    %v6132 = vunpack.c.l.s4 1983009808
    %v6133 = vunpack.c.0.s8 %v6132
    %v6134 = vlaneseq
    %v6135 = vshrl.u32 %v6134, 7
    %v6136 = vsub.s32 %v6133, %v6135
    %v6137 = vrot.slane %v6129, %v6136
    %v6139 = vunpack.c.l.s4 1983009808
    %v6140 = vunpack.c.0.s8 %v6139
    %v6141 = vlaneseq
    %v6142 = vshrl.u32 %v6141, 7
    %v6143 = vsub.s32 %v6140, %v6142
    %v6144 = vrot.slane %v6130, %v6143
    %v6145 = vcombine.low %v6137, %v6144
    %v6146 = vcombine.low %v6109, %v6110
    %v6147 = vcombine.low %v6111, %v6112
    %v6149 = vunpack.c.l.s4 1983009808
    %v6150 = vunpack.c.0.s8 %v6149
    %v6151 = vlaneseq
    %v6152 = vshrl.u32 %v6151, 7
    %v6153 = vsub.s32 %v6150, %v6152
    %v6154 = vrot.slane %v6146, %v6153
    %v6156 = vunpack.c.l.s4 1983009808
    %v6157 = vunpack.c.0.s8 %v6156
    %v6158 = vlaneseq
    %v6159 = vshrl.u32 %v6158, 7
    %v6160 = vsub.s32 %v6157, %v6159
    %v6161 = vrot.slane %v6147, %v6160
    %v6162 = vcombine.low %v6154, %v6161
    %6165 = vst [vmem:[#allocation9] sm:$0xff] %v6145
    %6166 = vst [vmem:[#allocation9 + $0x8] sm:$0xff] %v6162
    %v6175 = vcombine.low %v6113, %v6114
    %v6176 = vcombine.low %v6115, %v6116
    %v6178 = vunpack.c.l.s4 1983009808
    %v6179 = vunpack.c.0.s8 %v6178
    %v6180 = vlaneseq
    %v6181 = vshrl.u32 %v6180, 7
    %v6182 = vsub.s32 %v6179, %v6181
    %v6183 = vrot.slane %v6175, %v6182
    %v6185 = vunpack.c.l.s4 1983009808
    %v6186 = vunpack.c.0.s8 %v6185
    %v6187 = vlaneseq
    %v6188 = vshrl.u32 %v6187, 7
    %v6189 = vsub.s32 %v6186, %v6188
    %v6190 = vrot.slane %v6176, %v6189
    %v6191 = vcombine.low %v6183, %v6190
    %v6192 = vcombine.low %v6117, %v6118
    %v6193 = vcombine.low %v6119, %v6120
    %v6195 = vunpack.c.l.s4 1983009808
    %v6196 = vunpack.c.0.s8 %v6195
    %v6197 = vlaneseq
    %v6198 = vshrl.u32 %v6197, 7
    %v6199 = vsub.s32 %v6196, %v6198
    %v6200 = vrot.slane %v6192, %v6199
    %v6202 = vunpack.c.l.s4 1983009808
    %v6203 = vunpack.c.0.s8 %v6202
    %v6204 = vlaneseq
    %v6205 = vshrl.u32 %v6204, 7
    %v6206 = vsub.s32 %v6203, %v6205
    %v6207 = vrot.slane %v6193, %v6206
    %v6208 = vcombine.low %v6200, %v6207
    %s6211 = scalar_lea.vmem [#allocation9], 16
    %6212 = vst [vmem:[%s6211] sm:$0xff] %v6191
    %6213 = vst [vmem:[%s6211 + $0x8] sm:$0xff] %v6208
    // Predicated region
    $region34: #{tpu_custom_call.1} parent=1 // pred_check
      _
    $region35: #{tpu_custom_call.1} parent=1 // pred_check_branch
      %6215 = sbr.rel (0) target = $region37
    $region36: #{tpu_custom_call.1} parent=1 // pred_region
      %s6217 = ssub.s32 512, 512
      %6218 = vsyncadd [#allocation6], %s6217
      %s6219 = sshll.u32 [#allocation9], 4
      %s6220 = int_to_ptr.vmem [resolvable:$true] %s6219
      %6225 = dma.vmem_to_hbm [thread:$0]  %s6220, 512, %s6, [#allocation6], 256, 256, 16
    $region37: #{tpu_custom_call.1} parent=1 // pred_fallthru
      _
    // Predicated region
    $region38: #{tpu_custom_call.1} parent=1 // pred_check
      _
    $region39: #{tpu_custom_call.1} parent=1 // pred_check_branch
      %6227 = sbr.rel (0) target = $region41
    $region40: #{tpu_custom_call.1} parent=1 // pred_region
      %6228 = dma.done [#allocation6], 512
    $region41: #{tpu_custom_call.1} parent=1 // pred_fallthru
      _
    %6229 = vsyncpa [#allocation5], 1
    %6230 = vsyncpa [#allocation8], 1
    %6231 = vsyncpa [#allocation6], 1

</llo_original>
